<compile_context>
chip_gen: v7x
topology: tpu7x:2x2x1
jax: 0.10.0
libtpu: 0.0.40
codegen_flags: <defaults>
</compile_context>

<pallas_src>
import jax
import jax.numpy as jnp
from jax.experimental import pallas as pl
from jax.experimental.pallas import tpu as pltpu

# ----------------------------------------------------------------------------
# Synthetic data_interface: categorical one-hot groups occupy columns 24..35
# (three groups of 4), continuous features are columns 0..23.  Deterministic.
# ----------------------------------------------------------------------------
ENCODED_CATEGORICAL_FEATURE_INDICES = [
    [24, 25, 26, 27],
    [28, 29, 30, 31],
    [32, 33, 34, 35],
]

# Original 8 Linear layers: encoder 36->128->64->12->10, decoder 10->12->64->128->36.
# ReLU after every layer except layer 3 (encoder output) and layer 7 (decoder output).
LAYER_DIMS = [36, 128, 64, 12, 10, 12, 64, 128, 36]
RELU_AFTER = [True, True, True, False, True, True, True, False]

# After fusing the ReLU-free 12->10->12 bottleneck (layers 3,4) into one 12->12 matmul:
FUSED_DIMS = [(36, 128), (128, 64), (64, 12), (12, 12), (12, 64), (64, 128), (128, 36)]
FUSED_RELU = [True, True, True, True, True, True, False]
N_FUSED = len(FUSED_DIMS)

OUT_F = 36


def _round_up(a, m):
    return ((a + m - 1) // m) * m


def autoencoder_kernel(x_ref, *refs):
    """Forward pass for one (TB, 36) batch tile; all weights VMEM-resident."""
    wb_refs = refs[: 2 * N_FUSED]
    mask_ref = refs[2 * N_FUSED]
    out_ref = refs[2 * N_FUSED + 1]

    # Cast to bf16 in-kernel (no wrapper-side extra HBM pass over x).
    h = x_ref[...].astype(jnp.bfloat16)                # (TB, 36) bf16
    for li in range(N_FUSED):
        w = wb_refs[2 * li][...]                       # bf16 (in, out)
        b = wb_refs[2 * li + 1][...]                   # f32  (1, out)
        acc = jnp.dot(h, w, preferred_element_type=jnp.float32) + b
        if FUSED_RELU[li]:
            # Fuse ReLU with the bf16 downcast: intermediates carried between
            # layers are bf16 -> halves spill / VMEM staging at large TB.
            h = jnp.maximum(acc, 0.0).astype(jnp.bfloat16)
        else:
            h = acc                                    # final layer stays f32

    # sigmoid on categorical columns only (exact per-slice equivalent via mask).
    # Ragged-tail rows contain garbage and are never written (OOB writes drop).
    e = jnp.exp(-h)                                    # EUP
    sig = pl.reciprocal(1.0 + e, approx=False)         # exact: outputs in [0, 1]
    out_ref[...] = jnp.where(mask_ref[...] > 0.5, sig, h)


def make_params(key):
    """Deterministic parameter init mimicking nn.Linear default (uniform)."""
    params = []
    for li in range(8):
        fan_in, fan_out = LAYER_DIMS[li], LAYER_DIMS[li + 1]
        key, kw, kb = jax.random.split(key, 3)
        bound = 1.0 / jnp.sqrt(fan_in)
        w = jax.random.uniform(kw, (fan_in, fan_out), jnp.float32, -bound, bound)
        b = jax.random.uniform(kb, (1, fan_out), jnp.float32, -bound, bound)
        params.append((w, b))
    return params


def make_sigmoid_mask():
    mask = jnp.zeros((1, OUT_F), jnp.float32)
    for v in ENCODED_CATEGORICAL_FEATURE_INDICES:
        start_index, end_index = v[0], v[-1] + 1
        mask = mask.at[:, start_index:end_index].set(1.0)
    return mask


def fuse_params(params):
    """Fuse layers 3 & 4 (no nonlinearity between): (h@W3+b3)@W4+b4 == h@(W3@W4)+b34."""
    fused = [params[0], params[1], params[2]]
    w3, b3 = params[3]
    w4, b4 = params[4]
    fused.append((w3 @ w4, b3 @ w4 + b4))
    fused.extend([params[5], params[6], params[7]])
    return fused


def autoencoder_forward(x, params, mask, *, block_b=1024):
    B = x.shape[0]
    fused = fuse_params(params)

    flat = []
    for w, b in fused:
        flat.append(w.astype(jnp.bfloat16))     # MXU operands in bf16
        flat.append(b.astype(jnp.float32))      # bias add / elementwise in f32

    # Batch tile selection:
    #   * as large as block_b (amortizes per-grid-step overhead and per-layer
    #     weight-load bubbles on the MXU),
    #   * multiple of 16 rows (bf16 sublane packing),
    #   * at most ceil(B/2) rounded up, so there are >= 2 tiles whenever
    #     B > 16 and v7x's two TensorCores both get work ("parallel" axis),
    #   * capped at 8192 rows (~2 KB/row peak VMEM -> well inside the 32 MiB
    #     scoped limit set below, safe on v7x's 64 MiB physical VMEM).
    TB = max(16, min(block_b, _round_up(pl.cdiv(B, 2), 16), 8192))
    # Ragged last tile: no wrapper-side pad/slice.  OOB reads give garbage rows
    # that are fully computed and then discarded; OOB writes are dropped.
    nb = pl.cdiv(B, TB)

    weight_bytes = sum(int(a.size) * a.dtype.itemsize for a in flat) \
        + int(mask.size) * 4
    cost = pl.CostEstimate(
        flops=2 * B * sum(i * o for i, o in FUSED_DIMS),
        transcendentals=B * OUT_F,
        bytes_accessed=B * OUT_F * (4 + 4) + weight_bytes,
    )

    def resident(shape):
        # Constant block index -> DMA'd once, stays VMEM-resident across tiles.
        return pl.BlockSpec(shape, lambda i: (0, 0))

    in_specs = [pl.BlockSpec((TB, OUT_F), lambda i: (i, 0))]   # streamed x tile
    in_specs += [resident(a.shape) for a in flat]              # VMEM-resident weights
    in_specs.append(resident(mask.shape))                      # VMEM-resident mask

    out = pl.pallas_call(
        autoencoder_kernel,
        out_shape=jax.ShapeDtypeStruct((B, OUT_F), jnp.float32),
        grid=(nb,),
        in_specs=in_specs,
        out_specs=pl.BlockSpec((TB, OUT_F), lambda i: (i, 0)),
        compiler_params=pltpu.CompilerParams(
            dimension_semantics=("parallel",),    # v7x: shard batch tiles across 2 TCs
            vmem_limit_bytes=32 * 1024 * 1024,    # explicit: safe for TB cap on all chips
        ),
        cost_estimate=cost,
    )(x, *flat, mask)

    return out


def reference_forward(x, params, mask):
    """Pure-JAX f32 reference of the original (unfused) module, eval mode."""
    h = x
    for li, (w, b) in enumerate(params):
        h = h @ w + b
        if RELU_AFTER[li]:
            h = jnp.maximum(h, 0.0)
    return jnp.where(mask > 0.5, jax.nn.sigmoid(h), h)


if __name__ == "__main__":
    key = jax.random.PRNGKey(0)
    key, kx = jax.random.split(key)

    B = 1000                                   # -> TB=512, 2 tiles incl. ragged tail
    x = jax.random.normal(kx, (B, OUT_F), jnp.float32)

    params = make_params(key)
    mask = make_sigmoid_mask()

    out = autoencoder_forward(x, params, mask)
    out = jax.block_until_ready(out)

    assert out.shape == (B, OUT_F), out.shape
    assert out.dtype == jnp.float32

    # correctness vs f32 reference (bf16 matmul operands through 7 chained
    # layers + f32->bf16 cast of the fused W3@W4 => loose tolerance, fine for inference)
    ref = reference_forward(x, params, mask)
    max_err = float(jnp.max(jnp.abs(out - ref)))
    assert max_err < 1e-1, f"max abs error {max_err}"

    # sanity: categorical columns are exact sigmoid outputs in [0, 1]
    cat_cols = out[:, 24:36]
    assert bool(jnp.all((cat_cols >= 0.0) & (cat_cols <= 1.0)))

    print("KERNEL_OK")
</pallas_src>

<mosaic_0001>
module attributes {stable_mosaic.version = 11 : i64} {
  func.func @autoencoder_kernel(%arg0: i32, %arg1: memref<512x36xf32, #tpu.memory_space<vmem>>, %arg2: memref<36x128xbf16, #tpu.memory_space<vmem>>, %arg3: memref<1x128xf32, #tpu.memory_space<vmem>>, %arg4: memref<128x64xbf16, #tpu.memory_space<vmem>>, %arg5: memref<1x64xf32, #tpu.memory_space<vmem>>, %arg6: memref<64x12xbf16, #tpu.memory_space<vmem>>, %arg7: memref<1x12xf32, #tpu.memory_space<vmem>>, %arg8: memref<12x12xbf16, #tpu.memory_space<vmem>>, %arg9: memref<1x12xf32, #tpu.memory_space<vmem>>, %arg10: memref<12x64xbf16, #tpu.memory_space<vmem>>, %arg11: memref<1x64xf32, #tpu.memory_space<vmem>>, %arg12: memref<64x128xbf16, #tpu.memory_space<vmem>>, %arg13: memref<1x128xf32, #tpu.memory_space<vmem>>, %arg14: memref<128x36xbf16, #tpu.memory_space<vmem>>, %arg15: memref<1x36xf32, #tpu.memory_space<vmem>>, %arg16: memref<1x36xf32, #tpu.memory_space<vmem>>, %arg17: memref<512x36xf32, #tpu.memory_space<vmem>>) attributes {dimension_semantics = [#tpu.dimension_semantics<parallel>], iteration_bounds = array<i64: 2>, scalar_prefetch = 0 : i64, scratch_operands = 0 : i64, tpu.core_type = #tpu.core_type<tc>, window_params = [{transform_indices = @transform_0, window_bounds = array<i64: 512, 36>}, {pipeline_mode = #tpu.pipeline_mode<synchronous>, transform_indices = @transform_1, window_bounds = array<i64: 36, 128>}, {pipeline_mode = #tpu.pipeline_mode<synchronous>, transform_indices = @transform_2, window_bounds = array<i64: 1, 128>}, {pipeline_mode = #tpu.pipeline_mode<synchronous>, transform_indices = @transform_3, window_bounds = array<i64: 128, 64>}, {pipeline_mode = #tpu.pipeline_mode<synchronous>, transform_indices = @transform_4, window_bounds = array<i64: 1, 64>}, {pipeline_mode = #tpu.pipeline_mode<synchronous>, transform_indices = @transform_5, window_bounds = array<i64: 64, 12>}, {pipeline_mode = #tpu.pipeline_mode<synchronous>, transform_indices = @transform_6, window_bounds = array<i64: 1, 12>}, {pipeline_mode = #tpu.pipeline_mode<synchronous>, transform_indices = @transform_7, window_bounds = array<i64: 12, 12>}, {pipeline_mode = #tpu.pipeline_mode<synchronous>, transform_indices = @transform_8, window_bounds = array<i64: 1, 12>}, {pipeline_mode = #tpu.pipeline_mode<synchronous>, transform_indices = @transform_9, window_bounds = array<i64: 12, 64>}, {pipeline_mode = #tpu.pipeline_mode<synchronous>, transform_indices = @transform_10, window_bounds = array<i64: 1, 64>}, {pipeline_mode = #tpu.pipeline_mode<synchronous>, transform_indices = @transform_11, window_bounds = array<i64: 64, 128>}, {pipeline_mode = #tpu.pipeline_mode<synchronous>, transform_indices = @transform_12, window_bounds = array<i64: 1, 128>}, {pipeline_mode = #tpu.pipeline_mode<synchronous>, transform_indices = @transform_13, window_bounds = array<i64: 128, 36>}, {pipeline_mode = #tpu.pipeline_mode<synchronous>, transform_indices = @transform_14, window_bounds = array<i64: 1, 36>}, {pipeline_mode = #tpu.pipeline_mode<synchronous>, transform_indices = @transform_15, window_bounds = array<i64: 1, 36>}, {transform_indices = @transform_16, window_bounds = array<i64: 512, 36>}]} {
    %c0 = arith.constant 0 : index
    %c0_0 = arith.constant 0 : index
    %0 = vector.load %arg1[%c0, %c0_0] : memref<512x36xf32, #tpu.memory_space<vmem>>, vector<512x36xf32>
    %1 = arith.truncf %0 : vector<512x36xf32> to vector<512x36xbf16>
    %c0_1 = arith.constant 0 : index
    %c0_2 = arith.constant 0 : index
    %2 = vector.load %arg2[%c0_1, %c0_2] : memref<36x128xbf16, #tpu.memory_space<vmem>>, vector<36x128xbf16>
    %c0_3 = arith.constant 0 : index
    %c0_4 = arith.constant 0 : index
    %3 = vector.load %arg3[%c0_3, %c0_4] : memref<1x128xf32, #tpu.memory_space<vmem>>, vector<1x128xf32>
    %cst = arith.constant dense<0.000000e+00> : vector<512x128xf32>
    %4 = tpu.matmul %1, %2, %cst {dimension_numbers = #tpu.dot_dimension_numbers<[1], [0], [0], [1], [0, 0, 1, 1], [], []>} : vector<512x36xbf16>, vector<36x128xbf16>, vector<512x128xf32> -> vector<512x128xf32>
    %5 = vector.broadcast %3 : vector<1x128xf32> to vector<512x128xf32>
    %6 = arith.addf %4, %5 : vector<512x128xf32>
    %cst_5 = arith.constant 0.000000e+00 : f32
    %7 = vector.broadcast %cst_5 : f32 to vector<512x128xf32>
    %8 = arith.maximumf %6, %7 : vector<512x128xf32>
    %9 = arith.truncf %8 : vector<512x128xf32> to vector<512x128xbf16>
    %c0_6 = arith.constant 0 : index
    %c0_7 = arith.constant 0 : index
    %10 = vector.load %arg4[%c0_6, %c0_7] : memref<128x64xbf16, #tpu.memory_space<vmem>>, vector<128x64xbf16>
    %c0_8 = arith.constant 0 : index
    %c0_9 = arith.constant 0 : index
    %11 = vector.load %arg5[%c0_8, %c0_9] : memref<1x64xf32, #tpu.memory_space<vmem>>, vector<1x64xf32>
    %cst_10 = arith.constant dense<0.000000e+00> : vector<512x64xf32>
    %12 = tpu.matmul %9, %10, %cst_10 {dimension_numbers = #tpu.dot_dimension_numbers<[1], [0], [0], [1], [0, 0, 1, 1], [], []>} : vector<512x128xbf16>, vector<128x64xbf16>, vector<512x64xf32> -> vector<512x64xf32>
    %13 = vector.broadcast %11 : vector<1x64xf32> to vector<512x64xf32>
    %14 = arith.addf %12, %13 : vector<512x64xf32>
    %cst_11 = arith.constant 0.000000e+00 : f32
    %15 = vector.broadcast %cst_11 : f32 to vector<512x64xf32>
    %16 = arith.maximumf %14, %15 : vector<512x64xf32>
    %17 = arith.truncf %16 : vector<512x64xf32> to vector<512x64xbf16>
    %c0_12 = arith.constant 0 : index
    %c0_13 = arith.constant 0 : index
    %18 = vector.load %arg6[%c0_12, %c0_13] : memref<64x12xbf16, #tpu.memory_space<vmem>>, vector<64x12xbf16>
    %c0_14 = arith.constant 0 : index
    %c0_15 = arith.constant 0 : index
    %19 = vector.load %arg7[%c0_14, %c0_15] : memref<1x12xf32, #tpu.memory_space<vmem>>, vector<1x12xf32>
    %cst_16 = arith.constant dense<0.000000e+00> : vector<512x12xf32>
    %20 = tpu.matmul %17, %18, %cst_16 {dimension_numbers = #tpu.dot_dimension_numbers<[1], [0], [0], [1], [0, 0, 1, 1], [], []>} : vector<512x64xbf16>, vector<64x12xbf16>, vector<512x12xf32> -> vector<512x12xf32>
    %21 = vector.broadcast %19 : vector<1x12xf32> to vector<512x12xf32>
    %22 = arith.addf %20, %21 : vector<512x12xf32>
    %cst_17 = arith.constant 0.000000e+00 : f32
    %23 = vector.broadcast %cst_17 : f32 to vector<512x12xf32>
    %24 = arith.maximumf %22, %23 : vector<512x12xf32>
    %25 = arith.truncf %24 : vector<512x12xf32> to vector<512x12xbf16>
    %c0_18 = arith.constant 0 : index
    %c0_19 = arith.constant 0 : index
    %26 = vector.load %arg8[%c0_18, %c0_19] : memref<12x12xbf16, #tpu.memory_space<vmem>>, vector<12x12xbf16>
    %c0_20 = arith.constant 0 : index
    %c0_21 = arith.constant 0 : index
    %27 = vector.load %arg9[%c0_20, %c0_21] : memref<1x12xf32, #tpu.memory_space<vmem>>, vector<1x12xf32>
    %cst_22 = arith.constant dense<0.000000e+00> : vector<512x12xf32>
    %28 = tpu.matmul %25, %26, %cst_22 {dimension_numbers = #tpu.dot_dimension_numbers<[1], [0], [0], [1], [0, 0, 1, 1], [], []>} : vector<512x12xbf16>, vector<12x12xbf16>, vector<512x12xf32> -> vector<512x12xf32>
    %29 = vector.broadcast %27 : vector<1x12xf32> to vector<512x12xf32>
    %30 = arith.addf %28, %29 : vector<512x12xf32>
    %cst_23 = arith.constant 0.000000e+00 : f32
    %31 = vector.broadcast %cst_23 : f32 to vector<512x12xf32>
    %32 = arith.maximumf %30, %31 : vector<512x12xf32>
    %33 = arith.truncf %32 : vector<512x12xf32> to vector<512x12xbf16>
    %c0_24 = arith.constant 0 : index
    %c0_25 = arith.constant 0 : index
    %34 = vector.load %arg10[%c0_24, %c0_25] : memref<12x64xbf16, #tpu.memory_space<vmem>>, vector<12x64xbf16>
    %c0_26 = arith.constant 0 : index
    %c0_27 = arith.constant 0 : index
    %35 = vector.load %arg11[%c0_26, %c0_27] : memref<1x64xf32, #tpu.memory_space<vmem>>, vector<1x64xf32>
    %cst_28 = arith.constant dense<0.000000e+00> : vector<512x64xf32>
    %36 = tpu.matmul %33, %34, %cst_28 {dimension_numbers = #tpu.dot_dimension_numbers<[1], [0], [0], [1], [0, 0, 1, 1], [], []>} : vector<512x12xbf16>, vector<12x64xbf16>, vector<512x64xf32> -> vector<512x64xf32>
    %37 = vector.broadcast %35 : vector<1x64xf32> to vector<512x64xf32>
    %38 = arith.addf %36, %37 : vector<512x64xf32>
    %cst_29 = arith.constant 0.000000e+00 : f32
    %39 = vector.broadcast %cst_29 : f32 to vector<512x64xf32>
    %40 = arith.maximumf %38, %39 : vector<512x64xf32>
    %41 = arith.truncf %40 : vector<512x64xf32> to vector<512x64xbf16>
    %c0_30 = arith.constant 0 : index
    %c0_31 = arith.constant 0 : index
    %42 = vector.load %arg12[%c0_30, %c0_31] : memref<64x128xbf16, #tpu.memory_space<vmem>>, vector<64x128xbf16>
    %c0_32 = arith.constant 0 : index
    %c0_33 = arith.constant 0 : index
    %43 = vector.load %arg13[%c0_32, %c0_33] : memref<1x128xf32, #tpu.memory_space<vmem>>, vector<1x128xf32>
    %cst_34 = arith.constant dense<0.000000e+00> : vector<512x128xf32>
    %44 = tpu.matmul %41, %42, %cst_34 {dimension_numbers = #tpu.dot_dimension_numbers<[1], [0], [0], [1], [0, 0, 1, 1], [], []>} : vector<512x64xbf16>, vector<64x128xbf16>, vector<512x128xf32> -> vector<512x128xf32>
    %45 = vector.broadcast %43 : vector<1x128xf32> to vector<512x128xf32>
    %46 = arith.addf %44, %45 : vector<512x128xf32>
    %cst_35 = arith.constant 0.000000e+00 : f32
    %47 = vector.broadcast %cst_35 : f32 to vector<512x128xf32>
    %48 = arith.maximumf %46, %47 : vector<512x128xf32>
    %49 = arith.truncf %48 : vector<512x128xf32> to vector<512x128xbf16>
    %c0_36 = arith.constant 0 : index
    %c0_37 = arith.constant 0 : index
    %50 = vector.load %arg14[%c0_36, %c0_37] : memref<128x36xbf16, #tpu.memory_space<vmem>>, vector<128x36xbf16>
    %c0_38 = arith.constant 0 : index
    %c0_39 = arith.constant 0 : index
    %51 = vector.load %arg15[%c0_38, %c0_39] : memref<1x36xf32, #tpu.memory_space<vmem>>, vector<1x36xf32>
    %cst_40 = arith.constant dense<0.000000e+00> : vector<512x36xf32>
    %52 = tpu.matmul %49, %50, %cst_40 {dimension_numbers = #tpu.dot_dimension_numbers<[1], [0], [0], [1], [0, 0, 1, 1], [], []>} : vector<512x128xbf16>, vector<128x36xbf16>, vector<512x36xf32> -> vector<512x36xf32>
    %53 = vector.broadcast %51 : vector<1x36xf32> to vector<512x36xf32>
    %54 = arith.addf %52, %53 : vector<512x36xf32>
    %cst_41 = arith.constant 0.000000e+00 : f32
    %55 = vector.broadcast %cst_41 : f32 to vector<512x36xf32>
    %56 = arith.subf %55, %54 : vector<512x36xf32>
    %57 = math.exp %56 : vector<512x36xf32>
    %cst_42 = arith.constant 1.000000e+00 : f32
    %58 = vector.broadcast %cst_42 : f32 to vector<512x36xf32>
    %59 = arith.addf %58, %57 : vector<512x36xf32>
    %60 = tpu.reciprocal %59 : vector<512x36xf32> -> vector<512x36xf32>
    %c0_43 = arith.constant 0 : index
    %c0_44 = arith.constant 0 : index
    %61 = vector.load %arg16[%c0_43, %c0_44] : memref<1x36xf32, #tpu.memory_space<vmem>>, vector<1x36xf32>
    %cst_45 = arith.constant 5.000000e-01 : f32
    %62 = vector.broadcast %cst_45 : f32 to vector<1x36xf32>
    %63 = arith.cmpf ogt, %61, %62 : vector<1x36xf32>
    %64 = vector.shape_cast %63 : vector<1x36xi1> to vector<1x36xi1>
    %65 = vector.broadcast %64 : vector<1x36xi1> to vector<512x36xi1>
    %66 = arith.select %65, %60, %54 : vector<512x36xi1>, vector<512x36xf32>
    %c0_46 = arith.constant 0 : index
    %c0_47 = arith.constant 0 : index
    %67 = vector.load %arg17[%c0_46, %c0_47] : memref<512x36xf32, #tpu.memory_space<vmem>>, vector<512x36xf32>
    tpu.vector_store %arg17[%c0_46, %c0_47], %66 {strides = array<i32>} : memref<512x36xf32, #tpu.memory_space<vmem>>, vector<512x36xf32>,
    return
  }
  func.func @transform_0(%arg0: i32) -> (i32, i32) {
    %c0_i32 = arith.constant 0 : i32
    %c0_i32_0 = arith.constant 0 : i32
    return %arg0, %c0_i32 : i32, i32
  }
  func.func @transform_1(%arg0: i32) -> (i32, i32) {
    %c0_i32 = arith.constant 0 : i32
    %c0_i32_0 = arith.constant 0 : i32
    %c0_i32_1 = arith.constant 0 : i32
    return %c0_i32, %c0_i32_0 : i32, i32
  }
  func.func @transform_2(%arg0: i32) -> (i32, i32) {
    %c0_i32 = arith.constant 0 : i32
    %c0_i32_0 = arith.constant 0 : i32
    %c0_i32_1 = arith.constant 0 : i32
    return %c0_i32, %c0_i32_0 : i32, i32
  }
  func.func @transform_3(%arg0: i32) -> (i32, i32) {
    %c0_i32 = arith.constant 0 : i32
    %c0_i32_0 = arith.constant 0 : i32
    %c0_i32_1 = arith.constant 0 : i32
    return %c0_i32, %c0_i32_0 : i32, i32
  }
  func.func @transform_4(%arg0: i32) -> (i32, i32) {
    %c0_i32 = arith.constant 0 : i32
    %c0_i32_0 = arith.constant 0 : i32
    %c0_i32_1 = arith.constant 0 : i32
    return %c0_i32, %c0_i32_0 : i32, i32
  }
  func.func @transform_5(%arg0: i32) -> (i32, i32) {
    %c0_i32 = arith.constant 0 : i32
    %c0_i32_0 = arith.constant 0 : i32
    %c0_i32_1 = arith.constant 0 : i32
    return %c0_i32, %c0_i32_0 : i32, i32
  }
  func.func @transform_6(%arg0: i32) -> (i32, i32) {
    %c0_i32 = arith.constant 0 : i32
    %c0_i32_0 = arith.constant 0 : i32
    %c0_i32_1 = arith.constant 0 : i32
    return %c0_i32, %c0_i32_0 : i32, i32
  }
  func.func @transform_7(%arg0: i32) -> (i32, i32) {
    %c0_i32 = arith.constant 0 : i32
    %c0_i32_0 = arith.constant 0 : i32
    %c0_i32_1 = arith.constant 0 : i32
    return %c0_i32, %c0_i32_0 : i32, i32
  }
  func.func @transform_8(%arg0: i32) -> (i32, i32) {
    %c0_i32 = arith.constant 0 : i32
    %c0_i32_0 = arith.constant 0 : i32
    %c0_i32_1 = arith.constant 0 : i32
    return %c0_i32, %c0_i32_0 : i32, i32
  }
  func.func @transform_9(%arg0: i32) -> (i32, i32) {
    %c0_i32 = arith.constant 0 : i32
    %c0_i32_0 = arith.constant 0 : i32
    %c0_i32_1 = arith.constant 0 : i32
    return %c0_i32, %c0_i32_0 : i32, i32
  }
  func.func @transform_10(%arg0: i32) -> (i32, i32) {
    %c0_i32 = arith.constant 0 : i32
    %c0_i32_0 = arith.constant 0 : i32
    %c0_i32_1 = arith.constant 0 : i32
    return %c0_i32, %c0_i32_0 : i32, i32
  }
  func.func @transform_11(%arg0: i32) -> (i32, i32) {
    %c0_i32 = arith.constant 0 : i32
    %c0_i32_0 = arith.constant 0 : i32
    %c0_i32_1 = arith.constant 0 : i32
    return %c0_i32, %c0_i32_0 : i32, i32
  }
  func.func @transform_12(%arg0: i32) -> (i32, i32) {
    %c0_i32 = arith.constant 0 : i32
    %c0_i32_0 = arith.constant 0 : i32
    %c0_i32_1 = arith.constant 0 : i32
    return %c0_i32, %c0_i32_0 : i32, i32
  }
  func.func @transform_13(%arg0: i32) -> (i32, i32) {
    %c0_i32 = arith.constant 0 : i32
    %c0_i32_0 = arith.constant 0 : i32
    %c0_i32_1 = arith.constant 0 : i32
    return %c0_i32, %c0_i32_0 : i32, i32
  }
  func.func @transform_14(%arg0: i32) -> (i32, i32) {
    %c0_i32 = arith.constant 0 : i32
    %c0_i32_0 = arith.constant 0 : i32
    %c0_i32_1 = arith.constant 0 : i32
    return %c0_i32, %c0_i32_0 : i32, i32
  }
  func.func @transform_15(%arg0: i32) -> (i32, i32) {
    %c0_i32 = arith.constant 0 : i32
    %c0_i32_0 = arith.constant 0 : i32
    %c0_i32_1 = arith.constant 0 : i32
    return %c0_i32, %c0_i32_0 : i32, i32
  }
  func.func @transform_16(%arg0: i32) -> (i32, i32) {
    %c0_i32 = arith.constant 0 : i32
    %c0_i32_0 = arith.constant 0 : i32
    return %arg0, %c0_i32 : i32, i32
  }
}

</mosaic_0001>

<llo_original>
// kernel: tpu_custom_call.1
$region0: #{tpu_custom_call.1}
  #allocation0 [shape = 'u32[]', space=smem, size = 0x4, offset = 0x4, fixed_abs, tag = 'smem constant byte address 0x4 - core index']
  #allocation1 [shape = 'u32[144,128]{1,0:T(1,128)}', space=vmem, size = 0x12000, scoped, tag = 'internal scratch']
  %s0 = inlined_call_operand.vmem [shape: f32[1000,36], index: 0, kind: input, shape index: {}]
  %s1 = inlined_call_operand.vmem [shape: bf16[36,128], index: 1, kind: input, shape index: {}]
  %s2 = inlined_call_operand.vmem [shape: f32[1,128], index: 2, kind: input, shape index: {}]
  %s3 = inlined_call_operand.vmem [shape: bf16[128,64], index: 3, kind: input, shape index: {}]
  %s4 = inlined_call_operand.vmem [shape: f32[1,64], index: 4, kind: input, shape index: {}]
  %s5 = inlined_call_operand.vmem [shape: bf16[64,12], index: 5, kind: input, shape index: {}]
  %s6 = inlined_call_operand.vmem [shape: f32[1,12], index: 6, kind: input, shape index: {}]
  %s7 = inlined_call_operand.vmem [shape: bf16[12,12], index: 7, kind: input, shape index: {}]
  %s8 = inlined_call_operand.vmem [shape: f32[1,12], index: 8, kind: input, shape index: {}]
  %s9 = inlined_call_operand.vmem [shape: bf16[12,64], index: 9, kind: input, shape index: {}]
  %s10 = inlined_call_operand.vmem [shape: f32[1,64], index: 10, kind: input, shape index: {}]
  %s11 = inlined_call_operand.vmem [shape: bf16[64,128], index: 11, kind: input, shape index: {}]
  %s12 = inlined_call_operand.vmem [shape: f32[1,128], index: 12, kind: input, shape index: {}]
  %s13 = inlined_call_operand.vmem [shape: bf16[128,36], index: 13, kind: input, shape index: {}]
  %s14 = inlined_call_operand.vmem [shape: f32[1,36], index: 14, kind: input, shape index: {}]
  %s15 = inlined_call_operand.vmem [shape: f32[1,36], index: 15, kind: input, shape index: {}]
  %s16 = inlined_call_operand.vmem [shape: f32[1000,36], index: 16, kind: output, shape index: {}]
  %s17 = sld [smem:[#allocation0]]
  $region145: #{tpu_custom_call.1} parent=0
    _
  %s19 = ssub.s32 1, %s17
  %s20 = scalar_select 0, %s19, %s17
  $region1: #{tpu_custom_call.1} parent=0
    #allocation2 [shape = 'u8[524288]{0}', space=vmem, size = 0x80000, scoped, tag = 'output window, operand 0']
    loop: start=0, step=1, limit=4
    $region2: #{tpu_custom_call.1} parent=1 // loop_pre_header
      _
    $region3: #{tpu_custom_call.1} parent=1 // loop_header
      %s22 = sphi 0, %s26
      %p23 = scmp.ge.s32.totalorder %s22, 4
      %s32 = sphi 0, %s34
      %s35 = sphi 0, %s32
      %s36 = sphi 0, %s35
      %s52 = sphi 0, %s36
      %s56 = sphi 0, %s56
      %s58 = sphi 0, %s56
      %s59 = sphi 0, %s58
      %s73 = sphi 0, %s59
      %s77 = sphi 0, %s77
      %s79 = sphi 0, %s77
      %s80 = sphi 0, %s79
      %s94 = sphi 0, %s80
      %s98 = sphi 0, %s98
      %s100 = sphi 0, %s98
      %s101 = sphi 0, %s100
      %s115 = sphi 0, %s101
      %s119 = sphi 0, %s119
      %s121 = sphi 0, %s119
      %s122 = sphi 0, %s121
      %s136 = sphi 0, %s122
      %s140 = sphi 0, %s140
      %s142 = sphi 0, %s140
      %s143 = sphi 0, %s142
      %s157 = sphi 0, %s143
      %s161 = sphi 0, %s161
      %s163 = sphi 0, %s161
      %s164 = sphi 0, %s163
      %s178 = sphi 0, %s164
      %s182 = sphi 0, %s182
      %s184 = sphi 0, %s182
      %s185 = sphi 0, %s184
      %s199 = sphi 0, %s185
      %s203 = sphi 0, %s203
      %s205 = sphi 0, %s203
      %s206 = sphi 0, %s205
      %s220 = sphi 0, %s206
      %s224 = sphi 0, %s224
      %s226 = sphi 0, %s224
      %s227 = sphi 0, %s226
      %s241 = sphi 0, %s227
      %s245 = sphi 0, %s245
      %s247 = sphi 0, %s245
      %s248 = sphi 0, %s247
      %s262 = sphi 0, %s248
      %s266 = sphi 0, %s266
      %s268 = sphi 0, %s266
      %s269 = sphi 0, %s268
      %s283 = sphi 0, %s269
      %s287 = sphi 0, %s287
      %s289 = sphi 0, %s287
      %s290 = sphi 0, %s289
      %s304 = sphi 0, %s290
      %s308 = sphi 0, %s308
      %s310 = sphi 0, %s308
      %s311 = sphi 0, %s310
      %s325 = sphi 0, %s311
      %s329 = sphi 0, %s329
      %s331 = sphi 0, %s329
      %s332 = sphi 0, %s331
      %s346 = sphi 0, %s332
      %s350 = sphi 0, %s350
      %s352 = sphi 0, %s350
      %s353 = sphi 0, %s352
      %s367 = sphi 0, %s353
      %s373 = sphi 0, %s375
      %s376 = sphi 0, %s373
      %s377 = sphi 0, %s376
      %s393 = sphi 0, %s377
    $region4: #{tpu_custom_call.1} parent=1 // loop_header_branch
      %25 = sbr.rel (%p23) target = $region8
    $region5: #{tpu_custom_call.1} parent=1 // loop_body
      %s27 = ssub.s32 %s22, 1
      %s28 = ssub.s32 %s22, 2
      %s29 = sadd.s32 %s22, 1
      %s30 = ssub.s32 %s22, %s29
      %p31 = scmp.eq.s32.totalorder %s30, 0
      %s33 = sadd.s32 %s32, 1
      %s34 = scalar_select %p31, %s32, %s33
      %p37 = pneg %p31
      %p38 = scmp.eq.s32.totalorder %s22, 1
      %p39 = por %p37, %p38
      %p40 = scmp.ne.s32.totalorder %s32, %s35
      %p41 = scmp.eq.s32.totalorder %s22, 0
      %p42 = por %p40, %p41
      %p43 = scmp.ne.s32.totalorder %s32, %s35
      %p44 = scmp.eq.s32.totalorder %s27, 1
      %p45 = por %p43, %p44
      %p46 = scmp.ne.s32.totalorder %s35, %s36
      %p47 = scmp.eq.s32.totalorder %s27, 0
      %p48 = por %p46, %p47
      %p49 = scmp.ne.s32.totalorder %s35, %s36
      %p50 = scmp.eq.s32.totalorder %s28, 1
      %p51 = por %p49, %p50
      %p53 = scmp.ne.s32.totalorder %s36, %s52
      %p54 = scmp.eq.s32.totalorder %s28, 0
      %p55 = por %p53, %p54
      %s57 = sadd.s32 %s56, 1
      %p60 = scmp.eq.s32.totalorder %s22, 1
      %p61 = scmp.ne.s32.totalorder %s56, %s58
      %p62 = scmp.eq.s32.totalorder %s22, 0
      %p63 = por %p61, %p62
      %p64 = scmp.ne.s32.totalorder %s56, %s58
      %p65 = scmp.eq.s32.totalorder %s27, 1
      %p66 = por %p64, %p65
      %p67 = scmp.ne.s32.totalorder %s58, %s59
      %p68 = scmp.eq.s32.totalorder %s27, 0
      %p69 = por %p67, %p68
      %p70 = scmp.ne.s32.totalorder %s58, %s59
      %p71 = scmp.eq.s32.totalorder %s28, 1
      %p72 = por %p70, %p71
      %p74 = scmp.ne.s32.totalorder %s59, %s73
      %p75 = scmp.eq.s32.totalorder %s28, 0
      %p76 = por %p74, %p75
      %s78 = sadd.s32 %s77, 1
      %p81 = scmp.eq.s32.totalorder %s22, 1
      %p82 = scmp.ne.s32.totalorder %s77, %s79
      %p83 = scmp.eq.s32.totalorder %s22, 0
      %p84 = por %p82, %p83
      %p85 = scmp.ne.s32.totalorder %s77, %s79
      %p86 = scmp.eq.s32.totalorder %s27, 1
      %p87 = por %p85, %p86
      %p88 = scmp.ne.s32.totalorder %s79, %s80
      %p89 = scmp.eq.s32.totalorder %s27, 0
      %p90 = por %p88, %p89
      %p91 = scmp.ne.s32.totalorder %s79, %s80
      %p92 = scmp.eq.s32.totalorder %s28, 1
      %p93 = por %p91, %p92
      %p95 = scmp.ne.s32.totalorder %s80, %s94
      %p96 = scmp.eq.s32.totalorder %s28, 0
      %p97 = por %p95, %p96
      %s99 = sadd.s32 %s98, 1
      %p102 = scmp.eq.s32.totalorder %s22, 1
      %p103 = scmp.ne.s32.totalorder %s98, %s100
      %p104 = scmp.eq.s32.totalorder %s22, 0
      %p105 = por %p103, %p104
      %p106 = scmp.ne.s32.totalorder %s98, %s100
      %p107 = scmp.eq.s32.totalorder %s27, 1
      %p108 = por %p106, %p107
      %p109 = scmp.ne.s32.totalorder %s100, %s101
      %p110 = scmp.eq.s32.totalorder %s27, 0
      %p111 = por %p109, %p110
      %p112 = scmp.ne.s32.totalorder %s100, %s101
      %p113 = scmp.eq.s32.totalorder %s28, 1
      %p114 = por %p112, %p113
      %p116 = scmp.ne.s32.totalorder %s101, %s115
      %p117 = scmp.eq.s32.totalorder %s28, 0
      %p118 = por %p116, %p117
      %s120 = sadd.s32 %s119, 1
      %p123 = scmp.eq.s32.totalorder %s22, 1
      %p124 = scmp.ne.s32.totalorder %s119, %s121
      %p125 = scmp.eq.s32.totalorder %s22, 0
      %p126 = por %p124, %p125
      %p127 = scmp.ne.s32.totalorder %s119, %s121
      %p128 = scmp.eq.s32.totalorder %s27, 1
      %p129 = por %p127, %p128
      %p130 = scmp.ne.s32.totalorder %s121, %s122
      %p131 = scmp.eq.s32.totalorder %s27, 0
      %p132 = por %p130, %p131
      %p133 = scmp.ne.s32.totalorder %s121, %s122
      %p134 = scmp.eq.s32.totalorder %s28, 1
      %p135 = por %p133, %p134
      %p137 = scmp.ne.s32.totalorder %s122, %s136
      %p138 = scmp.eq.s32.totalorder %s28, 0
      %p139 = por %p137, %p138
      %s141 = sadd.s32 %s140, 1
      %p144 = scmp.eq.s32.totalorder %s22, 1
      %p145 = scmp.ne.s32.totalorder %s140, %s142
      %p146 = scmp.eq.s32.totalorder %s22, 0
      %p147 = por %p145, %p146
      %p148 = scmp.ne.s32.totalorder %s140, %s142
      %p149 = scmp.eq.s32.totalorder %s27, 1
      %p150 = por %p148, %p149
      %p151 = scmp.ne.s32.totalorder %s142, %s143
      %p152 = scmp.eq.s32.totalorder %s27, 0
      %p153 = por %p151, %p152
      %p154 = scmp.ne.s32.totalorder %s142, %s143
      %p155 = scmp.eq.s32.totalorder %s28, 1
      %p156 = por %p154, %p155
      %p158 = scmp.ne.s32.totalorder %s143, %s157
      %p159 = scmp.eq.s32.totalorder %s28, 0
      %p160 = por %p158, %p159
      %s162 = sadd.s32 %s161, 1
      %p165 = scmp.eq.s32.totalorder %s22, 1
      %p166 = scmp.ne.s32.totalorder %s161, %s163
      %p167 = scmp.eq.s32.totalorder %s22, 0
      %p168 = por %p166, %p167
      %p169 = scmp.ne.s32.totalorder %s161, %s163
      %p170 = scmp.eq.s32.totalorder %s27, 1
      %p171 = por %p169, %p170
      %p172 = scmp.ne.s32.totalorder %s163, %s164
      %p173 = scmp.eq.s32.totalorder %s27, 0
      %p174 = por %p172, %p173
      %p175 = scmp.ne.s32.totalorder %s163, %s164
      %p176 = scmp.eq.s32.totalorder %s28, 1
      %p177 = por %p175, %p176
      %p179 = scmp.ne.s32.totalorder %s164, %s178
      %p180 = scmp.eq.s32.totalorder %s28, 0
      %p181 = por %p179, %p180
      %s183 = sadd.s32 %s182, 1
      %p186 = scmp.eq.s32.totalorder %s22, 1
      %p187 = scmp.ne.s32.totalorder %s182, %s184
      %p188 = scmp.eq.s32.totalorder %s22, 0
      %p189 = por %p187, %p188
      %p190 = scmp.ne.s32.totalorder %s182, %s184
      %p191 = scmp.eq.s32.totalorder %s27, 1
      %p192 = por %p190, %p191
      %p193 = scmp.ne.s32.totalorder %s184, %s185
      %p194 = scmp.eq.s32.totalorder %s27, 0
      %p195 = por %p193, %p194
      %p196 = scmp.ne.s32.totalorder %s184, %s185
      %p197 = scmp.eq.s32.totalorder %s28, 1
      %p198 = por %p196, %p197
      %p200 = scmp.ne.s32.totalorder %s185, %s199
      %p201 = scmp.eq.s32.totalorder %s28, 0
      %p202 = por %p200, %p201
      %s204 = sadd.s32 %s203, 1
      %p207 = scmp.eq.s32.totalorder %s22, 1
      %p208 = scmp.ne.s32.totalorder %s203, %s205
      %p209 = scmp.eq.s32.totalorder %s22, 0
      %p210 = por %p208, %p209
      %p211 = scmp.ne.s32.totalorder %s203, %s205
      %p212 = scmp.eq.s32.totalorder %s27, 1
      %p213 = por %p211, %p212
      %p214 = scmp.ne.s32.totalorder %s205, %s206
      %p215 = scmp.eq.s32.totalorder %s27, 0
      %p216 = por %p214, %p215
      %p217 = scmp.ne.s32.totalorder %s205, %s206
      %p218 = scmp.eq.s32.totalorder %s28, 1
      %p219 = por %p217, %p218
      %p221 = scmp.ne.s32.totalorder %s206, %s220
      %p222 = scmp.eq.s32.totalorder %s28, 0
      %p223 = por %p221, %p222
      %s225 = sadd.s32 %s224, 1
      %p228 = scmp.eq.s32.totalorder %s22, 1
      %p229 = scmp.ne.s32.totalorder %s224, %s226
      %p230 = scmp.eq.s32.totalorder %s22, 0
      %p231 = por %p229, %p230
      %p232 = scmp.ne.s32.totalorder %s224, %s226
      %p233 = scmp.eq.s32.totalorder %s27, 1
      %p234 = por %p232, %p233
      %p235 = scmp.ne.s32.totalorder %s226, %s227
      %p236 = scmp.eq.s32.totalorder %s27, 0
      %p237 = por %p235, %p236
      %p238 = scmp.ne.s32.totalorder %s226, %s227
      %p239 = scmp.eq.s32.totalorder %s28, 1
      %p240 = por %p238, %p239
      %p242 = scmp.ne.s32.totalorder %s227, %s241
      %p243 = scmp.eq.s32.totalorder %s28, 0
      %p244 = por %p242, %p243
      %s246 = sadd.s32 %s245, 1
      %p249 = scmp.eq.s32.totalorder %s22, 1
      %p250 = scmp.ne.s32.totalorder %s245, %s247
      %p251 = scmp.eq.s32.totalorder %s22, 0
      %p252 = por %p250, %p251
      %p253 = scmp.ne.s32.totalorder %s245, %s247
      %p254 = scmp.eq.s32.totalorder %s27, 1
      %p255 = por %p253, %p254
      %p256 = scmp.ne.s32.totalorder %s247, %s248
      %p257 = scmp.eq.s32.totalorder %s27, 0
      %p258 = por %p256, %p257
      %p259 = scmp.ne.s32.totalorder %s247, %s248
      %p260 = scmp.eq.s32.totalorder %s28, 1
      %p261 = por %p259, %p260
      %p263 = scmp.ne.s32.totalorder %s248, %s262
      %p264 = scmp.eq.s32.totalorder %s28, 0
      %p265 = por %p263, %p264
      %s267 = sadd.s32 %s266, 1
      %p270 = scmp.eq.s32.totalorder %s22, 1
      %p271 = scmp.ne.s32.totalorder %s266, %s268
      %p272 = scmp.eq.s32.totalorder %s22, 0
      %p273 = por %p271, %p272
      %p274 = scmp.ne.s32.totalorder %s266, %s268
      %p275 = scmp.eq.s32.totalorder %s27, 1
      %p276 = por %p274, %p275
      %p277 = scmp.ne.s32.totalorder %s268, %s269
      %p278 = scmp.eq.s32.totalorder %s27, 0
      %p279 = por %p277, %p278
      %p280 = scmp.ne.s32.totalorder %s268, %s269
      %p281 = scmp.eq.s32.totalorder %s28, 1
      %p282 = por %p280, %p281
      %p284 = scmp.ne.s32.totalorder %s269, %s283
      %p285 = scmp.eq.s32.totalorder %s28, 0
      %p286 = por %p284, %p285
      %s288 = sadd.s32 %s287, 1
      %p291 = scmp.eq.s32.totalorder %s22, 1
      %p292 = scmp.ne.s32.totalorder %s287, %s289
      %p293 = scmp.eq.s32.totalorder %s22, 0
      %p294 = por %p292, %p293
      %p295 = scmp.ne.s32.totalorder %s287, %s289
      %p296 = scmp.eq.s32.totalorder %s27, 1
      %p297 = por %p295, %p296
      %p298 = scmp.ne.s32.totalorder %s289, %s290
      %p299 = scmp.eq.s32.totalorder %s27, 0
      %p300 = por %p298, %p299
      %p301 = scmp.ne.s32.totalorder %s289, %s290
      %p302 = scmp.eq.s32.totalorder %s28, 1
      %p303 = por %p301, %p302
      %p305 = scmp.ne.s32.totalorder %s290, %s304
      %p306 = scmp.eq.s32.totalorder %s28, 0
      %p307 = por %p305, %p306
      %s309 = sadd.s32 %s308, 1
      %p312 = scmp.eq.s32.totalorder %s22, 1
      %p313 = scmp.ne.s32.totalorder %s308, %s310
      %p314 = scmp.eq.s32.totalorder %s22, 0
      %p315 = por %p313, %p314
      %p316 = scmp.ne.s32.totalorder %s308, %s310
      %p317 = scmp.eq.s32.totalorder %s27, 1
      %p318 = por %p316, %p317
      %p319 = scmp.ne.s32.totalorder %s310, %s311
      %p320 = scmp.eq.s32.totalorder %s27, 0
      %p321 = por %p319, %p320
      %p322 = scmp.ne.s32.totalorder %s310, %s311
      %p323 = scmp.eq.s32.totalorder %s28, 1
      %p324 = por %p322, %p323
      %p326 = scmp.ne.s32.totalorder %s311, %s325
      %p327 = scmp.eq.s32.totalorder %s28, 0
      %p328 = por %p326, %p327
      %s330 = sadd.s32 %s329, 1
      %p333 = scmp.eq.s32.totalorder %s22, 1
      %p334 = scmp.ne.s32.totalorder %s329, %s331
      %p335 = scmp.eq.s32.totalorder %s22, 0
      %p336 = por %p334, %p335
      %p337 = scmp.ne.s32.totalorder %s329, %s331
      %p338 = scmp.eq.s32.totalorder %s27, 1
      %p339 = por %p337, %p338
      %p340 = scmp.ne.s32.totalorder %s331, %s332
      %p341 = scmp.eq.s32.totalorder %s27, 0
      %p342 = por %p340, %p341
      %p343 = scmp.ne.s32.totalorder %s331, %s332
      %p344 = scmp.eq.s32.totalorder %s28, 1
      %p345 = por %p343, %p344
      %p347 = scmp.ne.s32.totalorder %s332, %s346
      %p348 = scmp.eq.s32.totalorder %s28, 0
      %p349 = por %p347, %p348
      %s351 = sadd.s32 %s350, 1
      %p354 = scmp.eq.s32.totalorder %s22, 1
      %p355 = scmp.ne.s32.totalorder %s350, %s352
      %p356 = scmp.eq.s32.totalorder %s22, 0
      %p357 = por %p355, %p356
      %p358 = scmp.ne.s32.totalorder %s350, %s352
      %p359 = scmp.eq.s32.totalorder %s27, 1
      %p360 = por %p358, %p359
      %p361 = scmp.ne.s32.totalorder %s352, %s353
      %p362 = scmp.eq.s32.totalorder %s27, 0
      %p363 = por %p361, %p362
      %p364 = scmp.ne.s32.totalorder %s352, %s353
      %p365 = scmp.eq.s32.totalorder %s28, 1
      %p366 = por %p364, %p365
      %p368 = scmp.ne.s32.totalorder %s353, %s367
      %p369 = scmp.eq.s32.totalorder %s28, 0
      %p370 = por %p368, %p369
      %s371 = ssub.s32 %s22, %s29
      %p372 = scmp.eq.s32.totalorder %s371, 0
      %s374 = sadd.s32 %s373, 1
      %s375 = scalar_select %p372, %s373, %s374
      %p378 = pneg %p372
      %p379 = scmp.eq.s32.totalorder %s22, 1
      %p380 = por %p378, %p379
      %p381 = scmp.ne.s32.totalorder %s373, %s376
      %p382 = scmp.eq.s32.totalorder %s22, 0
      %p383 = por %p381, %p382
      %p384 = scmp.ne.s32.totalorder %s373, %s376
      %p385 = scmp.eq.s32.totalorder %s27, 1
      %p386 = por %p384, %p385
      %p387 = scmp.ne.s32.totalorder %s376, %s377
      %p388 = scmp.eq.s32.totalorder %s27, 0
      %p389 = por %p387, %p388
      %p390 = scmp.ne.s32.totalorder %s376, %s377
      %p391 = scmp.eq.s32.totalorder %s28, 1
      %p392 = por %p390, %p391
      %p394 = scmp.ne.s32.totalorder %s377, %s393
      %p395 = scmp.eq.s32.totalorder %s28, 0
      %p396 = por %p394, %p395
      %p397 = scmp.le.s32.totalorder 1, %s22
      %p398 = scmp.lt.s32.totalorder %s22, 3
      %p399 = pnand %p397, %p398
      %p400 = pneg %p399
      // Predicated region
      $region9: #{tpu_custom_call.1} parent=5 // pred_check
        _
      $region10: #{tpu_custom_call.1} parent=5 // pred_check_branch
        %402 = sbr.rel (%p399) target = $region12
      $region11: #{tpu_custom_call.1} parent=5 // pred_region
        %s403 = ssub.s32 %s22, 1
        // Predicated region
        $region13: #{tpu_custom_call.1} parent=11 // pred_check
          %p404 = pneg %p69
        $region14: #{tpu_custom_call.1} parent=11 // pred_check_branch
          %406 = sbr.rel (%p404) target = $region16
        $region15: #{tpu_custom_call.1} parent=11 // pred_region
          _
        $region16: #{tpu_custom_call.1} parent=11 // pred_fallthru
          _
        // Predicated region
        $region17: #{tpu_custom_call.1} parent=11 // pred_check
          %p407 = pneg %p90
        $region18: #{tpu_custom_call.1} parent=11 // pred_check_branch
          %409 = sbr.rel (%p407) target = $region20
        $region19: #{tpu_custom_call.1} parent=11 // pred_region
          _
        $region20: #{tpu_custom_call.1} parent=11 // pred_fallthru
          _
        // Predicated region
        $region21: #{tpu_custom_call.1} parent=11 // pred_check
          %p410 = pneg %p111
        $region22: #{tpu_custom_call.1} parent=11 // pred_check_branch
          %412 = sbr.rel (%p410) target = $region24
        $region23: #{tpu_custom_call.1} parent=11 // pred_region
          _
        $region24: #{tpu_custom_call.1} parent=11 // pred_fallthru
          _
        // Predicated region
        $region25: #{tpu_custom_call.1} parent=11 // pred_check
          %p413 = pneg %p132
        $region26: #{tpu_custom_call.1} parent=11 // pred_check_branch
          %415 = sbr.rel (%p413) target = $region28
        $region27: #{tpu_custom_call.1} parent=11 // pred_region
          _
        $region28: #{tpu_custom_call.1} parent=11 // pred_fallthru
          _
        // Predicated region
        $region29: #{tpu_custom_call.1} parent=11 // pred_check
          %p416 = pneg %p153
        $region30: #{tpu_custom_call.1} parent=11 // pred_check_branch
          %418 = sbr.rel (%p416) target = $region32
        $region31: #{tpu_custom_call.1} parent=11 // pred_region
          _
        $region32: #{tpu_custom_call.1} parent=11 // pred_fallthru
          _
        // Predicated region
        $region33: #{tpu_custom_call.1} parent=11 // pred_check
          %p419 = pneg %p174
        $region34: #{tpu_custom_call.1} parent=11 // pred_check_branch
          %421 = sbr.rel (%p419) target = $region36
        $region35: #{tpu_custom_call.1} parent=11 // pred_region
          _
        $region36: #{tpu_custom_call.1} parent=11 // pred_fallthru
          _
        // Predicated region
        $region37: #{tpu_custom_call.1} parent=11 // pred_check
          %p422 = pneg %p195
        $region38: #{tpu_custom_call.1} parent=11 // pred_check_branch
          %424 = sbr.rel (%p422) target = $region40
        $region39: #{tpu_custom_call.1} parent=11 // pred_region
          _
        $region40: #{tpu_custom_call.1} parent=11 // pred_fallthru
          _
        // Predicated region
        $region41: #{tpu_custom_call.1} parent=11 // pred_check
          %p425 = pneg %p216
        $region42: #{tpu_custom_call.1} parent=11 // pred_check_branch
          %427 = sbr.rel (%p425) target = $region44
        $region43: #{tpu_custom_call.1} parent=11 // pred_region
          _
        $region44: #{tpu_custom_call.1} parent=11 // pred_fallthru
          _
        // Predicated region
        $region45: #{tpu_custom_call.1} parent=11 // pred_check
          %p428 = pneg %p237
        $region46: #{tpu_custom_call.1} parent=11 // pred_check_branch
          %430 = sbr.rel (%p428) target = $region48
        $region47: #{tpu_custom_call.1} parent=11 // pred_region
          _
        $region48: #{tpu_custom_call.1} parent=11 // pred_fallthru
          _
        // Predicated region
        $region49: #{tpu_custom_call.1} parent=11 // pred_check
          %p431 = pneg %p258
        $region50: #{tpu_custom_call.1} parent=11 // pred_check_branch
          %433 = sbr.rel (%p431) target = $region52
        $region51: #{tpu_custom_call.1} parent=11 // pred_region
          _
        $region52: #{tpu_custom_call.1} parent=11 // pred_fallthru
          _
        // Predicated region
        $region53: #{tpu_custom_call.1} parent=11 // pred_check
          %p434 = pneg %p279
        $region54: #{tpu_custom_call.1} parent=11 // pred_check_branch
          %436 = sbr.rel (%p434) target = $region56
        $region55: #{tpu_custom_call.1} parent=11 // pred_region
          _
        $region56: #{tpu_custom_call.1} parent=11 // pred_fallthru
          _
        // Predicated region
        $region57: #{tpu_custom_call.1} parent=11 // pred_check
          %p437 = pneg %p300
        $region58: #{tpu_custom_call.1} parent=11 // pred_check_branch
          %439 = sbr.rel (%p437) target = $region60
        $region59: #{tpu_custom_call.1} parent=11 // pred_region
          _
        $region60: #{tpu_custom_call.1} parent=11 // pred_fallthru
          _
        // Predicated region
        $region61: #{tpu_custom_call.1} parent=11 // pred_check
          %p440 = pneg %p321
        $region62: #{tpu_custom_call.1} parent=11 // pred_check_branch
          %442 = sbr.rel (%p440) target = $region64
        $region63: #{tpu_custom_call.1} parent=11 // pred_region
          _
        $region64: #{tpu_custom_call.1} parent=11 // pred_fallthru
          _
        // Predicated region
        $region65: #{tpu_custom_call.1} parent=11 // pred_check
          %p443 = pneg %p342
        $region66: #{tpu_custom_call.1} parent=11 // pred_check_branch
          %445 = sbr.rel (%p443) target = $region68
        $region67: #{tpu_custom_call.1} parent=11 // pred_region
          _
        $region68: #{tpu_custom_call.1} parent=11 // pred_fallthru
          _
        // Predicated region
        $region69: #{tpu_custom_call.1} parent=11 // pred_check
          %p446 = pneg %p363
        $region70: #{tpu_custom_call.1} parent=11 // pred_check_branch
          %448 = sbr.rel (%p446) target = $region72
        $region71: #{tpu_custom_call.1} parent=11 // pred_region
          _
        $region72: #{tpu_custom_call.1} parent=11 // pred_fallthru
          _
      $region12: #{tpu_custom_call.1} parent=5 // pred_fallthru
        _
      %p449 = scmp.lt.s32.totalorder %s22, 2
      // Predicated region
      $region73: #{tpu_custom_call.1} parent=5 // pred_check
        %p450 = pneg %p449
      $region74: #{tpu_custom_call.1} parent=5 // pred_check_branch
        %452 = sbr.rel (%p450) target = $region76
      $region75: #{tpu_custom_call.1} parent=5 // pred_region
        // Predicated region
        $region77: #{tpu_custom_call.1} parent=75 // pred_check
          %p453 = pneg %p42
        $region78: #{tpu_custom_call.1} parent=75 // pred_check_branch
          %455 = sbr.rel (%p453) target = $region80
        $region79: #{tpu_custom_call.1} parent=75 // pred_region
          %s456 = smul.u32 64, %s22
          %s457 = ssub.s32 125, %s456
          %p458 = scmp.lt.s32.totalorder %s457, 64
          %s459 = scalar_select %p458, %s457, 64
          %s460 = smul.u32 128, %s459
          %p461 = scmp.lt.s32.totalorder %s456, 124
          %s462 = scalar_select %p461, %s456, 124
          %s463 = smul.addr %s462, 8
          %s464 = scalar_lea.vmem %s0, %s463
          %s465 = smul.u32 64, %s22
          %s466 = ssub.s32 125, %s465
          %p467 = scmp.lt.s32.totalorder %s466, 64
          %s468 = scalar_select %p467, %s466, 64
          %s469 = smul.u32 128, %s468
        $region80: #{tpu_custom_call.1} parent=75 // pred_fallthru
          _
      $region76: #{tpu_custom_call.1} parent=5 // pred_fallthru
        _
      %p470 = scmp.le.s32.totalorder 1, %s22
      %p471 = scmp.lt.s32.totalorder %s22, 3
      %p472 = pnand %p470, %p471
      %p473 = pneg %p472
      // Predicated region
      $region81: #{tpu_custom_call.1} parent=5 // pred_check
        _
      $region82: #{tpu_custom_call.1} parent=5 // pred_check_branch
        %475 = sbr.rel (%p472) target = $region84
      $region83: #{tpu_custom_call.1} parent=5 // pred_region
        %s476 = ssub.s32 %s22, 1
        %s477 = smul.u32 64, %s27
        %s478 = ssub.s32 125, %s477
        %p479 = scmp.lt.s32.totalorder %s478, 64
        %s480 = scalar_select %p479, %s478, 64
        %s481 = smul.u32 128, %s480
        %p482 = scmp.lt.s32.totalorder %s477, 124
        %s483 = scalar_select %p482, %s477, 124
        %s484 = smul.addr %s483, 8
        %s485 = scalar_lea.vmem %s0, %s484
        %p486 = pneg %p48
        %p487 = pneg %p45
        %p488 = pneg %p69
        %p489 = pneg %p66
        %p490 = pneg %p90
        %p491 = pneg %p87
        %p492 = pneg %p111
        %p493 = pneg %p108
        %p494 = pneg %p132
        %p495 = pneg %p129
        %p496 = pneg %p153
        %p497 = pneg %p150
        %p498 = pneg %p174
        %p499 = pneg %p171
        %p500 = pneg %p195
        %p501 = pneg %p192
        %p502 = pneg %p216
        %p503 = pneg %p213
        %p504 = pneg %p237
        %p505 = pneg %p234
        %p506 = pneg %p258
        %p507 = pneg %p255
        %p508 = pneg %p279
        %p509 = pneg %p276
        %p510 = pneg %p300
        %p511 = pneg %p297
        %p512 = pneg %p321
        %p513 = pneg %p318
        %p514 = pneg %p342
        %p515 = pneg %p339
        %p516 = pneg %p363
        %p517 = pneg %p360
        %p518 = pneg %p389
        %p519 = pneg %p386
        %s520 = sand.u32 %s376, 1
        %s521 = sand.u32 %s376, 1
        %s522 = smul.addr %s521, 512
        %s523 = scalar_lea.vmem [#allocation2], %s522
        %s524 = smul.u32 64, %s27
        %s525 = ssub.s32 125, %s524
        %p526 = scmp.lt.s32.totalorder %s525, 64
        %s527 = scalar_select %p526, %s525, 64
        %s528 = smul.u32 128, %s527
        %p529 = scmp.lt.s32.totalorder %s524, 124
        %s530 = scalar_select %p529, %s524, 124
        %s531 = smul.addr %s530, 8
        %s532 = scalar_lea.vmem %s0, %s531
        %s533 = smul.u32 64, %s27
        %s534 = ssub.s32 125, %s533
        %p535 = scmp.lt.s32.totalorder %s534, 64
        %s536 = scalar_select %p535, %s534, 64
        %s537 = smul.u32 128, %s536
        %s538 = smul.u32 64, %s27
        %s539 = ssub.s32 125, %s538
        %p540 = scmp.lt.s32.totalorder %s539, 64
        %s541 = scalar_select %p540, %s539, 64
        %s542 = smul.u32 128, %s541
        %v544 = vld [vmem:[%s532] sm:$0xff]
        %v545 = vld [vmem:[%s532 + $0x8] sm:$0xff]
        %v546 = vld [vmem:[%s532 + $0x10] sm:$0xff]
        %v547 = vld [vmem:[%s532 + $0x18] sm:$0xff]
        %v548 = vld [vmem:[%s532 + $0x20] sm:$0xff]
        %v549 = vld [vmem:[%s532 + $0x28] sm:$0xff]
        %v550 = vld [vmem:[%s532 + $0x30] sm:$0xff]
        %v551 = vld [vmem:[%s532 + $0x38] sm:$0xff]
        %v552 = vld [vmem:[%s532 + $0x40] sm:$0xff]
        %v553 = vld [vmem:[%s532 + $0x48] sm:$0xff]
        %v554 = vld [vmem:[%s532 + $0x50] sm:$0xff]
        %v555 = vld [vmem:[%s532 + $0x58] sm:$0xff]
        %v556 = vld [vmem:[%s532 + $0x60] sm:$0xff]
        %v557 = vld [vmem:[%s532 + $0x68] sm:$0xff]
        %v558 = vld [vmem:[%s532 + $0x70] sm:$0xff]
        %v559 = vld [vmem:[%s532 + $0x78] sm:$0xff]
        %v560 = vld [vmem:[%s532 + $0x80] sm:$0xff]
        %v561 = vld [vmem:[%s532 + $0x88] sm:$0xff]
        %v562 = vld [vmem:[%s532 + $0x90] sm:$0xff]
        %v563 = vld [vmem:[%s532 + $0x98] sm:$0xff]
        %v564 = vld [vmem:[%s532 + $0xa0] sm:$0xff]
        %v565 = vld [vmem:[%s532 + $0xa8] sm:$0xff]
        %v566 = vld [vmem:[%s532 + $0xb0] sm:$0xff]
        %v567 = vld [vmem:[%s532 + $0xb8] sm:$0xff]
        %v568 = vld [vmem:[%s532 + $0xc0] sm:$0xff]
        %v569 = vld [vmem:[%s532 + $0xc8] sm:$0xff]
        %v570 = vld [vmem:[%s532 + $0xd0] sm:$0xff]
        %v571 = vld [vmem:[%s532 + $0xd8] sm:$0xff]
        %v572 = vld [vmem:[%s532 + $0xe0] sm:$0xff]
        %v573 = vld [vmem:[%s532 + $0xe8] sm:$0xff]
        %v574 = vld [vmem:[%s532 + $0xf0] sm:$0xff]
        %v575 = vld [vmem:[%s532 + $0xf8] sm:$0xff]
        %v576 = vld [vmem:[%s532 + $0x100] sm:$0xff]
        %v577 = vld [vmem:[%s532 + $0x108] sm:$0xff]
        %v578 = vld [vmem:[%s532 + $0x110] sm:$0xff]
        %v579 = vld [vmem:[%s532 + $0x118] sm:$0xff]
        %v580 = vld [vmem:[%s532 + $0x120] sm:$0xff]
        %v581 = vld [vmem:[%s532 + $0x128] sm:$0xff]
        %v582 = vld [vmem:[%s532 + $0x130] sm:$0xff]
        %v583 = vld [vmem:[%s532 + $0x138] sm:$0xff]
        %v584 = vld [vmem:[%s532 + $0x140] sm:$0xff]
        %v585 = vld [vmem:[%s532 + $0x148] sm:$0xff]
        %v586 = vld [vmem:[%s532 + $0x150] sm:$0xff]
        %v587 = vld [vmem:[%s532 + $0x158] sm:$0xff]
        %v588 = vld [vmem:[%s532 + $0x160] sm:$0xff]
        %v589 = vld [vmem:[%s532 + $0x168] sm:$0xff]
        %v590 = vld [vmem:[%s532 + $0x170] sm:$0xff]
        %v591 = vld [vmem:[%s532 + $0x178] sm:$0xff]
        %v592 = vld [vmem:[%s532 + $0x180] sm:$0xff]
        %v593 = vld [vmem:[%s532 + $0x188] sm:$0xff]
        %v594 = vld [vmem:[%s532 + $0x190] sm:$0xff]
        %v595 = vld [vmem:[%s532 + $0x198] sm:$0xff]
        %v596 = vld [vmem:[%s532 + $0x1a0] sm:$0xff]
        %v597 = vld [vmem:[%s532 + $0x1a8] sm:$0xff]
        %v598 = vld [vmem:[%s532 + $0x1b0] sm:$0xff]
        %v599 = vld [vmem:[%s532 + $0x1b8] sm:$0xff]
        %v600 = vld [vmem:[%s532 + $0x1c0] sm:$0xff]
        %v601 = vld [vmem:[%s532 + $0x1c8] sm:$0xff]
        %v602 = vld [vmem:[%s532 + $0x1d0] sm:$0xff]
        %v603 = vld [vmem:[%s532 + $0x1d8] sm:$0xff]
        %v604 = vld [vmem:[%s532 + $0x1e0] sm:$0xff]
        %v605 = vld [vmem:[%s532 + $0x1e8] sm:$0xff]
        %v606 = vld [vmem:[%s532 + $0x1f0] sm:$0xff]
        %v607 = vld [vmem:[%s532 + $0x1f8] sm:$0xff]
        %v608 = vpack.c.bf16 %v545, %v544
        %v609 = vpack.c.bf16 %v547, %v546
        %v610 = vpack.c.bf16 %v549, %v548
        %v611 = vpack.c.bf16 %v551, %v550
        %v612 = vpack.c.bf16 %v553, %v552
        %v613 = vpack.c.bf16 %v555, %v554
        %v614 = vpack.c.bf16 %v557, %v556
        %v615 = vpack.c.bf16 %v559, %v558
        %v616 = vpack.c.bf16 %v561, %v560
        %v617 = vpack.c.bf16 %v563, %v562
        %v618 = vpack.c.bf16 %v565, %v564
        %v619 = vpack.c.bf16 %v567, %v566
        %v620 = vpack.c.bf16 %v569, %v568
        %v621 = vpack.c.bf16 %v571, %v570
        %v622 = vpack.c.bf16 %v573, %v572
        %v623 = vpack.c.bf16 %v575, %v574
        %v624 = vpack.c.bf16 %v577, %v576
        %v625 = vpack.c.bf16 %v579, %v578
        %v626 = vpack.c.bf16 %v581, %v580
        %v627 = vpack.c.bf16 %v583, %v582
        %v628 = vpack.c.bf16 %v585, %v584
        %v629 = vpack.c.bf16 %v587, %v586
        %v630 = vpack.c.bf16 %v589, %v588
        %v631 = vpack.c.bf16 %v591, %v590
        %v632 = vpack.c.bf16 %v593, %v592
        %v633 = vpack.c.bf16 %v595, %v594
        %v634 = vpack.c.bf16 %v597, %v596
        %v635 = vpack.c.bf16 %v599, %v598
        %v636 = vpack.c.bf16 %v601, %v600
        %v637 = vpack.c.bf16 %v603, %v602
        %v638 = vpack.c.bf16 %v605, %v604
        %v639 = vpack.c.bf16 %v607, %v606
        %v640 = vld [vmem:[%s1] sm:$0xf]
        %v641 = vld [vmem:[%s1 + $0x4] sm:$0xf]
        %v642 = vld [vmem:[%s1 + $0x8] sm:$0xf]
        %v643 = vld [vmem:[%s1 + $0xc] sm:$0xf]
        %v644 = vld [vmem:[%s1 + $0x10] sm:$0x3]
        %v645 = vld [vmem:[%s2] sm:$0x1]
        %v647 = vlaneseq
        %v648 = vshrl.u32 %v647, 7
        %v649 = vsub.s32 0, %v648
        %v650 = vrot.slane %v645, %v649
        %v657 = vunpack.c.l.b16 %v640
        %v658 = vunpack.c.l.b16 %v641
        %v659 = vunpack.c.l.b16 %v642
        %v660 = vunpack.c.l.b16 %v643
        %v661 = vunpack.c.l.b16 %v644
        %v662 = vpack.c.b16 %v658, %v657
        %v663 = vpack.c.b16 %v660, %v659
        %v664 = vpack.c.b16 %v661, %v661
        %vm667 = vcmask 293888
        %v669 = vsel %vm667, %v608, 0
        %v672 = vsel %vm667, %v609, 0
        %v675 = vsel %vm667, %v610, 0
        %v678 = vsel %vm667, %v611, 0
        %v681 = vsel %vm667, %v612, 0
        %v684 = vsel %vm667, %v613, 0
        %v687 = vsel %vm667, %v614, 0
        %v690 = vsel %vm667, %v615, 0
        %v693 = vsel %vm667, %v616, 0
        %v696 = vsel %vm667, %v617, 0
        %v699 = vsel %vm667, %v618, 0
        %v702 = vsel %vm667, %v619, 0
        %v705 = vsel %vm667, %v620, 0
        %v708 = vsel %vm667, %v621, 0
        %v711 = vsel %vm667, %v622, 0
        %v714 = vsel %vm667, %v623, 0
        %v717 = vsel %vm667, %v624, 0
        %v720 = vsel %vm667, %v625, 0
        %v723 = vsel %vm667, %v626, 0
        %v726 = vsel %vm667, %v627, 0
        %v729 = vsel %vm667, %v628, 0
        %v732 = vsel %vm667, %v629, 0
        %v735 = vsel %vm667, %v630, 0
        %v738 = vsel %vm667, %v631, 0
        %v741 = vsel %vm667, %v632, 0
        %v744 = vsel %vm667, %v633, 0
        %v747 = vsel %vm667, %v634, 0
        %v750 = vsel %vm667, %v635, 0
        %v753 = vsel %vm667, %v636, 0
        %v756 = vsel %vm667, %v637, 0
        %v759 = vsel %vm667, %v638, 0
        %v762 = vsel %vm667, %v639, 0
        %vm764 = vcmask 1041408
        %v766 = vsel %vm764, %v664, 0
        %768 = vmatprep.subr.bf16.mxu0 0
        %769 = vmatpush1.bf16.msra.mxu0 %v662
        %770 = vmatprep.subr.bf16.mxu0 0
        %771 = vmatpush1.bf16.msra.mxu0 %v663
        %772 = vmatprep.subr.bf16.mxu0 0
        %773 = vmatpush1.bf16.msra.mxu0 %v766
        %774 = vmatprep.subr.bf16.mxu0 0
        %775 = vmatpush1.bf16.msra.mxu0 0
        %776 = vmatprep.subr.bf16.mxu0 0
        %777 = vmatpush1.bf16.msra.mxu0 0
        %778 = vmatprep.subr.bf16.mxu0 0
        %779 = vmatpush1.bf16.msra.mxu0 0
        %780 = vmatprep.subr.bf16.mxu0 0
        %781 = vmatpush1.bf16.msra.mxu0 0
        %782 = vmatprep.subr.bf16.mxu0 0
        %783 = vmatpush1.bf16.msra.mxu0 0
        %784 = vmatprep.subr.bf16.mxu0 0
        %785 = vmatpush1.bf16.msra.mxu0 0
        %786 = vmatprep.subr.bf16.mxu0 0
        %787 = vmatpush1.bf16.msra.mxu0 0
        %788 = vmatprep.subr.bf16.mxu0 0
        %789 = vmatpush1.bf16.msra.mxu0 0
        %790 = vmatprep.subr.bf16.mxu0 0
        %791 = vmatpush1.bf16.msra.mxu0 0
        %792 = vmatprep.subr.bf16.mxu0 0
        %793 = vmatpush1.bf16.msra.mxu0 0
        %794 = vmatprep.subr.bf16.mxu0 0
        %795 = vmatpush1.bf16.msra.mxu0 0
        %796 = vmatprep.subr.bf16.mxu0 0
        %797 = vmatpush1.bf16.msra.mxu0 0
        %798 = vmatprep.subr.bf16.mxu0 0
        %799 = vmatpush1.bf16.msra.mxu0 0
        %800 = vmatprep.mubr.bf16.mxu0 0
        %801 = vmatmul.mubr.bf16.gmra.mrb[0].mxu0 %v669
        %v802 = vpop.f32.mrb[0].mxu0
        %v803 = vadd.f32 %v650, %v802
        %v804 = vpop.f32.mrb[0].mxu0
        %v805 = vpop.f32.mrb[0].mxu0
        %v806 = vadd.f32 %v650, %v805
        %v807 = vpop.f32.mrb[0].mxu0
        %808 = vmatprep.mubr.bf16.mxu0 0
        %809 = vmatmul.mubr.bf16.gmra.mrb[0].mxu0 %v672
        %v810 = vpop.f32.mrb[0].mxu0
        %v811 = vadd.f32 %v650, %v810
        %v812 = vpop.f32.mrb[0].mxu0
        %v813 = vpop.f32.mrb[0].mxu0
        %v814 = vadd.f32 %v650, %v813
        %v815 = vpop.f32.mrb[0].mxu0
        %816 = vmatprep.mubr.bf16.mxu0 0
        %817 = vmatmul.mubr.bf16.gmra.mrb[0].mxu0 %v675
        %v818 = vpop.f32.mrb[0].mxu0
        %v819 = vadd.f32 %v650, %v818
        %v820 = vpop.f32.mrb[0].mxu0
        %v821 = vpop.f32.mrb[0].mxu0
        %v822 = vadd.f32 %v650, %v821
        %v823 = vpop.f32.mrb[0].mxu0
        %824 = vmatprep.mubr.bf16.mxu0 0
        %825 = vmatmul.mubr.bf16.gmra.mrb[0].mxu0 %v678
        %v826 = vpop.f32.mrb[0].mxu0
        %v827 = vadd.f32 %v650, %v826
        %v828 = vpop.f32.mrb[0].mxu0
        %v829 = vpop.f32.mrb[0].mxu0
        %v830 = vadd.f32 %v650, %v829
        %v831 = vpop.f32.mrb[0].mxu0
        %832 = vmatprep.mubr.bf16.mxu0 0
        %833 = vmatmul.mubr.bf16.gmra.mrb[0].mxu0 %v681
        %v834 = vpop.f32.mrb[0].mxu0
        %v835 = vadd.f32 %v650, %v834
        %v836 = vpop.f32.mrb[0].mxu0
        %v837 = vpop.f32.mrb[0].mxu0
        %v838 = vadd.f32 %v650, %v837
        %v839 = vpop.f32.mrb[0].mxu0
        %840 = vmatprep.mubr.bf16.mxu0 0
        %841 = vmatmul.mubr.bf16.gmra.mrb[0].mxu0 %v684
        %v842 = vpop.f32.mrb[0].mxu0
        %v843 = vadd.f32 %v650, %v842
        %v844 = vpop.f32.mrb[0].mxu0
        %v845 = vpop.f32.mrb[0].mxu0
        %v846 = vadd.f32 %v650, %v845
        %v847 = vpop.f32.mrb[0].mxu0
        %848 = vmatprep.mubr.bf16.mxu0 0
        %849 = vmatmul.mubr.bf16.gmra.mrb[0].mxu0 %v687
        %v850 = vpop.f32.mrb[0].mxu0
        %v851 = vadd.f32 %v650, %v850
        %v852 = vpop.f32.mrb[0].mxu0
        %v853 = vpop.f32.mrb[0].mxu0
        %v854 = vadd.f32 %v650, %v853
        %v855 = vpop.f32.mrb[0].mxu0
        %856 = vmatprep.mubr.bf16.mxu0 0
        %857 = vmatmul.mubr.bf16.gmra.mrb[0].mxu0 %v690
        %v858 = vpop.f32.mrb[0].mxu0
        %v859 = vadd.f32 %v650, %v858
        %v860 = vpop.f32.mrb[0].mxu0
        %v861 = vpop.f32.mrb[0].mxu0
        %v862 = vadd.f32 %v650, %v861
        %v863 = vpop.f32.mrb[0].mxu0
        %864 = vmatprep.mubr.bf16.mxu0 0
        %865 = vmatmul.mubr.bf16.gmra.mrb[0].mxu0 %v693
        %v866 = vpop.f32.mrb[0].mxu0
        %v867 = vadd.f32 %v650, %v866
        %v868 = vpop.f32.mrb[0].mxu0
        %v869 = vpop.f32.mrb[0].mxu0
        %v870 = vadd.f32 %v650, %v869
        %v871 = vpop.f32.mrb[0].mxu0
        %872 = vmatprep.mubr.bf16.mxu0 0
        %873 = vmatmul.mubr.bf16.gmra.mrb[0].mxu0 %v696
        %v874 = vpop.f32.mrb[0].mxu0
        %v875 = vadd.f32 %v650, %v874
        %v876 = vpop.f32.mrb[0].mxu0
        %v877 = vpop.f32.mrb[0].mxu0
        %v878 = vadd.f32 %v650, %v877
        %v879 = vpop.f32.mrb[0].mxu0
        %880 = vmatprep.mubr.bf16.mxu0 0
        %881 = vmatmul.mubr.bf16.gmra.mrb[0].mxu0 %v699
        %v882 = vpop.f32.mrb[0].mxu0
        %v883 = vadd.f32 %v650, %v882
        %v884 = vpop.f32.mrb[0].mxu0
        %v885 = vpop.f32.mrb[0].mxu0
        %v886 = vadd.f32 %v650, %v885
        %v887 = vpop.f32.mrb[0].mxu0
        %888 = vmatprep.mubr.bf16.mxu0 0
        %889 = vmatmul.mubr.bf16.gmra.mrb[0].mxu0 %v702
        %v890 = vpop.f32.mrb[0].mxu0
        %v891 = vadd.f32 %v650, %v890
        %v892 = vpop.f32.mrb[0].mxu0
        %v893 = vpop.f32.mrb[0].mxu0
        %v894 = vadd.f32 %v650, %v893
        %v895 = vpop.f32.mrb[0].mxu0
        %896 = vmatprep.mubr.bf16.mxu0 0
        %897 = vmatmul.mubr.bf16.gmra.mrb[0].mxu0 %v705
        %v898 = vpop.f32.mrb[0].mxu0
        %v899 = vadd.f32 %v650, %v898
        %v900 = vpop.f32.mrb[0].mxu0
        %v901 = vpop.f32.mrb[0].mxu0
        %v902 = vadd.f32 %v650, %v901
        %v903 = vpop.f32.mrb[0].mxu0
        %904 = vmatprep.mubr.bf16.mxu0 0
        %905 = vmatmul.mubr.bf16.gmra.mrb[0].mxu0 %v708
        %v906 = vpop.f32.mrb[0].mxu0
        %v907 = vadd.f32 %v650, %v906
        %v908 = vpop.f32.mrb[0].mxu0
        %v909 = vpop.f32.mrb[0].mxu0
        %v910 = vadd.f32 %v650, %v909
        %v911 = vpop.f32.mrb[0].mxu0
        %912 = vmatprep.mubr.bf16.mxu0 0
        %913 = vmatmul.mubr.bf16.gmra.mrb[0].mxu0 %v711
        %v914 = vpop.f32.mrb[0].mxu0
        %v915 = vadd.f32 %v650, %v914
        %v916 = vpop.f32.mrb[0].mxu0
        %v917 = vpop.f32.mrb[0].mxu0
        %v918 = vadd.f32 %v650, %v917
        %v919 = vpop.f32.mrb[0].mxu0
        %920 = vmatprep.mubr.bf16.mxu0 0
        %921 = vmatmul.mubr.bf16.gmra.mrb[0].mxu0 %v714
        %v922 = vpop.f32.mrb[0].mxu0
        %v923 = vadd.f32 %v650, %v922
        %v924 = vpop.f32.mrb[0].mxu0
        %v925 = vpop.f32.mrb[0].mxu0
        %v926 = vadd.f32 %v650, %v925
        %v927 = vpop.f32.mrb[0].mxu0
        %928 = vmatprep.mubr.bf16.mxu0 0
        %929 = vmatmul.mubr.bf16.gmra.mrb[0].mxu0 %v717
        %v930 = vpop.f32.mrb[0].mxu0
        %v931 = vadd.f32 %v650, %v930
        %v932 = vpop.f32.mrb[0].mxu0
        %v933 = vpop.f32.mrb[0].mxu0
        %v934 = vadd.f32 %v650, %v933
        %v935 = vpop.f32.mrb[0].mxu0
        %936 = vmatprep.mubr.bf16.mxu0 0
        %937 = vmatmul.mubr.bf16.gmra.mrb[0].mxu0 %v720
        %v938 = vpop.f32.mrb[0].mxu0
        %v939 = vadd.f32 %v650, %v938
        %v940 = vpop.f32.mrb[0].mxu0
        %v941 = vpop.f32.mrb[0].mxu0
        %v942 = vadd.f32 %v650, %v941
        %v943 = vpop.f32.mrb[0].mxu0
        %944 = vmatprep.mubr.bf16.mxu0 0
        %945 = vmatmul.mubr.bf16.gmra.mrb[0].mxu0 %v723
        %v946 = vpop.f32.mrb[0].mxu0
        %v947 = vadd.f32 %v650, %v946
        %v948 = vpop.f32.mrb[0].mxu0
        %v949 = vpop.f32.mrb[0].mxu0
        %v950 = vadd.f32 %v650, %v949
        %v951 = vpop.f32.mrb[0].mxu0
        %952 = vmatprep.mubr.bf16.mxu0 0
        %953 = vmatmul.mubr.bf16.gmra.mrb[0].mxu0 %v726
        %v954 = vpop.f32.mrb[0].mxu0
        %v955 = vadd.f32 %v650, %v954
        %v956 = vpop.f32.mrb[0].mxu0
        %v957 = vpop.f32.mrb[0].mxu0
        %v958 = vadd.f32 %v650, %v957
        %v959 = vpop.f32.mrb[0].mxu0
        %960 = vmatprep.mubr.bf16.mxu0 0
        %961 = vmatmul.mubr.bf16.gmra.mrb[0].mxu0 %v729
        %v962 = vpop.f32.mrb[0].mxu0
        %v963 = vadd.f32 %v650, %v962
        %v964 = vpop.f32.mrb[0].mxu0
        %v965 = vpop.f32.mrb[0].mxu0
        %v966 = vadd.f32 %v650, %v965
        %v967 = vpop.f32.mrb[0].mxu0
        %968 = vmatprep.mubr.bf16.mxu0 0
        %969 = vmatmul.mubr.bf16.gmra.mrb[0].mxu0 %v732
        %v970 = vpop.f32.mrb[0].mxu0
        %v971 = vadd.f32 %v650, %v970
        %v972 = vpop.f32.mrb[0].mxu0
        %v973 = vpop.f32.mrb[0].mxu0
        %v974 = vadd.f32 %v650, %v973
        %v975 = vpop.f32.mrb[0].mxu0
        %976 = vmatprep.mubr.bf16.mxu0 0
        %977 = vmatmul.mubr.bf16.gmra.mrb[0].mxu0 %v735
        %v978 = vpop.f32.mrb[0].mxu0
        %v979 = vadd.f32 %v650, %v978
        %v980 = vpop.f32.mrb[0].mxu0
        %v981 = vpop.f32.mrb[0].mxu0
        %v982 = vadd.f32 %v650, %v981
        %v983 = vpop.f32.mrb[0].mxu0
        %984 = vmatprep.mubr.bf16.mxu0 0
        %985 = vmatmul.mubr.bf16.gmra.mrb[0].mxu0 %v738
        %v986 = vpop.f32.mrb[0].mxu0
        %v987 = vadd.f32 %v650, %v986
        %v988 = vpop.f32.mrb[0].mxu0
        %v989 = vpop.f32.mrb[0].mxu0
        %v990 = vadd.f32 %v650, %v989
        %v991 = vpop.f32.mrb[0].mxu0
        %992 = vmatprep.mubr.bf16.mxu0 0
        %993 = vmatmul.mubr.bf16.gmra.mrb[0].mxu0 %v741
        %v994 = vpop.f32.mrb[0].mxu0
        %v995 = vadd.f32 %v650, %v994
        %v996 = vpop.f32.mrb[0].mxu0
        %v997 = vpop.f32.mrb[0].mxu0
        %v998 = vadd.f32 %v650, %v997
        %v999 = vpop.f32.mrb[0].mxu0
        %1000 = vmatprep.mubr.bf16.mxu0 0
        %1001 = vmatmul.mubr.bf16.gmra.mrb[0].mxu0 %v744
        %v1002 = vpop.f32.mrb[0].mxu0
        %v1003 = vadd.f32 %v650, %v1002
        %v1004 = vpop.f32.mrb[0].mxu0
        %v1005 = vpop.f32.mrb[0].mxu0
        %v1006 = vadd.f32 %v650, %v1005
        %v1007 = vpop.f32.mrb[0].mxu0
        %1008 = vmatprep.mubr.bf16.mxu0 0
        %1009 = vmatmul.mubr.bf16.gmra.mrb[0].mxu0 %v747
        %v1010 = vpop.f32.mrb[0].mxu0
        %v1011 = vadd.f32 %v650, %v1010
        %v1012 = vpop.f32.mrb[0].mxu0
        %v1013 = vpop.f32.mrb[0].mxu0
        %v1014 = vadd.f32 %v650, %v1013
        %v1015 = vpop.f32.mrb[0].mxu0
        %1016 = vmatprep.mubr.bf16.mxu0 0
        %1017 = vmatmul.mubr.bf16.gmra.mrb[0].mxu0 %v750
        %v1018 = vpop.f32.mrb[0].mxu0
        %v1019 = vadd.f32 %v650, %v1018
        %v1020 = vpop.f32.mrb[0].mxu0
        %v1021 = vpop.f32.mrb[0].mxu0
        %v1022 = vadd.f32 %v650, %v1021
        %v1023 = vpop.f32.mrb[0].mxu0
        %1024 = vmatprep.mubr.bf16.mxu0 0
        %1025 = vmatmul.mubr.bf16.gmra.mrb[0].mxu0 %v753
        %v1026 = vpop.f32.mrb[0].mxu0
        %v1027 = vadd.f32 %v650, %v1026
        %v1028 = vpop.f32.mrb[0].mxu0
        %v1029 = vpop.f32.mrb[0].mxu0
        %v1030 = vadd.f32 %v650, %v1029
        %v1031 = vpop.f32.mrb[0].mxu0
        %1032 = vmatprep.mubr.bf16.mxu0 0
        %1033 = vmatmul.mubr.bf16.gmra.mrb[0].mxu0 %v756
        %v1034 = vpop.f32.mrb[0].mxu0
        %v1035 = vadd.f32 %v650, %v1034
        %v1036 = vpop.f32.mrb[0].mxu0
        %v1037 = vpop.f32.mrb[0].mxu0
        %v1038 = vadd.f32 %v650, %v1037
        %v1039 = vpop.f32.mrb[0].mxu0
        %1040 = vmatprep.mubr.bf16.mxu0 0
        %1041 = vmatmul.mubr.bf16.gmra.mrb[0].mxu0 %v759
        %v1042 = vpop.f32.mrb[0].mxu0
        %v1043 = vadd.f32 %v650, %v1042
        %v1044 = vpop.f32.mrb[0].mxu0
        %v1045 = vpop.f32.mrb[0].mxu0
        %v1046 = vadd.f32 %v650, %v1045
        %v1047 = vpop.f32.mrb[0].mxu0
        %1048 = vmatprep.mubr.bf16.mxu0 0
        %1049 = vmatmul.mubr.bf16.gmra.mrb[0].mxu0 %v762
        %v1050 = vpop.f32.mrb[0].mxu0
        %v1051 = vadd.f32 %v650, %v1050
        %v1052 = vpop.f32.mrb[0].mxu0
        %v1053 = vpop.f32.mrb[0].mxu0
        %v1054 = vadd.f32 %v650, %v1053
        %v1055 = vpop.f32.mrb[0].mxu0
        %1056 = vdwg.mxu0
        %v1057 = vmax.f32 %v803, 0.0
        %v1058 = vmax.f32 %v806, 0.0
        %v1059 = vmax.f32 %v811, 0.0
        %v1060 = vmax.f32 %v814, 0.0
        %v1061 = vmax.f32 %v819, 0.0
        %v1062 = vmax.f32 %v822, 0.0
        %v1063 = vmax.f32 %v827, 0.0
        %v1064 = vmax.f32 %v830, 0.0
        %v1065 = vmax.f32 %v835, 0.0
        %v1066 = vmax.f32 %v838, 0.0
        %v1067 = vmax.f32 %v843, 0.0
        %v1068 = vmax.f32 %v846, 0.0
        %v1069 = vmax.f32 %v851, 0.0
        %v1070 = vmax.f32 %v854, 0.0
        %v1071 = vmax.f32 %v859, 0.0
        %v1072 = vmax.f32 %v862, 0.0
        %v1073 = vmax.f32 %v867, 0.0
        %v1074 = vmax.f32 %v870, 0.0
        %v1075 = vmax.f32 %v875, 0.0
        %v1076 = vmax.f32 %v878, 0.0
        %v1077 = vmax.f32 %v883, 0.0
        %v1078 = vmax.f32 %v886, 0.0
        %v1079 = vmax.f32 %v891, 0.0
        %v1080 = vmax.f32 %v894, 0.0
        %v1081 = vmax.f32 %v899, 0.0
        %v1082 = vmax.f32 %v902, 0.0
        %v1083 = vmax.f32 %v907, 0.0
        %v1084 = vmax.f32 %v910, 0.0
        %v1085 = vmax.f32 %v915, 0.0
        %v1086 = vmax.f32 %v918, 0.0
        %v1087 = vmax.f32 %v923, 0.0
        %v1088 = vmax.f32 %v926, 0.0
        %v1089 = vmax.f32 %v931, 0.0
        %v1090 = vmax.f32 %v934, 0.0
        %v1091 = vmax.f32 %v939, 0.0
        %v1092 = vmax.f32 %v942, 0.0
        %v1093 = vmax.f32 %v947, 0.0
        %v1094 = vmax.f32 %v950, 0.0
        %v1095 = vmax.f32 %v955, 0.0
        %v1096 = vmax.f32 %v958, 0.0
        %v1097 = vmax.f32 %v963, 0.0
        %v1098 = vmax.f32 %v966, 0.0
        %v1099 = vmax.f32 %v971, 0.0
        %v1100 = vmax.f32 %v974, 0.0
        %v1101 = vmax.f32 %v979, 0.0
        %v1102 = vmax.f32 %v982, 0.0
        %v1103 = vmax.f32 %v987, 0.0
        %v1104 = vmax.f32 %v990, 0.0
        %v1105 = vmax.f32 %v995, 0.0
        %v1106 = vmax.f32 %v998, 0.0
        %v1107 = vmax.f32 %v1003, 0.0
        %v1108 = vmax.f32 %v1006, 0.0
        %v1109 = vmax.f32 %v1011, 0.0
        %v1110 = vmax.f32 %v1014, 0.0
        %v1111 = vmax.f32 %v1019, 0.0
        %v1112 = vmax.f32 %v1022, 0.0
        %v1113 = vmax.f32 %v1027, 0.0
        %v1114 = vmax.f32 %v1030, 0.0
        %v1115 = vmax.f32 %v1035, 0.0
        %v1116 = vmax.f32 %v1038, 0.0
        %v1117 = vmax.f32 %v1043, 0.0
        %v1118 = vmax.f32 %v1046, 0.0
        %v1119 = vmax.f32 %v1051, 0.0
        %v1120 = vmax.f32 %v1054, 0.0
        %v1121 = vpack.c.bf16 %v1058, %v1057
        %v1122 = vpack.c.bf16 %v1060, %v1059
        %v1123 = vpack.c.bf16 %v1062, %v1061
        %v1124 = vpack.c.bf16 %v1064, %v1063
        %v1125 = vpack.c.bf16 %v1066, %v1065
        %v1126 = vpack.c.bf16 %v1068, %v1067
        %v1127 = vpack.c.bf16 %v1070, %v1069
        %v1128 = vpack.c.bf16 %v1072, %v1071
        %v1129 = vpack.c.bf16 %v1074, %v1073
        %v1130 = vpack.c.bf16 %v1076, %v1075
        %v1131 = vpack.c.bf16 %v1078, %v1077
        %v1132 = vpack.c.bf16 %v1080, %v1079
        %v1133 = vpack.c.bf16 %v1082, %v1081
        %v1134 = vpack.c.bf16 %v1084, %v1083
        %v1135 = vpack.c.bf16 %v1086, %v1085
        %v1136 = vpack.c.bf16 %v1088, %v1087
        %v1137 = vpack.c.bf16 %v1090, %v1089
        %v1138 = vpack.c.bf16 %v1092, %v1091
        %v1139 = vpack.c.bf16 %v1094, %v1093
        %v1140 = vpack.c.bf16 %v1096, %v1095
        %v1141 = vpack.c.bf16 %v1098, %v1097
        %v1142 = vpack.c.bf16 %v1100, %v1099
        %v1143 = vpack.c.bf16 %v1102, %v1101
        %v1144 = vpack.c.bf16 %v1104, %v1103
        %v1145 = vpack.c.bf16 %v1106, %v1105
        %v1146 = vpack.c.bf16 %v1108, %v1107
        %v1147 = vpack.c.bf16 %v1110, %v1109
        %v1148 = vpack.c.bf16 %v1112, %v1111
        %v1149 = vpack.c.bf16 %v1114, %v1113
        %v1150 = vpack.c.bf16 %v1116, %v1115
        %v1151 = vpack.c.bf16 %v1118, %v1117
        %v1152 = vpack.c.bf16 %v1120, %v1119
        %v1153 = vld [vmem:[%s3] sm:$0xf]
        %v1154 = vld [vmem:[%s3 + $0x4] sm:$0xf]
        %v1155 = vld [vmem:[%s3 + $0x8] sm:$0xf]
        %v1156 = vld [vmem:[%s3 + $0xc] sm:$0xf]
        %v1157 = vld [vmem:[%s3 + $0x10] sm:$0xf]
        %v1158 = vld [vmem:[%s3 + $0x14] sm:$0xf]
        %v1159 = vld [vmem:[%s3 + $0x18] sm:$0xf]
        %v1160 = vld [vmem:[%s3 + $0x1c] sm:$0xf]
        %v1161 = vld [vmem:[%s3 + $0x20] sm:$0xf]
        %v1162 = vld [vmem:[%s3 + $0x24] sm:$0xf]
        %v1163 = vld [vmem:[%s3 + $0x28] sm:$0xf]
        %v1164 = vld [vmem:[%s3 + $0x2c] sm:$0xf]
        %v1165 = vld [vmem:[%s3 + $0x30] sm:$0xf]
        %v1166 = vld [vmem:[%s3 + $0x34] sm:$0xf]
        %v1167 = vld [vmem:[%s3 + $0x38] sm:$0xf]
        %v1168 = vld [vmem:[%s3 + $0x3c] sm:$0xf]
        %v1169 = vld [vmem:[%s4] sm:$0x1]
        %v1171 = vlaneseq
        %v1172 = vshrl.u32 %v1171, 7
        %v1173 = vsub.s32 0, %v1172
        %v1174 = vrot.slane %v1169, %v1173
        %v1192 = vunpack.c.l.b16 %v1153
        %v1193 = vunpack.c.l.b16 %v1154
        %v1194 = vunpack.c.l.b16 %v1155
        %v1195 = vunpack.c.l.b16 %v1156
        %v1196 = vunpack.c.l.b16 %v1157
        %v1197 = vunpack.c.l.b16 %v1158
        %v1198 = vunpack.c.l.b16 %v1159
        %v1199 = vunpack.c.l.b16 %v1160
        %v1200 = vunpack.c.l.b16 %v1161
        %v1201 = vunpack.c.l.b16 %v1162
        %v1202 = vunpack.c.l.b16 %v1163
        %v1203 = vunpack.c.l.b16 %v1164
        %v1204 = vunpack.c.l.b16 %v1165
        %v1205 = vunpack.c.l.b16 %v1166
        %v1206 = vunpack.c.l.b16 %v1167
        %v1207 = vunpack.c.l.b16 %v1168
        %v1208 = vpack.c.b16 %v1193, %v1192
        %v1209 = vpack.c.b16 %v1195, %v1194
        %v1210 = vpack.c.b16 %v1197, %v1196
        %v1211 = vpack.c.b16 %v1199, %v1198
        %v1212 = vpack.c.b16 %v1201, %v1200
        %v1213 = vpack.c.b16 %v1203, %v1202
        %v1214 = vpack.c.b16 %v1205, %v1204
        %v1215 = vpack.c.b16 %v1207, %v1206
        %1224 = vmatprep.subr.bf16.mxu0 0
        %1225 = vmatpush1.bf16.msra.mxu0 %v1208
        %1226 = vmatprep.subr.bf16.mxu0 0
        %1227 = vmatpush1.bf16.msra.mxu0 %v1209
        %1228 = vmatprep.subr.bf16.mxu0 0
        %1229 = vmatpush1.bf16.msra.mxu0 %v1210
        %1230 = vmatprep.subr.bf16.mxu0 0
        %1231 = vmatpush1.bf16.msra.mxu0 %v1211
        %1232 = vmatprep.subr.bf16.mxu0 0
        %1233 = vmatpush1.bf16.msra.mxu0 %v1212
        %1234 = vmatprep.subr.bf16.mxu0 0
        %1235 = vmatpush1.bf16.msra.mxu0 %v1213
        %1236 = vmatprep.subr.bf16.mxu0 0
        %1237 = vmatpush1.bf16.msra.mxu0 %v1214
        %1238 = vmatprep.subr.bf16.mxu0 0
        %1239 = vmatpush1.bf16.msra.mxu0 %v1215
        %1240 = vmatprep.subr.bf16.mxu0 0
        %1241 = vmatpush1.bf16.msra.mxu0 0
        %1242 = vmatprep.subr.bf16.mxu0 0
        %1243 = vmatpush1.bf16.msra.mxu0 0
        %1244 = vmatprep.subr.bf16.mxu0 0
        %1245 = vmatpush1.bf16.msra.mxu0 0
        %1246 = vmatprep.subr.bf16.mxu0 0
        %1247 = vmatpush1.bf16.msra.mxu0 0
        %1248 = vmatprep.subr.bf16.mxu0 0
        %1249 = vmatpush1.bf16.msra.mxu0 0
        %1250 = vmatprep.subr.bf16.mxu0 0
        %1251 = vmatpush1.bf16.msra.mxu0 0
        %1252 = vmatprep.subr.bf16.mxu0 0
        %1253 = vmatpush1.bf16.msra.mxu0 0
        %1254 = vmatprep.subr.bf16.mxu0 0
        %1255 = vmatpush1.bf16.msra.mxu0 0
        %1256 = vmatprep.mubr.bf16.mxu0 0
        %1257 = vmatmul.mubr.bf16.gmra.mrb[0].mxu0 %v1121
        %v1258 = vpop.f32.mrb[0].mxu0
        %v1259 = vadd.f32 %v1174, %v1258
        %v1260 = vpop.f32.mrb[0].mxu0
        %v1261 = vpop.f32.mrb[0].mxu0
        %v1262 = vadd.f32 %v1174, %v1261
        %v1263 = vpop.f32.mrb[0].mxu0
        %1264 = vmatprep.mubr.bf16.mxu0 0
        %1265 = vmatmul.mubr.bf16.gmra.mrb[0].mxu0 %v1122
        %v1266 = vpop.f32.mrb[0].mxu0
        %v1267 = vadd.f32 %v1174, %v1266
        %v1268 = vpop.f32.mrb[0].mxu0
        %v1269 = vpop.f32.mrb[0].mxu0
        %v1270 = vadd.f32 %v1174, %v1269
        %v1271 = vpop.f32.mrb[0].mxu0
        %1272 = vmatprep.mubr.bf16.mxu0 0
        %1273 = vmatmul.mubr.bf16.gmra.mrb[0].mxu0 %v1123
        %v1274 = vpop.f32.mrb[0].mxu0
        %v1275 = vadd.f32 %v1174, %v1274
        %v1276 = vpop.f32.mrb[0].mxu0
        %v1277 = vpop.f32.mrb[0].mxu0
        %v1278 = vadd.f32 %v1174, %v1277
        %v1279 = vpop.f32.mrb[0].mxu0
        %1280 = vmatprep.mubr.bf16.mxu0 0
        %1281 = vmatmul.mubr.bf16.gmra.mrb[0].mxu0 %v1124
        %v1282 = vpop.f32.mrb[0].mxu0
        %v1283 = vadd.f32 %v1174, %v1282
        %v1284 = vpop.f32.mrb[0].mxu0
        %v1285 = vpop.f32.mrb[0].mxu0
        %v1286 = vadd.f32 %v1174, %v1285
        %v1287 = vpop.f32.mrb[0].mxu0
        %1288 = vmatprep.mubr.bf16.mxu0 0
        %1289 = vmatmul.mubr.bf16.gmra.mrb[0].mxu0 %v1125
        %v1290 = vpop.f32.mrb[0].mxu0
        %v1291 = vadd.f32 %v1174, %v1290
        %v1292 = vpop.f32.mrb[0].mxu0
        %v1293 = vpop.f32.mrb[0].mxu0
        %v1294 = vadd.f32 %v1174, %v1293
        %v1295 = vpop.f32.mrb[0].mxu0
        %1296 = vmatprep.mubr.bf16.mxu0 0
        %1297 = vmatmul.mubr.bf16.gmra.mrb[0].mxu0 %v1126
        %v1298 = vpop.f32.mrb[0].mxu0
        %v1299 = vadd.f32 %v1174, %v1298
        %v1300 = vpop.f32.mrb[0].mxu0
        %v1301 = vpop.f32.mrb[0].mxu0
        %v1302 = vadd.f32 %v1174, %v1301
        %v1303 = vpop.f32.mrb[0].mxu0
        %1304 = vmatprep.mubr.bf16.mxu0 0
        %1305 = vmatmul.mubr.bf16.gmra.mrb[0].mxu0 %v1127
        %v1306 = vpop.f32.mrb[0].mxu0
        %v1307 = vadd.f32 %v1174, %v1306
        %v1308 = vpop.f32.mrb[0].mxu0
        %v1309 = vpop.f32.mrb[0].mxu0
        %v1310 = vadd.f32 %v1174, %v1309
        %v1311 = vpop.f32.mrb[0].mxu0
        %1312 = vmatprep.mubr.bf16.mxu0 0
        %1313 = vmatmul.mubr.bf16.gmra.mrb[0].mxu0 %v1128
        %v1314 = vpop.f32.mrb[0].mxu0
        %v1315 = vadd.f32 %v1174, %v1314
        %v1316 = vpop.f32.mrb[0].mxu0
        %v1317 = vpop.f32.mrb[0].mxu0
        %v1318 = vadd.f32 %v1174, %v1317
        %v1319 = vpop.f32.mrb[0].mxu0
        %1320 = vmatprep.mubr.bf16.mxu0 0
        %1321 = vmatmul.mubr.bf16.gmra.mrb[0].mxu0 %v1129
        %v1322 = vpop.f32.mrb[0].mxu0
        %v1323 = vadd.f32 %v1174, %v1322
        %v1324 = vpop.f32.mrb[0].mxu0
        %v1325 = vpop.f32.mrb[0].mxu0
        %v1326 = vadd.f32 %v1174, %v1325
        %v1327 = vpop.f32.mrb[0].mxu0
        %1328 = vmatprep.mubr.bf16.mxu0 0
        %1329 = vmatmul.mubr.bf16.gmra.mrb[0].mxu0 %v1130
        %v1330 = vpop.f32.mrb[0].mxu0
        %v1331 = vadd.f32 %v1174, %v1330
        %v1332 = vpop.f32.mrb[0].mxu0
        %v1333 = vpop.f32.mrb[0].mxu0
        %v1334 = vadd.f32 %v1174, %v1333
        %v1335 = vpop.f32.mrb[0].mxu0
        %1336 = vmatprep.mubr.bf16.mxu0 0
        %1337 = vmatmul.mubr.bf16.gmra.mrb[0].mxu0 %v1131
        %v1338 = vpop.f32.mrb[0].mxu0
        %v1339 = vadd.f32 %v1174, %v1338
        %v1340 = vpop.f32.mrb[0].mxu0
        %v1341 = vpop.f32.mrb[0].mxu0
        %v1342 = vadd.f32 %v1174, %v1341
        %v1343 = vpop.f32.mrb[0].mxu0
        %1344 = vmatprep.mubr.bf16.mxu0 0
        %1345 = vmatmul.mubr.bf16.gmra.mrb[0].mxu0 %v1132
        %v1346 = vpop.f32.mrb[0].mxu0
        %v1347 = vadd.f32 %v1174, %v1346
        %v1348 = vpop.f32.mrb[0].mxu0
        %v1349 = vpop.f32.mrb[0].mxu0
        %v1350 = vadd.f32 %v1174, %v1349
        %v1351 = vpop.f32.mrb[0].mxu0
        %1352 = vmatprep.mubr.bf16.mxu0 0
        %1353 = vmatmul.mubr.bf16.gmra.mrb[0].mxu0 %v1133
        %v1354 = vpop.f32.mrb[0].mxu0
        %v1355 = vadd.f32 %v1174, %v1354
        %v1356 = vpop.f32.mrb[0].mxu0
        %v1357 = vpop.f32.mrb[0].mxu0
        %v1358 = vadd.f32 %v1174, %v1357
        %v1359 = vpop.f32.mrb[0].mxu0
        %1360 = vmatprep.mubr.bf16.mxu0 0
        %1361 = vmatmul.mubr.bf16.gmra.mrb[0].mxu0 %v1134
        %v1362 = vpop.f32.mrb[0].mxu0
        %v1363 = vadd.f32 %v1174, %v1362
        %v1364 = vpop.f32.mrb[0].mxu0
        %v1365 = vpop.f32.mrb[0].mxu0
        %v1366 = vadd.f32 %v1174, %v1365
        %v1367 = vpop.f32.mrb[0].mxu0
        %1368 = vmatprep.mubr.bf16.mxu0 0
        %1369 = vmatmul.mubr.bf16.gmra.mrb[0].mxu0 %v1135
        %v1370 = vpop.f32.mrb[0].mxu0
        %v1371 = vadd.f32 %v1174, %v1370
        %v1372 = vpop.f32.mrb[0].mxu0
        %v1373 = vpop.f32.mrb[0].mxu0
        %v1374 = vadd.f32 %v1174, %v1373
        %v1375 = vpop.f32.mrb[0].mxu0
        %1376 = vmatprep.mubr.bf16.mxu0 0
        %1377 = vmatmul.mubr.bf16.gmra.mrb[0].mxu0 %v1136
        %v1378 = vpop.f32.mrb[0].mxu0
        %v1379 = vadd.f32 %v1174, %v1378
        %v1380 = vpop.f32.mrb[0].mxu0
        %v1381 = vpop.f32.mrb[0].mxu0
        %v1382 = vadd.f32 %v1174, %v1381
        %v1383 = vpop.f32.mrb[0].mxu0
        %1384 = vmatprep.mubr.bf16.mxu0 0
        %1385 = vmatmul.mubr.bf16.gmra.mrb[0].mxu0 %v1137
        %v1386 = vpop.f32.mrb[0].mxu0
        %v1387 = vadd.f32 %v1174, %v1386
        %v1388 = vpop.f32.mrb[0].mxu0
        %v1389 = vpop.f32.mrb[0].mxu0
        %v1390 = vadd.f32 %v1174, %v1389
        %v1391 = vpop.f32.mrb[0].mxu0
        %1392 = vmatprep.mubr.bf16.mxu0 0
        %1393 = vmatmul.mubr.bf16.gmra.mrb[0].mxu0 %v1138
        %v1394 = vpop.f32.mrb[0].mxu0
        %v1395 = vadd.f32 %v1174, %v1394
        %v1396 = vpop.f32.mrb[0].mxu0
        %v1397 = vpop.f32.mrb[0].mxu0
        %v1398 = vadd.f32 %v1174, %v1397
        %v1399 = vpop.f32.mrb[0].mxu0
        %1400 = vmatprep.mubr.bf16.mxu0 0
        %1401 = vmatmul.mubr.bf16.gmra.mrb[0].mxu0 %v1139
        %v1402 = vpop.f32.mrb[0].mxu0
        %v1403 = vadd.f32 %v1174, %v1402
        %v1404 = vpop.f32.mrb[0].mxu0
        %v1405 = vpop.f32.mrb[0].mxu0
        %v1406 = vadd.f32 %v1174, %v1405
        %v1407 = vpop.f32.mrb[0].mxu0
        %1408 = vmatprep.mubr.bf16.mxu0 0
        %1409 = vmatmul.mubr.bf16.gmra.mrb[0].mxu0 %v1140
        %v1410 = vpop.f32.mrb[0].mxu0
        %v1411 = vadd.f32 %v1174, %v1410
        %v1412 = vpop.f32.mrb[0].mxu0
        %v1413 = vpop.f32.mrb[0].mxu0
        %v1414 = vadd.f32 %v1174, %v1413
        %v1415 = vpop.f32.mrb[0].mxu0
        %1416 = vmatprep.mubr.bf16.mxu0 0
        %1417 = vmatmul.mubr.bf16.gmra.mrb[0].mxu0 %v1141
        %v1418 = vpop.f32.mrb[0].mxu0
        %v1419 = vadd.f32 %v1174, %v1418
        %v1420 = vpop.f32.mrb[0].mxu0
        %v1421 = vpop.f32.mrb[0].mxu0
        %v1422 = vadd.f32 %v1174, %v1421
        %v1423 = vpop.f32.mrb[0].mxu0
        %1424 = vmatprep.mubr.bf16.mxu0 0
        %1425 = vmatmul.mubr.bf16.gmra.mrb[0].mxu0 %v1142
        %v1426 = vpop.f32.mrb[0].mxu0
        %v1427 = vadd.f32 %v1174, %v1426
        %v1428 = vpop.f32.mrb[0].mxu0
        %v1429 = vpop.f32.mrb[0].mxu0
        %v1430 = vadd.f32 %v1174, %v1429
        %v1431 = vpop.f32.mrb[0].mxu0
        %1432 = vmatprep.mubr.bf16.mxu0 0
        %1433 = vmatmul.mubr.bf16.gmra.mrb[0].mxu0 %v1143
        %v1434 = vpop.f32.mrb[0].mxu0
        %v1435 = vadd.f32 %v1174, %v1434
        %v1436 = vpop.f32.mrb[0].mxu0
        %v1437 = vpop.f32.mrb[0].mxu0
        %v1438 = vadd.f32 %v1174, %v1437
        %v1439 = vpop.f32.mrb[0].mxu0
        %1440 = vmatprep.mubr.bf16.mxu0 0
        %1441 = vmatmul.mubr.bf16.gmra.mrb[0].mxu0 %v1144
        %v1442 = vpop.f32.mrb[0].mxu0
        %v1443 = vadd.f32 %v1174, %v1442
        %v1444 = vpop.f32.mrb[0].mxu0
        %v1445 = vpop.f32.mrb[0].mxu0
        %v1446 = vadd.f32 %v1174, %v1445
        %v1447 = vpop.f32.mrb[0].mxu0
        %1448 = vmatprep.mubr.bf16.mxu0 0
        %1449 = vmatmul.mubr.bf16.gmra.mrb[0].mxu0 %v1145
        %v1450 = vpop.f32.mrb[0].mxu0
        %v1451 = vadd.f32 %v1174, %v1450
        %v1452 = vpop.f32.mrb[0].mxu0
        %v1453 = vpop.f32.mrb[0].mxu0
        %v1454 = vadd.f32 %v1174, %v1453
        %v1455 = vpop.f32.mrb[0].mxu0
        %1456 = vmatprep.mubr.bf16.mxu0 0
        %1457 = vmatmul.mubr.bf16.gmra.mrb[0].mxu0 %v1146
        %v1458 = vpop.f32.mrb[0].mxu0
        %v1459 = vadd.f32 %v1174, %v1458
        %v1460 = vpop.f32.mrb[0].mxu0
        %v1461 = vpop.f32.mrb[0].mxu0
        %v1462 = vadd.f32 %v1174, %v1461
        %v1463 = vpop.f32.mrb[0].mxu0
        %1464 = vmatprep.mubr.bf16.mxu0 0
        %1465 = vmatmul.mubr.bf16.gmra.mrb[0].mxu0 %v1147
        %v1466 = vpop.f32.mrb[0].mxu0
        %v1467 = vadd.f32 %v1174, %v1466
        %v1468 = vpop.f32.mrb[0].mxu0
        %v1469 = vpop.f32.mrb[0].mxu0
        %v1470 = vadd.f32 %v1174, %v1469
        %v1471 = vpop.f32.mrb[0].mxu0
        %1472 = vmatprep.mubr.bf16.mxu0 0
        %1473 = vmatmul.mubr.bf16.gmra.mrb[0].mxu0 %v1148
        %v1474 = vpop.f32.mrb[0].mxu0
        %v1475 = vadd.f32 %v1174, %v1474
        %v1476 = vpop.f32.mrb[0].mxu0
        %v1477 = vpop.f32.mrb[0].mxu0
        %v1478 = vadd.f32 %v1174, %v1477
        %v1479 = vpop.f32.mrb[0].mxu0
        %1480 = vmatprep.mubr.bf16.mxu0 0
        %1481 = vmatmul.mubr.bf16.gmra.mrb[0].mxu0 %v1149
        %v1482 = vpop.f32.mrb[0].mxu0
        %v1483 = vadd.f32 %v1174, %v1482
        %v1484 = vpop.f32.mrb[0].mxu0
        %v1485 = vpop.f32.mrb[0].mxu0
        %v1486 = vadd.f32 %v1174, %v1485
        %v1487 = vpop.f32.mrb[0].mxu0
        %1488 = vmatprep.mubr.bf16.mxu0 0
        %1489 = vmatmul.mubr.bf16.gmra.mrb[0].mxu0 %v1150
        %v1490 = vpop.f32.mrb[0].mxu0
        %v1491 = vadd.f32 %v1174, %v1490
        %v1492 = vpop.f32.mrb[0].mxu0
        %v1493 = vpop.f32.mrb[0].mxu0
        %v1494 = vadd.f32 %v1174, %v1493
        %v1495 = vpop.f32.mrb[0].mxu0
        %1496 = vmatprep.mubr.bf16.mxu0 0
        %1497 = vmatmul.mubr.bf16.gmra.mrb[0].mxu0 %v1151
        %v1498 = vpop.f32.mrb[0].mxu0
        %v1499 = vadd.f32 %v1174, %v1498
        %v1500 = vpop.f32.mrb[0].mxu0
        %v1501 = vpop.f32.mrb[0].mxu0
        %v1502 = vadd.f32 %v1174, %v1501
        %v1503 = vpop.f32.mrb[0].mxu0
        %1504 = vmatprep.mubr.bf16.mxu0 0
        %1505 = vmatmul.mubr.bf16.gmra.mrb[0].mxu0 %v1152
        %v1506 = vpop.f32.mrb[0].mxu0
        %v1507 = vadd.f32 %v1174, %v1506
        %v1508 = vpop.f32.mrb[0].mxu0
        %v1509 = vpop.f32.mrb[0].mxu0
        %v1510 = vadd.f32 %v1174, %v1509
        %v1511 = vpop.f32.mrb[0].mxu0
        %1512 = vdwg.mxu0
        %v1513 = vmax.f32 %v1259, 0.0
        %v1514 = vmax.f32 %v1262, 0.0
        %v1515 = vmax.f32 %v1267, 0.0
        %v1516 = vmax.f32 %v1270, 0.0
        %v1517 = vmax.f32 %v1275, 0.0
        %v1518 = vmax.f32 %v1278, 0.0
        %v1519 = vmax.f32 %v1283, 0.0
        %v1520 = vmax.f32 %v1286, 0.0
        %v1521 = vmax.f32 %v1291, 0.0
        %v1522 = vmax.f32 %v1294, 0.0
        %v1523 = vmax.f32 %v1299, 0.0
        %v1524 = vmax.f32 %v1302, 0.0
        %v1525 = vmax.f32 %v1307, 0.0
        %v1526 = vmax.f32 %v1310, 0.0
        %v1527 = vmax.f32 %v1315, 0.0
        %v1528 = vmax.f32 %v1318, 0.0
        %v1529 = vmax.f32 %v1323, 0.0
        %v1530 = vmax.f32 %v1326, 0.0
        %v1531 = vmax.f32 %v1331, 0.0
        %v1532 = vmax.f32 %v1334, 0.0
        %v1533 = vmax.f32 %v1339, 0.0
        %v1534 = vmax.f32 %v1342, 0.0
        %v1535 = vmax.f32 %v1347, 0.0
        %v1536 = vmax.f32 %v1350, 0.0
        %v1537 = vmax.f32 %v1355, 0.0
        %v1538 = vmax.f32 %v1358, 0.0
        %v1539 = vmax.f32 %v1363, 0.0
        %v1540 = vmax.f32 %v1366, 0.0
        %v1541 = vmax.f32 %v1371, 0.0
        %v1542 = vmax.f32 %v1374, 0.0
        %v1543 = vmax.f32 %v1379, 0.0
        %v1544 = vmax.f32 %v1382, 0.0
        %v1545 = vmax.f32 %v1387, 0.0
        %v1546 = vmax.f32 %v1390, 0.0
        %v1547 = vmax.f32 %v1395, 0.0
        %v1548 = vmax.f32 %v1398, 0.0
        %v1549 = vmax.f32 %v1403, 0.0
        %v1550 = vmax.f32 %v1406, 0.0
        %v1551 = vmax.f32 %v1411, 0.0
        %v1552 = vmax.f32 %v1414, 0.0
        %v1553 = vmax.f32 %v1419, 0.0
        %v1554 = vmax.f32 %v1422, 0.0
        %v1555 = vmax.f32 %v1427, 0.0
        %v1556 = vmax.f32 %v1430, 0.0
        %v1557 = vmax.f32 %v1435, 0.0
        %v1558 = vmax.f32 %v1438, 0.0
        %v1559 = vmax.f32 %v1443, 0.0
        %v1560 = vmax.f32 %v1446, 0.0
        %v1561 = vmax.f32 %v1451, 0.0
        %v1562 = vmax.f32 %v1454, 0.0
        %v1563 = vmax.f32 %v1459, 0.0
        %v1564 = vmax.f32 %v1462, 0.0
        %v1565 = vmax.f32 %v1467, 0.0
        %v1566 = vmax.f32 %v1470, 0.0
        %v1567 = vmax.f32 %v1475, 0.0
        %v1568 = vmax.f32 %v1478, 0.0
        %v1569 = vmax.f32 %v1483, 0.0
        %v1570 = vmax.f32 %v1486, 0.0
        %v1571 = vmax.f32 %v1491, 0.0
        %v1572 = vmax.f32 %v1494, 0.0
        %v1573 = vmax.f32 %v1499, 0.0
        %v1574 = vmax.f32 %v1502, 0.0
        %v1575 = vmax.f32 %v1507, 0.0
        %v1576 = vmax.f32 %v1510, 0.0
        %v1577 = vpack.c.bf16 %v1514, %v1513
        %v1578 = vpack.c.bf16 %v1516, %v1515
        %v1579 = vpack.c.bf16 %v1518, %v1517
        %v1580 = vpack.c.bf16 %v1520, %v1519
        %v1581 = vpack.c.bf16 %v1522, %v1521
        %v1582 = vpack.c.bf16 %v1524, %v1523
        %v1583 = vpack.c.bf16 %v1526, %v1525
        %v1584 = vpack.c.bf16 %v1528, %v1527
        %v1585 = vpack.c.bf16 %v1530, %v1529
        %v1586 = vpack.c.bf16 %v1532, %v1531
        %v1587 = vpack.c.bf16 %v1534, %v1533
        %v1588 = vpack.c.bf16 %v1536, %v1535
        %v1589 = vpack.c.bf16 %v1538, %v1537
        %v1590 = vpack.c.bf16 %v1540, %v1539
        %v1591 = vpack.c.bf16 %v1542, %v1541
        %v1592 = vpack.c.bf16 %v1544, %v1543
        %v1593 = vpack.c.bf16 %v1546, %v1545
        %v1594 = vpack.c.bf16 %v1548, %v1547
        %v1595 = vpack.c.bf16 %v1550, %v1549
        %v1596 = vpack.c.bf16 %v1552, %v1551
        %v1597 = vpack.c.bf16 %v1554, %v1553
        %v1598 = vpack.c.bf16 %v1556, %v1555
        %v1599 = vpack.c.bf16 %v1558, %v1557
        %v1600 = vpack.c.bf16 %v1560, %v1559
        %v1601 = vpack.c.bf16 %v1562, %v1561
        %v1602 = vpack.c.bf16 %v1564, %v1563
        %v1603 = vpack.c.bf16 %v1566, %v1565
        %v1604 = vpack.c.bf16 %v1568, %v1567
        %v1605 = vpack.c.bf16 %v1570, %v1569
        %v1606 = vpack.c.bf16 %v1572, %v1571
        %v1607 = vpack.c.bf16 %v1574, %v1573
        %v1608 = vpack.c.bf16 %v1576, %v1575
        %v1609 = vld [vmem:[%s5] sm:$0xf]
        %v1610 = vld [vmem:[%s5 + $0x4] sm:$0xf]
        %v1611 = vld [vmem:[%s5 + $0x8] sm:$0xf]
        %v1612 = vld [vmem:[%s5 + $0xc] sm:$0xf]
        %v1613 = vld [vmem:[%s5 + $0x10] sm:$0xf]
        %v1614 = vld [vmem:[%s5 + $0x14] sm:$0xf]
        %v1615 = vld [vmem:[%s5 + $0x18] sm:$0xf]
        %v1616 = vld [vmem:[%s5 + $0x1c] sm:$0xf]
        %v1617 = vld [vmem:[%s6] sm:$0x1]
        %v1619 = vlaneseq
        %v1620 = vshrl.u32 %v1619, 7
        %v1621 = vsub.s32 0, %v1620
        %v1622 = vrot.slane %v1617, %v1621
        %v1632 = vunpack.c.l.b16 %v1609
        %v1633 = vunpack.c.l.b16 %v1610
        %v1634 = vunpack.c.l.b16 %v1611
        %v1635 = vunpack.c.l.b16 %v1612
        %v1636 = vunpack.c.l.b16 %v1613
        %v1637 = vunpack.c.l.b16 %v1614
        %v1638 = vunpack.c.l.b16 %v1615
        %v1639 = vunpack.c.l.b16 %v1616
        %v1640 = vpack.c.b16 %v1633, %v1632
        %v1641 = vpack.c.b16 %v1635, %v1634
        %v1642 = vpack.c.b16 %v1637, %v1636
        %v1643 = vpack.c.b16 %v1639, %v1638
        %vm1648 = vcmask 523264
        %v1650 = vsel %vm1648, %v1577, 0
        %v1653 = vsel %vm1648, %v1578, 0
        %v1656 = vsel %vm1648, %v1579, 0
        %v1659 = vsel %vm1648, %v1580, 0
        %v1662 = vsel %vm1648, %v1581, 0
        %v1665 = vsel %vm1648, %v1582, 0
        %v1668 = vsel %vm1648, %v1583, 0
        %v1671 = vsel %vm1648, %v1584, 0
        %v1674 = vsel %vm1648, %v1585, 0
        %v1677 = vsel %vm1648, %v1586, 0
        %v1680 = vsel %vm1648, %v1587, 0
        %v1683 = vsel %vm1648, %v1588, 0
        %v1686 = vsel %vm1648, %v1589, 0
        %v1689 = vsel %vm1648, %v1590, 0
        %v1692 = vsel %vm1648, %v1591, 0
        %v1695 = vsel %vm1648, %v1592, 0
        %v1698 = vsel %vm1648, %v1593, 0
        %v1701 = vsel %vm1648, %v1594, 0
        %v1704 = vsel %vm1648, %v1595, 0
        %v1707 = vsel %vm1648, %v1596, 0
        %v1710 = vsel %vm1648, %v1597, 0
        %v1713 = vsel %vm1648, %v1598, 0
        %v1716 = vsel %vm1648, %v1599, 0
        %v1719 = vsel %vm1648, %v1600, 0
        %v1722 = vsel %vm1648, %v1601, 0
        %v1725 = vsel %vm1648, %v1602, 0
        %v1728 = vsel %vm1648, %v1603, 0
        %v1731 = vsel %vm1648, %v1604, 0
        %v1734 = vsel %vm1648, %v1605, 0
        %v1737 = vsel %vm1648, %v1606, 0
        %v1740 = vsel %vm1648, %v1607, 0
        %v1743 = vsel %vm1648, %v1608, 0
        %1745 = vmatprep.subr.bf16.mxu0 0
        %1746 = vmatpush1.bf16.msra.mxu0 %v1640
        %1747 = vmatprep.subr.bf16.mxu0 0
        %1748 = vmatpush1.bf16.msra.mxu0 %v1641
        %1749 = vmatprep.subr.bf16.mxu0 0
        %1750 = vmatpush1.bf16.msra.mxu0 %v1642
        %1751 = vmatprep.subr.bf16.mxu0 0
        %1752 = vmatpush1.bf16.msra.mxu0 %v1643
        %1753 = vmatprep.subr.bf16.mxu0 0
        %1754 = vmatpush1.bf16.msra.mxu0 0
        %1755 = vmatprep.subr.bf16.mxu0 0
        %1756 = vmatpush1.bf16.msra.mxu0 0
        %1757 = vmatprep.subr.bf16.mxu0 0
        %1758 = vmatpush1.bf16.msra.mxu0 0
        %1759 = vmatprep.subr.bf16.mxu0 0
        %1760 = vmatpush1.bf16.msra.mxu0 0
        %1761 = vmatprep.subr.bf16.mxu0 0
        %1762 = vmatpush1.bf16.msra.mxu0 0
        %1763 = vmatprep.subr.bf16.mxu0 0
        %1764 = vmatpush1.bf16.msra.mxu0 0
        %1765 = vmatprep.subr.bf16.mxu0 0
        %1766 = vmatpush1.bf16.msra.mxu0 0
        %1767 = vmatprep.subr.bf16.mxu0 0
        %1768 = vmatpush1.bf16.msra.mxu0 0
        %1769 = vmatprep.subr.bf16.mxu0 0
        %1770 = vmatpush1.bf16.msra.mxu0 0
        %1771 = vmatprep.subr.bf16.mxu0 0
        %1772 = vmatpush1.bf16.msra.mxu0 0
        %1773 = vmatprep.subr.bf16.mxu0 0
        %1774 = vmatpush1.bf16.msra.mxu0 0
        %1775 = vmatprep.subr.bf16.mxu0 0
        %1776 = vmatpush1.bf16.msra.mxu0 0
        %1777 = vmatprep.mubr.bf16.mxu0 0
        %1778 = vmatmul.mubr.bf16.gmra.mrb[0].mxu0 %v1650
        %v1779 = vpop.f32.mrb[0].mxu0
        %v1780 = vadd.f32 %v1622, %v1779
        %v1781 = vpop.f32.mrb[0].mxu0
        %v1782 = vpop.f32.mrb[0].mxu0
        %v1783 = vadd.f32 %v1622, %v1782
        %v1784 = vpop.f32.mrb[0].mxu0
        %1785 = vmatprep.mubr.bf16.mxu0 0
        %1786 = vmatmul.mubr.bf16.gmra.mrb[0].mxu0 %v1653
        %v1787 = vpop.f32.mrb[0].mxu0
        %v1788 = vadd.f32 %v1622, %v1787
        %v1789 = vpop.f32.mrb[0].mxu0
        %v1790 = vpop.f32.mrb[0].mxu0
        %v1791 = vadd.f32 %v1622, %v1790
        %v1792 = vpop.f32.mrb[0].mxu0
        %1793 = vmatprep.mubr.bf16.mxu0 0
        %1794 = vmatmul.mubr.bf16.gmra.mrb[0].mxu0 %v1656
        %v1795 = vpop.f32.mrb[0].mxu0
        %v1796 = vadd.f32 %v1622, %v1795
        %v1797 = vpop.f32.mrb[0].mxu0
        %v1798 = vpop.f32.mrb[0].mxu0
        %v1799 = vadd.f32 %v1622, %v1798
        %v1800 = vpop.f32.mrb[0].mxu0
        %1801 = vmatprep.mubr.bf16.mxu0 0
        %1802 = vmatmul.mubr.bf16.gmra.mrb[0].mxu0 %v1659
        %v1803 = vpop.f32.mrb[0].mxu0
        %v1804 = vadd.f32 %v1622, %v1803
        %v1805 = vpop.f32.mrb[0].mxu0
        %v1806 = vpop.f32.mrb[0].mxu0
        %v1807 = vadd.f32 %v1622, %v1806
        %v1808 = vpop.f32.mrb[0].mxu0
        %1809 = vmatprep.mubr.bf16.mxu0 0
        %1810 = vmatmul.mubr.bf16.gmra.mrb[0].mxu0 %v1662
        %v1811 = vpop.f32.mrb[0].mxu0
        %v1812 = vadd.f32 %v1622, %v1811
        %v1813 = vpop.f32.mrb[0].mxu0
        %v1814 = vpop.f32.mrb[0].mxu0
        %v1815 = vadd.f32 %v1622, %v1814
        %v1816 = vpop.f32.mrb[0].mxu0
        %1817 = vmatprep.mubr.bf16.mxu0 0
        %1818 = vmatmul.mubr.bf16.gmra.mrb[0].mxu0 %v1665
        %v1819 = vpop.f32.mrb[0].mxu0
        %v1820 = vadd.f32 %v1622, %v1819
        %v1821 = vpop.f32.mrb[0].mxu0
        %v1822 = vpop.f32.mrb[0].mxu0
        %v1823 = vadd.f32 %v1622, %v1822
        %v1824 = vpop.f32.mrb[0].mxu0
        %1825 = vmatprep.mubr.bf16.mxu0 0
        %1826 = vmatmul.mubr.bf16.gmra.mrb[0].mxu0 %v1668
        %v1827 = vpop.f32.mrb[0].mxu0
        %v1828 = vadd.f32 %v1622, %v1827
        %v1829 = vpop.f32.mrb[0].mxu0
        %v1830 = vpop.f32.mrb[0].mxu0
        %v1831 = vadd.f32 %v1622, %v1830
        %v1832 = vpop.f32.mrb[0].mxu0
        %1833 = vmatprep.mubr.bf16.mxu0 0
        %1834 = vmatmul.mubr.bf16.gmra.mrb[0].mxu0 %v1671
        %v1835 = vpop.f32.mrb[0].mxu0
        %v1836 = vadd.f32 %v1622, %v1835
        %v1837 = vpop.f32.mrb[0].mxu0
        %v1838 = vpop.f32.mrb[0].mxu0
        %v1839 = vadd.f32 %v1622, %v1838
        %v1840 = vpop.f32.mrb[0].mxu0
        %1841 = vmatprep.mubr.bf16.mxu0 0
        %1842 = vmatmul.mubr.bf16.gmra.mrb[0].mxu0 %v1674
        %v1843 = vpop.f32.mrb[0].mxu0
        %v1844 = vadd.f32 %v1622, %v1843
        %v1845 = vpop.f32.mrb[0].mxu0
        %v1846 = vpop.f32.mrb[0].mxu0
        %v1847 = vadd.f32 %v1622, %v1846
        %v1848 = vpop.f32.mrb[0].mxu0
        %1849 = vmatprep.mubr.bf16.mxu0 0
        %1850 = vmatmul.mubr.bf16.gmra.mrb[0].mxu0 %v1677
        %v1851 = vpop.f32.mrb[0].mxu0
        %v1852 = vadd.f32 %v1622, %v1851
        %v1853 = vpop.f32.mrb[0].mxu0
        %v1854 = vpop.f32.mrb[0].mxu0
        %v1855 = vadd.f32 %v1622, %v1854
        %v1856 = vpop.f32.mrb[0].mxu0
        %1857 = vmatprep.mubr.bf16.mxu0 0
        %1858 = vmatmul.mubr.bf16.gmra.mrb[0].mxu0 %v1680
        %v1859 = vpop.f32.mrb[0].mxu0
        %v1860 = vadd.f32 %v1622, %v1859
        %v1861 = vpop.f32.mrb[0].mxu0
        %v1862 = vpop.f32.mrb[0].mxu0
        %v1863 = vadd.f32 %v1622, %v1862
        %v1864 = vpop.f32.mrb[0].mxu0
        %1865 = vmatprep.mubr.bf16.mxu0 0
        %1866 = vmatmul.mubr.bf16.gmra.mrb[0].mxu0 %v1683
        %v1867 = vpop.f32.mrb[0].mxu0
        %v1868 = vadd.f32 %v1622, %v1867
        %v1869 = vpop.f32.mrb[0].mxu0
        %v1870 = vpop.f32.mrb[0].mxu0
        %v1871 = vadd.f32 %v1622, %v1870
        %v1872 = vpop.f32.mrb[0].mxu0
        %1873 = vmatprep.mubr.bf16.mxu0 0
        %1874 = vmatmul.mubr.bf16.gmra.mrb[0].mxu0 %v1686
        %v1875 = vpop.f32.mrb[0].mxu0
        %v1876 = vadd.f32 %v1622, %v1875
        %v1877 = vpop.f32.mrb[0].mxu0
        %v1878 = vpop.f32.mrb[0].mxu0
        %v1879 = vadd.f32 %v1622, %v1878
        %v1880 = vpop.f32.mrb[0].mxu0
        %1881 = vmatprep.mubr.bf16.mxu0 0
        %1882 = vmatmul.mubr.bf16.gmra.mrb[0].mxu0 %v1689
        %v1883 = vpop.f32.mrb[0].mxu0
        %v1884 = vadd.f32 %v1622, %v1883
        %v1885 = vpop.f32.mrb[0].mxu0
        %v1886 = vpop.f32.mrb[0].mxu0
        %v1887 = vadd.f32 %v1622, %v1886
        %v1888 = vpop.f32.mrb[0].mxu0
        %1889 = vmatprep.mubr.bf16.mxu0 0
        %1890 = vmatmul.mubr.bf16.gmra.mrb[0].mxu0 %v1692
        %v1891 = vpop.f32.mrb[0].mxu0
        %v1892 = vadd.f32 %v1622, %v1891
        %v1893 = vpop.f32.mrb[0].mxu0
        %v1894 = vpop.f32.mrb[0].mxu0
        %v1895 = vadd.f32 %v1622, %v1894
        %v1896 = vpop.f32.mrb[0].mxu0
        %1897 = vmatprep.mubr.bf16.mxu0 0
        %1898 = vmatmul.mubr.bf16.gmra.mrb[0].mxu0 %v1695
        %v1899 = vpop.f32.mrb[0].mxu0
        %v1900 = vadd.f32 %v1622, %v1899
        %v1901 = vpop.f32.mrb[0].mxu0
        %v1902 = vpop.f32.mrb[0].mxu0
        %v1903 = vadd.f32 %v1622, %v1902
        %v1904 = vpop.f32.mrb[0].mxu0
        %1905 = vmatprep.mubr.bf16.mxu0 0
        %1906 = vmatmul.mubr.bf16.gmra.mrb[0].mxu0 %v1698
        %v1907 = vpop.f32.mrb[0].mxu0
        %v1908 = vadd.f32 %v1622, %v1907
        %v1909 = vpop.f32.mrb[0].mxu0
        %v1910 = vpop.f32.mrb[0].mxu0
        %v1911 = vadd.f32 %v1622, %v1910
        %v1912 = vpop.f32.mrb[0].mxu0
        %1913 = vmatprep.mubr.bf16.mxu0 0
        %1914 = vmatmul.mubr.bf16.gmra.mrb[0].mxu0 %v1701
        %v1915 = vpop.f32.mrb[0].mxu0
        %v1916 = vadd.f32 %v1622, %v1915
        %v1917 = vpop.f32.mrb[0].mxu0
        %v1918 = vpop.f32.mrb[0].mxu0
        %v1919 = vadd.f32 %v1622, %v1918
        %v1920 = vpop.f32.mrb[0].mxu0
        %1921 = vmatprep.mubr.bf16.mxu0 0
        %1922 = vmatmul.mubr.bf16.gmra.mrb[0].mxu0 %v1704
        %v1923 = vpop.f32.mrb[0].mxu0
        %v1924 = vadd.f32 %v1622, %v1923
        %v1925 = vpop.f32.mrb[0].mxu0
        %v1926 = vpop.f32.mrb[0].mxu0
        %v1927 = vadd.f32 %v1622, %v1926
        %v1928 = vpop.f32.mrb[0].mxu0
        %1929 = vmatprep.mubr.bf16.mxu0 0
        %1930 = vmatmul.mubr.bf16.gmra.mrb[0].mxu0 %v1707
        %v1931 = vpop.f32.mrb[0].mxu0
        %v1932 = vadd.f32 %v1622, %v1931
        %v1933 = vpop.f32.mrb[0].mxu0
        %v1934 = vpop.f32.mrb[0].mxu0
        %v1935 = vadd.f32 %v1622, %v1934
        %v1936 = vpop.f32.mrb[0].mxu0
        %1937 = vmatprep.mubr.bf16.mxu0 0
        %1938 = vmatmul.mubr.bf16.gmra.mrb[0].mxu0 %v1710
        %v1939 = vpop.f32.mrb[0].mxu0
        %v1940 = vadd.f32 %v1622, %v1939
        %v1941 = vpop.f32.mrb[0].mxu0
        %v1942 = vpop.f32.mrb[0].mxu0
        %v1943 = vadd.f32 %v1622, %v1942
        %v1944 = vpop.f32.mrb[0].mxu0
        %1945 = vmatprep.mubr.bf16.mxu0 0
        %1946 = vmatmul.mubr.bf16.gmra.mrb[0].mxu0 %v1713
        %v1947 = vpop.f32.mrb[0].mxu0
        %v1948 = vadd.f32 %v1622, %v1947
        %v1949 = vpop.f32.mrb[0].mxu0
        %v1950 = vpop.f32.mrb[0].mxu0
        %v1951 = vadd.f32 %v1622, %v1950
        %v1952 = vpop.f32.mrb[0].mxu0
        %1953 = vmatprep.mubr.bf16.mxu0 0
        %1954 = vmatmul.mubr.bf16.gmra.mrb[0].mxu0 %v1716
        %v1955 = vpop.f32.mrb[0].mxu0
        %v1956 = vadd.f32 %v1622, %v1955
        %v1957 = vpop.f32.mrb[0].mxu0
        %v1958 = vpop.f32.mrb[0].mxu0
        %v1959 = vadd.f32 %v1622, %v1958
        %v1960 = vpop.f32.mrb[0].mxu0
        %1961 = vmatprep.mubr.bf16.mxu0 0
        %1962 = vmatmul.mubr.bf16.gmra.mrb[0].mxu0 %v1719
        %v1963 = vpop.f32.mrb[0].mxu0
        %v1964 = vadd.f32 %v1622, %v1963
        %v1965 = vpop.f32.mrb[0].mxu0
        %v1966 = vpop.f32.mrb[0].mxu0
        %v1967 = vadd.f32 %v1622, %v1966
        %v1968 = vpop.f32.mrb[0].mxu0
        %1969 = vmatprep.mubr.bf16.mxu0 0
        %1970 = vmatmul.mubr.bf16.gmra.mrb[0].mxu0 %v1722
        %v1971 = vpop.f32.mrb[0].mxu0
        %v1972 = vadd.f32 %v1622, %v1971
        %v1973 = vpop.f32.mrb[0].mxu0
        %v1974 = vpop.f32.mrb[0].mxu0
        %v1975 = vadd.f32 %v1622, %v1974
        %v1976 = vpop.f32.mrb[0].mxu0
        %1977 = vmatprep.mubr.bf16.mxu0 0
        %1978 = vmatmul.mubr.bf16.gmra.mrb[0].mxu0 %v1725
        %v1979 = vpop.f32.mrb[0].mxu0
        %v1980 = vadd.f32 %v1622, %v1979
        %v1981 = vpop.f32.mrb[0].mxu0
        %v1982 = vpop.f32.mrb[0].mxu0
        %v1983 = vadd.f32 %v1622, %v1982
        %v1984 = vpop.f32.mrb[0].mxu0
        %1985 = vmatprep.mubr.bf16.mxu0 0
        %1986 = vmatmul.mubr.bf16.gmra.mrb[0].mxu0 %v1728
        %v1987 = vpop.f32.mrb[0].mxu0
        %v1988 = vadd.f32 %v1622, %v1987
        %v1989 = vpop.f32.mrb[0].mxu0
        %v1990 = vpop.f32.mrb[0].mxu0
        %v1991 = vadd.f32 %v1622, %v1990
        %v1992 = vpop.f32.mrb[0].mxu0
        %1993 = vmatprep.mubr.bf16.mxu0 0
        %1994 = vmatmul.mubr.bf16.gmra.mrb[0].mxu0 %v1731
        %v1995 = vpop.f32.mrb[0].mxu0
        %v1996 = vadd.f32 %v1622, %v1995
        %v1997 = vpop.f32.mrb[0].mxu0
        %v1998 = vpop.f32.mrb[0].mxu0
        %v1999 = vadd.f32 %v1622, %v1998
        %v2000 = vpop.f32.mrb[0].mxu0
        %2001 = vmatprep.mubr.bf16.mxu0 0
        %2002 = vmatmul.mubr.bf16.gmra.mrb[0].mxu0 %v1734
        %v2003 = vpop.f32.mrb[0].mxu0
        %v2004 = vadd.f32 %v1622, %v2003
        %v2005 = vpop.f32.mrb[0].mxu0
        %v2006 = vpop.f32.mrb[0].mxu0
        %v2007 = vadd.f32 %v1622, %v2006
        %v2008 = vpop.f32.mrb[0].mxu0
        %2009 = vmatprep.mubr.bf16.mxu0 0
        %2010 = vmatmul.mubr.bf16.gmra.mrb[0].mxu0 %v1737
        %v2011 = vpop.f32.mrb[0].mxu0
        %v2012 = vadd.f32 %v1622, %v2011
        %v2013 = vpop.f32.mrb[0].mxu0
        %v2014 = vpop.f32.mrb[0].mxu0
        %v2015 = vadd.f32 %v1622, %v2014
        %v2016 = vpop.f32.mrb[0].mxu0
        %2017 = vmatprep.mubr.bf16.mxu0 0
        %2018 = vmatmul.mubr.bf16.gmra.mrb[0].mxu0 %v1740
        %v2019 = vpop.f32.mrb[0].mxu0
        %v2020 = vadd.f32 %v1622, %v2019
        %v2021 = vpop.f32.mrb[0].mxu0
        %v2022 = vpop.f32.mrb[0].mxu0
        %v2023 = vadd.f32 %v1622, %v2022
        %v2024 = vpop.f32.mrb[0].mxu0
        %2025 = vmatprep.mubr.bf16.mxu0 0
        %2026 = vmatmul.mubr.bf16.gmra.mrb[0].mxu0 %v1743
        %v2027 = vpop.f32.mrb[0].mxu0
        %v2028 = vadd.f32 %v1622, %v2027
        %v2029 = vpop.f32.mrb[0].mxu0
        %v2030 = vpop.f32.mrb[0].mxu0
        %v2031 = vadd.f32 %v1622, %v2030
        %v2032 = vpop.f32.mrb[0].mxu0
        %2033 = vdwg.mxu0
        %v2034 = vmax.f32 %v1780, 0.0
        %v2035 = vmax.f32 %v1783, 0.0
        %v2036 = vmax.f32 %v1788, 0.0
        %v2037 = vmax.f32 %v1791, 0.0
        %v2038 = vmax.f32 %v1796, 0.0
        %v2039 = vmax.f32 %v1799, 0.0
        %v2040 = vmax.f32 %v1804, 0.0
        %v2041 = vmax.f32 %v1807, 0.0
        %v2042 = vmax.f32 %v1812, 0.0
        %v2043 = vmax.f32 %v1815, 0.0
        %v2044 = vmax.f32 %v1820, 0.0
        %v2045 = vmax.f32 %v1823, 0.0
        %v2046 = vmax.f32 %v1828, 0.0
        %v2047 = vmax.f32 %v1831, 0.0
        %v2048 = vmax.f32 %v1836, 0.0
        %v2049 = vmax.f32 %v1839, 0.0
        %v2050 = vmax.f32 %v1844, 0.0
        %v2051 = vmax.f32 %v1847, 0.0
        %v2052 = vmax.f32 %v1852, 0.0
        %v2053 = vmax.f32 %v1855, 0.0
        %v2054 = vmax.f32 %v1860, 0.0
        %v2055 = vmax.f32 %v1863, 0.0
        %v2056 = vmax.f32 %v1868, 0.0
        %v2057 = vmax.f32 %v1871, 0.0
        %v2058 = vmax.f32 %v1876, 0.0
        %v2059 = vmax.f32 %v1879, 0.0
        %v2060 = vmax.f32 %v1884, 0.0
        %v2061 = vmax.f32 %v1887, 0.0
        %v2062 = vmax.f32 %v1892, 0.0
        %v2063 = vmax.f32 %v1895, 0.0
        %v2064 = vmax.f32 %v1900, 0.0
        %v2065 = vmax.f32 %v1903, 0.0
        %v2066 = vmax.f32 %v1908, 0.0
        %v2067 = vmax.f32 %v1911, 0.0
        %v2068 = vmax.f32 %v1916, 0.0
        %v2069 = vmax.f32 %v1919, 0.0
        %v2070 = vmax.f32 %v1924, 0.0
        %v2071 = vmax.f32 %v1927, 0.0
        %v2072 = vmax.f32 %v1932, 0.0
        %v2073 = vmax.f32 %v1935, 0.0
        %v2074 = vmax.f32 %v1940, 0.0
        %v2075 = vmax.f32 %v1943, 0.0
        %v2076 = vmax.f32 %v1948, 0.0
        %v2077 = vmax.f32 %v1951, 0.0
        %v2078 = vmax.f32 %v1956, 0.0
        %v2079 = vmax.f32 %v1959, 0.0
        %v2080 = vmax.f32 %v1964, 0.0
        %v2081 = vmax.f32 %v1967, 0.0
        %v2082 = vmax.f32 %v1972, 0.0
        %v2083 = vmax.f32 %v1975, 0.0
        %v2084 = vmax.f32 %v1980, 0.0
        %v2085 = vmax.f32 %v1983, 0.0
        %v2086 = vmax.f32 %v1988, 0.0
        %v2087 = vmax.f32 %v1991, 0.0
        %v2088 = vmax.f32 %v1996, 0.0
        %v2089 = vmax.f32 %v1999, 0.0
        %v2090 = vmax.f32 %v2004, 0.0
        %v2091 = vmax.f32 %v2007, 0.0
        %v2092 = vmax.f32 %v2012, 0.0
        %v2093 = vmax.f32 %v2015, 0.0
        %v2094 = vmax.f32 %v2020, 0.0
        %v2095 = vmax.f32 %v2023, 0.0
        %v2096 = vmax.f32 %v2028, 0.0
        %v2097 = vmax.f32 %v2031, 0.0
        %v2098 = vpack.c.bf16 %v2035, %v2034
        %v2099 = vpack.c.bf16 %v2037, %v2036
        %v2100 = vpack.c.bf16 %v2039, %v2038
        %v2101 = vpack.c.bf16 %v2041, %v2040
        %v2102 = vpack.c.bf16 %v2043, %v2042
        %v2103 = vpack.c.bf16 %v2045, %v2044
        %v2104 = vpack.c.bf16 %v2047, %v2046
        %v2105 = vpack.c.bf16 %v2049, %v2048
        %v2106 = vpack.c.bf16 %v2051, %v2050
        %v2107 = vpack.c.bf16 %v2053, %v2052
        %v2108 = vpack.c.bf16 %v2055, %v2054
        %v2109 = vpack.c.bf16 %v2057, %v2056
        %v2110 = vpack.c.bf16 %v2059, %v2058
        %v2111 = vpack.c.bf16 %v2061, %v2060
        %v2112 = vpack.c.bf16 %v2063, %v2062
        %v2113 = vpack.c.bf16 %v2065, %v2064
        %v2114 = vpack.c.bf16 %v2067, %v2066
        %v2115 = vpack.c.bf16 %v2069, %v2068
        %v2116 = vpack.c.bf16 %v2071, %v2070
        %v2117 = vpack.c.bf16 %v2073, %v2072
        %v2118 = vpack.c.bf16 %v2075, %v2074
        %v2119 = vpack.c.bf16 %v2077, %v2076
        %v2120 = vpack.c.bf16 %v2079, %v2078
        %v2121 = vpack.c.bf16 %v2081, %v2080
        %v2122 = vpack.c.bf16 %v2083, %v2082
        %v2123 = vpack.c.bf16 %v2085, %v2084
        %v2124 = vpack.c.bf16 %v2087, %v2086
        %v2125 = vpack.c.bf16 %v2089, %v2088
        %v2126 = vpack.c.bf16 %v2091, %v2090
        %v2127 = vpack.c.bf16 %v2093, %v2092
        %v2128 = vpack.c.bf16 %v2095, %v2094
        %v2129 = vpack.c.bf16 %v2097, %v2096
        %v2130 = vld [vmem:[%s7] sm:$0xf]
        %v2131 = vld [vmem:[%s7 + $0x4] sm:$0x3]
        %v2132 = vld [vmem:[%s8] sm:$0x1]
        %v2134 = vlaneseq
        %v2135 = vshrl.u32 %v2134, 7
        %v2136 = vsub.s32 0, %v2135
        %v2137 = vrot.slane %v2132, %v2136
        %v2141 = vunpack.c.l.b16 %v2130
        %v2142 = vunpack.c.l.b16 %v2131
        %v2143 = vpack.c.b16 %v2142, %v2141
        %vm2144 = vcmask 97280
        %v2146 = vsel %vm2144, %v2098, 0
        %v2149 = vsel %vm2144, %v2099, 0
        %v2152 = vsel %vm2144, %v2100, 0
        %v2155 = vsel %vm2144, %v2101, 0
        %v2158 = vsel %vm2144, %v2102, 0
        %v2161 = vsel %vm2144, %v2103, 0
        %v2164 = vsel %vm2144, %v2104, 0
        %v2167 = vsel %vm2144, %v2105, 0
        %v2170 = vsel %vm2144, %v2106, 0
        %v2173 = vsel %vm2144, %v2107, 0
        %v2176 = vsel %vm2144, %v2108, 0
        %v2179 = vsel %vm2144, %v2109, 0
        %v2182 = vsel %vm2144, %v2110, 0
        %v2185 = vsel %vm2144, %v2111, 0
        %v2188 = vsel %vm2144, %v2112, 0
        %v2191 = vsel %vm2144, %v2113, 0
        %v2194 = vsel %vm2144, %v2114, 0
        %v2197 = vsel %vm2144, %v2115, 0
        %v2200 = vsel %vm2144, %v2116, 0
        %v2203 = vsel %vm2144, %v2117, 0
        %v2206 = vsel %vm2144, %v2118, 0
        %v2209 = vsel %vm2144, %v2119, 0
        %v2212 = vsel %vm2144, %v2120, 0
        %v2215 = vsel %vm2144, %v2121, 0
        %v2218 = vsel %vm2144, %v2122, 0
        %v2221 = vsel %vm2144, %v2123, 0
        %v2224 = vsel %vm2144, %v2124, 0
        %v2227 = vsel %vm2144, %v2125, 0
        %v2230 = vsel %vm2144, %v2126, 0
        %v2233 = vsel %vm2144, %v2127, 0
        %v2236 = vsel %vm2144, %v2128, 0
        %v2239 = vsel %vm2144, %v2129, 0
        %vm2241 = vcmask 1045504
        %v2243 = vsel %vm2241, %v2143, 0
        %2245 = vmatprep.subr.bf16.mxu0 0
        %2246 = vmatpush1.bf16.msra.mxu0 %v2243
        %2247 = vmatprep.subr.bf16.mxu0 0
        %2248 = vmatpush1.bf16.msra.mxu0 0
        %2249 = vmatprep.subr.bf16.mxu0 0
        %2250 = vmatpush1.bf16.msra.mxu0 0
        %2251 = vmatprep.subr.bf16.mxu0 0
        %2252 = vmatpush1.bf16.msra.mxu0 0
        %2253 = vmatprep.subr.bf16.mxu0 0
        %2254 = vmatpush1.bf16.msra.mxu0 0
        %2255 = vmatprep.subr.bf16.mxu0 0
        %2256 = vmatpush1.bf16.msra.mxu0 0
        %2257 = vmatprep.subr.bf16.mxu0 0
        %2258 = vmatpush1.bf16.msra.mxu0 0
        %2259 = vmatprep.subr.bf16.mxu0 0
        %2260 = vmatpush1.bf16.msra.mxu0 0
        %2261 = vmatprep.subr.bf16.mxu0 0
        %2262 = vmatpush1.bf16.msra.mxu0 0
        %2263 = vmatprep.subr.bf16.mxu0 0
        %2264 = vmatpush1.bf16.msra.mxu0 0
        %2265 = vmatprep.subr.bf16.mxu0 0
        %2266 = vmatpush1.bf16.msra.mxu0 0
        %2267 = vmatprep.subr.bf16.mxu0 0
        %2268 = vmatpush1.bf16.msra.mxu0 0
        %2269 = vmatprep.subr.bf16.mxu0 0
        %2270 = vmatpush1.bf16.msra.mxu0 0
        %2271 = vmatprep.subr.bf16.mxu0 0
        %2272 = vmatpush1.bf16.msra.mxu0 0
        %2273 = vmatprep.subr.bf16.mxu0 0
        %2274 = vmatpush1.bf16.msra.mxu0 0
        %2275 = vmatprep.subr.bf16.mxu0 0
        %2276 = vmatpush1.bf16.msra.mxu0 0
        %2277 = vmatprep.mubr.bf16.mxu0 0
        %2278 = vmatmul.mubr.bf16.gmra.mrb[0].mxu0 %v2146
        %v2279 = vpop.f32.mrb[0].mxu0
        %v2280 = vadd.f32 %v2137, %v2279
        %v2281 = vpop.f32.mrb[0].mxu0
        %v2282 = vpop.f32.mrb[0].mxu0
        %v2283 = vadd.f32 %v2137, %v2282
        %v2284 = vpop.f32.mrb[0].mxu0
        %2285 = vmatprep.mubr.bf16.mxu0 0
        %2286 = vmatmul.mubr.bf16.gmra.mrb[0].mxu0 %v2149
        %v2287 = vpop.f32.mrb[0].mxu0
        %v2288 = vadd.f32 %v2137, %v2287
        %v2289 = vpop.f32.mrb[0].mxu0
        %v2290 = vpop.f32.mrb[0].mxu0
        %v2291 = vadd.f32 %v2137, %v2290
        %v2292 = vpop.f32.mrb[0].mxu0
        %2293 = vmatprep.mubr.bf16.mxu0 0
        %2294 = vmatmul.mubr.bf16.gmra.mrb[0].mxu0 %v2152
        %v2295 = vpop.f32.mrb[0].mxu0
        %v2296 = vadd.f32 %v2137, %v2295
        %v2297 = vpop.f32.mrb[0].mxu0
        %v2298 = vpop.f32.mrb[0].mxu0
        %v2299 = vadd.f32 %v2137, %v2298
        %v2300 = vpop.f32.mrb[0].mxu0
        %2301 = vmatprep.mubr.bf16.mxu0 0
        %2302 = vmatmul.mubr.bf16.gmra.mrb[0].mxu0 %v2155
        %v2303 = vpop.f32.mrb[0].mxu0
        %v2304 = vadd.f32 %v2137, %v2303
        %v2305 = vpop.f32.mrb[0].mxu0
        %v2306 = vpop.f32.mrb[0].mxu0
        %v2307 = vadd.f32 %v2137, %v2306
        %v2308 = vpop.f32.mrb[0].mxu0
        %2309 = vmatprep.mubr.bf16.mxu0 0
        %2310 = vmatmul.mubr.bf16.gmra.mrb[0].mxu0 %v2158
        %v2311 = vpop.f32.mrb[0].mxu0
        %v2312 = vadd.f32 %v2137, %v2311
        %v2313 = vpop.f32.mrb[0].mxu0
        %v2314 = vpop.f32.mrb[0].mxu0
        %v2315 = vadd.f32 %v2137, %v2314
        %v2316 = vpop.f32.mrb[0].mxu0
        %2317 = vmatprep.mubr.bf16.mxu0 0
        %2318 = vmatmul.mubr.bf16.gmra.mrb[0].mxu0 %v2161
        %v2319 = vpop.f32.mrb[0].mxu0
        %v2320 = vadd.f32 %v2137, %v2319
        %v2321 = vpop.f32.mrb[0].mxu0
        %v2322 = vpop.f32.mrb[0].mxu0
        %v2323 = vadd.f32 %v2137, %v2322
        %v2324 = vpop.f32.mrb[0].mxu0
        %2325 = vmatprep.mubr.bf16.mxu0 0
        %2326 = vmatmul.mubr.bf16.gmra.mrb[0].mxu0 %v2164
        %v2327 = vpop.f32.mrb[0].mxu0
        %v2328 = vadd.f32 %v2137, %v2327
        %v2329 = vpop.f32.mrb[0].mxu0
        %v2330 = vpop.f32.mrb[0].mxu0
        %v2331 = vadd.f32 %v2137, %v2330
        %v2332 = vpop.f32.mrb[0].mxu0
        %2333 = vmatprep.mubr.bf16.mxu0 0
        %2334 = vmatmul.mubr.bf16.gmra.mrb[0].mxu0 %v2167
        %v2335 = vpop.f32.mrb[0].mxu0
        %v2336 = vadd.f32 %v2137, %v2335
        %v2337 = vpop.f32.mrb[0].mxu0
        %v2338 = vpop.f32.mrb[0].mxu0
        %v2339 = vadd.f32 %v2137, %v2338
        %v2340 = vpop.f32.mrb[0].mxu0
        %2341 = vmatprep.mubr.bf16.mxu0 0
        %2342 = vmatmul.mubr.bf16.gmra.mrb[0].mxu0 %v2170
        %v2343 = vpop.f32.mrb[0].mxu0
        %v2344 = vadd.f32 %v2137, %v2343
        %v2345 = vpop.f32.mrb[0].mxu0
        %v2346 = vpop.f32.mrb[0].mxu0
        %v2347 = vadd.f32 %v2137, %v2346
        %v2348 = vpop.f32.mrb[0].mxu0
        %2349 = vmatprep.mubr.bf16.mxu0 0
        %2350 = vmatmul.mubr.bf16.gmra.mrb[0].mxu0 %v2173
        %v2351 = vpop.f32.mrb[0].mxu0
        %v2352 = vadd.f32 %v2137, %v2351
        %v2353 = vpop.f32.mrb[0].mxu0
        %v2354 = vpop.f32.mrb[0].mxu0
        %v2355 = vadd.f32 %v2137, %v2354
        %v2356 = vpop.f32.mrb[0].mxu0
        %2357 = vmatprep.mubr.bf16.mxu0 0
        %2358 = vmatmul.mubr.bf16.gmra.mrb[0].mxu0 %v2176
        %v2359 = vpop.f32.mrb[0].mxu0
        %v2360 = vadd.f32 %v2137, %v2359
        %v2361 = vpop.f32.mrb[0].mxu0
        %v2362 = vpop.f32.mrb[0].mxu0
        %v2363 = vadd.f32 %v2137, %v2362
        %v2364 = vpop.f32.mrb[0].mxu0
        %2365 = vmatprep.mubr.bf16.mxu0 0
        %2366 = vmatmul.mubr.bf16.gmra.mrb[0].mxu0 %v2179
        %v2367 = vpop.f32.mrb[0].mxu0
        %v2368 = vadd.f32 %v2137, %v2367
        %v2369 = vpop.f32.mrb[0].mxu0
        %v2370 = vpop.f32.mrb[0].mxu0
        %v2371 = vadd.f32 %v2137, %v2370
        %v2372 = vpop.f32.mrb[0].mxu0
        %2373 = vmatprep.mubr.bf16.mxu0 0
        %2374 = vmatmul.mubr.bf16.gmra.mrb[0].mxu0 %v2182
        %v2375 = vpop.f32.mrb[0].mxu0
        %v2376 = vadd.f32 %v2137, %v2375
        %v2377 = vpop.f32.mrb[0].mxu0
        %v2378 = vpop.f32.mrb[0].mxu0
        %v2379 = vadd.f32 %v2137, %v2378
        %v2380 = vpop.f32.mrb[0].mxu0
        %2381 = vmatprep.mubr.bf16.mxu0 0
        %2382 = vmatmul.mubr.bf16.gmra.mrb[0].mxu0 %v2185
        %v2383 = vpop.f32.mrb[0].mxu0
        %v2384 = vadd.f32 %v2137, %v2383
        %v2385 = vpop.f32.mrb[0].mxu0
        %v2386 = vpop.f32.mrb[0].mxu0
        %v2387 = vadd.f32 %v2137, %v2386
        %v2388 = vpop.f32.mrb[0].mxu0
        %2389 = vmatprep.mubr.bf16.mxu0 0
        %2390 = vmatmul.mubr.bf16.gmra.mrb[0].mxu0 %v2188
        %v2391 = vpop.f32.mrb[0].mxu0
        %v2392 = vadd.f32 %v2137, %v2391
        %v2393 = vpop.f32.mrb[0].mxu0
        %v2394 = vpop.f32.mrb[0].mxu0
        %v2395 = vadd.f32 %v2137, %v2394
        %v2396 = vpop.f32.mrb[0].mxu0
        %2397 = vmatprep.mubr.bf16.mxu0 0
        %2398 = vmatmul.mubr.bf16.gmra.mrb[0].mxu0 %v2191
        %v2399 = vpop.f32.mrb[0].mxu0
        %v2400 = vadd.f32 %v2137, %v2399
        %v2401 = vpop.f32.mrb[0].mxu0
        %v2402 = vpop.f32.mrb[0].mxu0
        %v2403 = vadd.f32 %v2137, %v2402
        %v2404 = vpop.f32.mrb[0].mxu0
        %2405 = vmatprep.mubr.bf16.mxu0 0
        %2406 = vmatmul.mubr.bf16.gmra.mrb[0].mxu0 %v2194
        %v2407 = vpop.f32.mrb[0].mxu0
        %v2408 = vadd.f32 %v2137, %v2407
        %v2409 = vpop.f32.mrb[0].mxu0
        %v2410 = vpop.f32.mrb[0].mxu0
        %v2411 = vadd.f32 %v2137, %v2410
        %v2412 = vpop.f32.mrb[0].mxu0
        %2413 = vmatprep.mubr.bf16.mxu0 0
        %2414 = vmatmul.mubr.bf16.gmra.mrb[0].mxu0 %v2197
        %v2415 = vpop.f32.mrb[0].mxu0
        %v2416 = vadd.f32 %v2137, %v2415
        %v2417 = vpop.f32.mrb[0].mxu0
        %v2418 = vpop.f32.mrb[0].mxu0
        %v2419 = vadd.f32 %v2137, %v2418
        %v2420 = vpop.f32.mrb[0].mxu0
        %2421 = vmatprep.mubr.bf16.mxu0 0
        %2422 = vmatmul.mubr.bf16.gmra.mrb[0].mxu0 %v2200
        %v2423 = vpop.f32.mrb[0].mxu0
        %v2424 = vadd.f32 %v2137, %v2423
        %v2425 = vpop.f32.mrb[0].mxu0
        %v2426 = vpop.f32.mrb[0].mxu0
        %v2427 = vadd.f32 %v2137, %v2426
        %v2428 = vpop.f32.mrb[0].mxu0
        %2429 = vmatprep.mubr.bf16.mxu0 0
        %2430 = vmatmul.mubr.bf16.gmra.mrb[0].mxu0 %v2203
        %v2431 = vpop.f32.mrb[0].mxu0
        %v2432 = vadd.f32 %v2137, %v2431
        %v2433 = vpop.f32.mrb[0].mxu0
        %v2434 = vpop.f32.mrb[0].mxu0
        %v2435 = vadd.f32 %v2137, %v2434
        %v2436 = vpop.f32.mrb[0].mxu0
        %2437 = vmatprep.mubr.bf16.mxu0 0
        %2438 = vmatmul.mubr.bf16.gmra.mrb[0].mxu0 %v2206
        %v2439 = vpop.f32.mrb[0].mxu0
        %v2440 = vadd.f32 %v2137, %v2439
        %v2441 = vpop.f32.mrb[0].mxu0
        %v2442 = vpop.f32.mrb[0].mxu0
        %v2443 = vadd.f32 %v2137, %v2442
        %v2444 = vpop.f32.mrb[0].mxu0
        %2445 = vmatprep.mubr.bf16.mxu0 0
        %2446 = vmatmul.mubr.bf16.gmra.mrb[0].mxu0 %v2209
        %v2447 = vpop.f32.mrb[0].mxu0
        %v2448 = vadd.f32 %v2137, %v2447
        %v2449 = vpop.f32.mrb[0].mxu0
        %v2450 = vpop.f32.mrb[0].mxu0
        %v2451 = vadd.f32 %v2137, %v2450
        %v2452 = vpop.f32.mrb[0].mxu0
        %2453 = vmatprep.mubr.bf16.mxu0 0
        %2454 = vmatmul.mubr.bf16.gmra.mrb[0].mxu0 %v2212
        %v2455 = vpop.f32.mrb[0].mxu0
        %v2456 = vadd.f32 %v2137, %v2455
        %v2457 = vpop.f32.mrb[0].mxu0
        %v2458 = vpop.f32.mrb[0].mxu0
        %v2459 = vadd.f32 %v2137, %v2458
        %v2460 = vpop.f32.mrb[0].mxu0
        %2461 = vmatprep.mubr.bf16.mxu0 0
        %2462 = vmatmul.mubr.bf16.gmra.mrb[0].mxu0 %v2215
        %v2463 = vpop.f32.mrb[0].mxu0
        %v2464 = vadd.f32 %v2137, %v2463
        %v2465 = vpop.f32.mrb[0].mxu0
        %v2466 = vpop.f32.mrb[0].mxu0
        %v2467 = vadd.f32 %v2137, %v2466
        %v2468 = vpop.f32.mrb[0].mxu0
        %2469 = vmatprep.mubr.bf16.mxu0 0
        %2470 = vmatmul.mubr.bf16.gmra.mrb[0].mxu0 %v2218
        %v2471 = vpop.f32.mrb[0].mxu0
        %v2472 = vadd.f32 %v2137, %v2471
        %v2473 = vpop.f32.mrb[0].mxu0
        %v2474 = vpop.f32.mrb[0].mxu0
        %v2475 = vadd.f32 %v2137, %v2474
        %v2476 = vpop.f32.mrb[0].mxu0
        %2477 = vmatprep.mubr.bf16.mxu0 0
        %2478 = vmatmul.mubr.bf16.gmra.mrb[0].mxu0 %v2221
        %v2479 = vpop.f32.mrb[0].mxu0
        %v2480 = vadd.f32 %v2137, %v2479
        %v2481 = vpop.f32.mrb[0].mxu0
        %v2482 = vpop.f32.mrb[0].mxu0
        %v2483 = vadd.f32 %v2137, %v2482
        %v2484 = vpop.f32.mrb[0].mxu0
        %2485 = vmatprep.mubr.bf16.mxu0 0
        %2486 = vmatmul.mubr.bf16.gmra.mrb[0].mxu0 %v2224
        %v2487 = vpop.f32.mrb[0].mxu0
        %v2488 = vadd.f32 %v2137, %v2487
        %v2489 = vpop.f32.mrb[0].mxu0
        %v2490 = vpop.f32.mrb[0].mxu0
        %v2491 = vadd.f32 %v2137, %v2490
        %v2492 = vpop.f32.mrb[0].mxu0
        %2493 = vmatprep.mubr.bf16.mxu0 0
        %2494 = vmatmul.mubr.bf16.gmra.mrb[0].mxu0 %v2227
        %v2495 = vpop.f32.mrb[0].mxu0
        %v2496 = vadd.f32 %v2137, %v2495
        %v2497 = vpop.f32.mrb[0].mxu0
        %v2498 = vpop.f32.mrb[0].mxu0
        %v2499 = vadd.f32 %v2137, %v2498
        %v2500 = vpop.f32.mrb[0].mxu0
        %2501 = vmatprep.mubr.bf16.mxu0 0
        %2502 = vmatmul.mubr.bf16.gmra.mrb[0].mxu0 %v2230
        %v2503 = vpop.f32.mrb[0].mxu0
        %v2504 = vadd.f32 %v2137, %v2503
        %v2505 = vpop.f32.mrb[0].mxu0
        %v2506 = vpop.f32.mrb[0].mxu0
        %v2507 = vadd.f32 %v2137, %v2506
        %v2508 = vpop.f32.mrb[0].mxu0
        %2509 = vmatprep.mubr.bf16.mxu0 0
        %2510 = vmatmul.mubr.bf16.gmra.mrb[0].mxu0 %v2233
        %v2511 = vpop.f32.mrb[0].mxu0
        %v2512 = vadd.f32 %v2137, %v2511
        %v2513 = vpop.f32.mrb[0].mxu0
        %v2514 = vpop.f32.mrb[0].mxu0
        %v2515 = vadd.f32 %v2137, %v2514
        %v2516 = vpop.f32.mrb[0].mxu0
        %2517 = vmatprep.mubr.bf16.mxu0 0
        %2518 = vmatmul.mubr.bf16.gmra.mrb[0].mxu0 %v2236
        %v2519 = vpop.f32.mrb[0].mxu0
        %v2520 = vadd.f32 %v2137, %v2519
        %v2521 = vpop.f32.mrb[0].mxu0
        %v2522 = vpop.f32.mrb[0].mxu0
        %v2523 = vadd.f32 %v2137, %v2522
        %v2524 = vpop.f32.mrb[0].mxu0
        %2525 = vmatprep.mubr.bf16.mxu0 0
        %2526 = vmatmul.mubr.bf16.gmra.mrb[0].mxu0 %v2239
        %v2527 = vpop.f32.mrb[0].mxu0
        %v2528 = vadd.f32 %v2137, %v2527
        %v2529 = vpop.f32.mrb[0].mxu0
        %v2530 = vpop.f32.mrb[0].mxu0
        %v2531 = vadd.f32 %v2137, %v2530
        %v2532 = vpop.f32.mrb[0].mxu0
        %2533 = vdwg.mxu0
        %v2534 = vmax.f32 %v2280, 0.0
        %v2535 = vmax.f32 %v2283, 0.0
        %v2536 = vmax.f32 %v2288, 0.0
        %v2537 = vmax.f32 %v2291, 0.0
        %v2538 = vmax.f32 %v2296, 0.0
        %v2539 = vmax.f32 %v2299, 0.0
        %v2540 = vmax.f32 %v2304, 0.0
        %v2541 = vmax.f32 %v2307, 0.0
        %v2542 = vmax.f32 %v2312, 0.0
        %v2543 = vmax.f32 %v2315, 0.0
        %v2544 = vmax.f32 %v2320, 0.0
        %v2545 = vmax.f32 %v2323, 0.0
        %v2546 = vmax.f32 %v2328, 0.0
        %v2547 = vmax.f32 %v2331, 0.0
        %v2548 = vmax.f32 %v2336, 0.0
        %v2549 = vmax.f32 %v2339, 0.0
        %v2550 = vmax.f32 %v2344, 0.0
        %v2551 = vmax.f32 %v2347, 0.0
        %v2552 = vmax.f32 %v2352, 0.0
        %v2553 = vmax.f32 %v2355, 0.0
        %v2554 = vmax.f32 %v2360, 0.0
        %v2555 = vmax.f32 %v2363, 0.0
        %v2556 = vmax.f32 %v2368, 0.0
        %v2557 = vmax.f32 %v2371, 0.0
        %v2558 = vmax.f32 %v2376, 0.0
        %v2559 = vmax.f32 %v2379, 0.0
        %v2560 = vmax.f32 %v2384, 0.0
        %v2561 = vmax.f32 %v2387, 0.0
        %v2562 = vmax.f32 %v2392, 0.0
        %v2563 = vmax.f32 %v2395, 0.0
        %v2564 = vmax.f32 %v2400, 0.0
        %v2565 = vmax.f32 %v2403, 0.0
        %v2566 = vmax.f32 %v2408, 0.0
        %v2567 = vmax.f32 %v2411, 0.0
        %v2568 = vmax.f32 %v2416, 0.0
        %v2569 = vmax.f32 %v2419, 0.0
        %v2570 = vmax.f32 %v2424, 0.0
        %v2571 = vmax.f32 %v2427, 0.0
        %v2572 = vmax.f32 %v2432, 0.0
        %v2573 = vmax.f32 %v2435, 0.0
        %v2574 = vmax.f32 %v2440, 0.0
        %v2575 = vmax.f32 %v2443, 0.0
        %v2576 = vmax.f32 %v2448, 0.0
        %v2577 = vmax.f32 %v2451, 0.0
        %v2578 = vmax.f32 %v2456, 0.0
        %v2579 = vmax.f32 %v2459, 0.0
        %v2580 = vmax.f32 %v2464, 0.0
        %v2581 = vmax.f32 %v2467, 0.0
        %v2582 = vmax.f32 %v2472, 0.0
        %v2583 = vmax.f32 %v2475, 0.0
        %v2584 = vmax.f32 %v2480, 0.0
        %v2585 = vmax.f32 %v2483, 0.0
        %v2586 = vmax.f32 %v2488, 0.0
        %v2587 = vmax.f32 %v2491, 0.0
        %v2588 = vmax.f32 %v2496, 0.0
        %v2589 = vmax.f32 %v2499, 0.0
        %v2590 = vmax.f32 %v2504, 0.0
        %v2591 = vmax.f32 %v2507, 0.0
        %v2592 = vmax.f32 %v2512, 0.0
        %v2593 = vmax.f32 %v2515, 0.0
        %v2594 = vmax.f32 %v2520, 0.0
        %v2595 = vmax.f32 %v2523, 0.0
        %v2596 = vmax.f32 %v2528, 0.0
        %v2597 = vmax.f32 %v2531, 0.0
        %v2598 = vpack.c.bf16 %v2535, %v2534
        %v2599 = vpack.c.bf16 %v2537, %v2536
        %v2600 = vpack.c.bf16 %v2539, %v2538
        %v2601 = vpack.c.bf16 %v2541, %v2540
        %v2602 = vpack.c.bf16 %v2543, %v2542
        %v2603 = vpack.c.bf16 %v2545, %v2544
        %v2604 = vpack.c.bf16 %v2547, %v2546
        %v2605 = vpack.c.bf16 %v2549, %v2548
        %v2606 = vpack.c.bf16 %v2551, %v2550
        %v2607 = vpack.c.bf16 %v2553, %v2552
        %v2608 = vpack.c.bf16 %v2555, %v2554
        %v2609 = vpack.c.bf16 %v2557, %v2556
        %v2610 = vpack.c.bf16 %v2559, %v2558
        %v2611 = vpack.c.bf16 %v2561, %v2560
        %v2612 = vpack.c.bf16 %v2563, %v2562
        %v2613 = vpack.c.bf16 %v2565, %v2564
        %v2614 = vpack.c.bf16 %v2567, %v2566
        %v2615 = vpack.c.bf16 %v2569, %v2568
        %v2616 = vpack.c.bf16 %v2571, %v2570
        %v2617 = vpack.c.bf16 %v2573, %v2572
        %v2618 = vpack.c.bf16 %v2575, %v2574
        %v2619 = vpack.c.bf16 %v2577, %v2576
        %v2620 = vpack.c.bf16 %v2579, %v2578
        %v2621 = vpack.c.bf16 %v2581, %v2580
        %v2622 = vpack.c.bf16 %v2583, %v2582
        %v2623 = vpack.c.bf16 %v2585, %v2584
        %v2624 = vpack.c.bf16 %v2587, %v2586
        %v2625 = vpack.c.bf16 %v2589, %v2588
        %v2626 = vpack.c.bf16 %v2591, %v2590
        %v2627 = vpack.c.bf16 %v2593, %v2592
        %v2628 = vpack.c.bf16 %v2595, %v2594
        %v2629 = vpack.c.bf16 %v2597, %v2596
        %v2630 = vld [vmem:[%s9] sm:$0xf]
        %v2631 = vld [vmem:[%s9 + $0x4] sm:$0x3]
        %v2632 = vld [vmem:[%s10] sm:$0x1]
        %v2634 = vlaneseq
        %v2635 = vshrl.u32 %v2634, 7
        %v2636 = vsub.s32 0, %v2635
        %v2637 = vrot.slane %v2632, %v2636
        %v2641 = vunpack.c.l.b16 %v2630
        %v2642 = vunpack.c.l.b16 %v2631
        %v2643 = vpack.c.b16 %v2642, %v2641
        %v2645 = vsel %vm2144, %v2598, 0
        %v2648 = vsel %vm2144, %v2599, 0
        %v2651 = vsel %vm2144, %v2600, 0
        %v2654 = vsel %vm2144, %v2601, 0
        %v2657 = vsel %vm2144, %v2602, 0
        %v2660 = vsel %vm2144, %v2603, 0
        %v2663 = vsel %vm2144, %v2604, 0
        %v2666 = vsel %vm2144, %v2605, 0
        %v2669 = vsel %vm2144, %v2606, 0
        %v2672 = vsel %vm2144, %v2607, 0
        %v2675 = vsel %vm2144, %v2608, 0
        %v2678 = vsel %vm2144, %v2609, 0
        %v2681 = vsel %vm2144, %v2610, 0
        %v2684 = vsel %vm2144, %v2611, 0
        %v2687 = vsel %vm2144, %v2612, 0
        %v2690 = vsel %vm2144, %v2613, 0
        %v2693 = vsel %vm2144, %v2614, 0
        %v2696 = vsel %vm2144, %v2615, 0
        %v2699 = vsel %vm2144, %v2616, 0
        %v2702 = vsel %vm2144, %v2617, 0
        %v2705 = vsel %vm2144, %v2618, 0
        %v2708 = vsel %vm2144, %v2619, 0
        %v2711 = vsel %vm2144, %v2620, 0
        %v2714 = vsel %vm2144, %v2621, 0
        %v2717 = vsel %vm2144, %v2622, 0
        %v2720 = vsel %vm2144, %v2623, 0
        %v2723 = vsel %vm2144, %v2624, 0
        %v2726 = vsel %vm2144, %v2625, 0
        %v2729 = vsel %vm2144, %v2626, 0
        %v2732 = vsel %vm2144, %v2627, 0
        %v2735 = vsel %vm2144, %v2628, 0
        %v2738 = vsel %vm2144, %v2629, 0
        %v2741 = vsel %vm2241, %v2643, 0
        %2743 = vmatprep.subr.bf16.mxu0 0
        %2744 = vmatpush1.bf16.msra.mxu0 %v2741
        %2745 = vmatprep.subr.bf16.mxu0 0
        %2746 = vmatpush1.bf16.msra.mxu0 0
        %2747 = vmatprep.subr.bf16.mxu0 0
        %2748 = vmatpush1.bf16.msra.mxu0 0
        %2749 = vmatprep.subr.bf16.mxu0 0
        %2750 = vmatpush1.bf16.msra.mxu0 0
        %2751 = vmatprep.subr.bf16.mxu0 0
        %2752 = vmatpush1.bf16.msra.mxu0 0
        %2753 = vmatprep.subr.bf16.mxu0 0
        %2754 = vmatpush1.bf16.msra.mxu0 0
        %2755 = vmatprep.subr.bf16.mxu0 0
        %2756 = vmatpush1.bf16.msra.mxu0 0
        %2757 = vmatprep.subr.bf16.mxu0 0
        %2758 = vmatpush1.bf16.msra.mxu0 0
        %2759 = vmatprep.subr.bf16.mxu0 0
        %2760 = vmatpush1.bf16.msra.mxu0 0
        %2761 = vmatprep.subr.bf16.mxu0 0
        %2762 = vmatpush1.bf16.msra.mxu0 0
        %2763 = vmatprep.subr.bf16.mxu0 0
        %2764 = vmatpush1.bf16.msra.mxu0 0
        %2765 = vmatprep.subr.bf16.mxu0 0
        %2766 = vmatpush1.bf16.msra.mxu0 0
        %2767 = vmatprep.subr.bf16.mxu0 0
        %2768 = vmatpush1.bf16.msra.mxu0 0
        %2769 = vmatprep.subr.bf16.mxu0 0
        %2770 = vmatpush1.bf16.msra.mxu0 0
        %2771 = vmatprep.subr.bf16.mxu0 0
        %2772 = vmatpush1.bf16.msra.mxu0 0
        %2773 = vmatprep.subr.bf16.mxu0 0
        %2774 = vmatpush1.bf16.msra.mxu0 0
        %2775 = vmatprep.mubr.bf16.mxu0 0
        %2776 = vmatmul.mubr.bf16.gmra.mrb[0].mxu0 %v2645
        %v2777 = vpop.f32.mrb[0].mxu0
        %v2778 = vadd.f32 %v2637, %v2777
        %v2779 = vpop.f32.mrb[0].mxu0
        %v2780 = vpop.f32.mrb[0].mxu0
        %v2781 = vadd.f32 %v2637, %v2780
        %v2782 = vpop.f32.mrb[0].mxu0
        %2783 = vmatprep.mubr.bf16.mxu0 0
        %2784 = vmatmul.mubr.bf16.gmra.mrb[0].mxu0 %v2648
        %v2785 = vpop.f32.mrb[0].mxu0
        %v2786 = vadd.f32 %v2637, %v2785
        %v2787 = vpop.f32.mrb[0].mxu0
        %v2788 = vpop.f32.mrb[0].mxu0
        %v2789 = vadd.f32 %v2637, %v2788
        %v2790 = vpop.f32.mrb[0].mxu0
        %2791 = vmatprep.mubr.bf16.mxu0 0
        %2792 = vmatmul.mubr.bf16.gmra.mrb[0].mxu0 %v2651
        %v2793 = vpop.f32.mrb[0].mxu0
        %v2794 = vadd.f32 %v2637, %v2793
        %v2795 = vpop.f32.mrb[0].mxu0
        %v2796 = vpop.f32.mrb[0].mxu0
        %v2797 = vadd.f32 %v2637, %v2796
        %v2798 = vpop.f32.mrb[0].mxu0
        %2799 = vmatprep.mubr.bf16.mxu0 0
        %2800 = vmatmul.mubr.bf16.gmra.mrb[0].mxu0 %v2654
        %v2801 = vpop.f32.mrb[0].mxu0
        %v2802 = vadd.f32 %v2637, %v2801
        %v2803 = vpop.f32.mrb[0].mxu0
        %v2804 = vpop.f32.mrb[0].mxu0
        %v2805 = vadd.f32 %v2637, %v2804
        %v2806 = vpop.f32.mrb[0].mxu0
        %2807 = vmatprep.mubr.bf16.mxu0 0
        %2808 = vmatmul.mubr.bf16.gmra.mrb[0].mxu0 %v2657
        %v2809 = vpop.f32.mrb[0].mxu0
        %v2810 = vadd.f32 %v2637, %v2809
        %v2811 = vpop.f32.mrb[0].mxu0
        %v2812 = vpop.f32.mrb[0].mxu0
        %v2813 = vadd.f32 %v2637, %v2812
        %v2814 = vpop.f32.mrb[0].mxu0
        %2815 = vmatprep.mubr.bf16.mxu0 0
        %2816 = vmatmul.mubr.bf16.gmra.mrb[0].mxu0 %v2660
        %v2817 = vpop.f32.mrb[0].mxu0
        %v2818 = vadd.f32 %v2637, %v2817
        %v2819 = vpop.f32.mrb[0].mxu0
        %v2820 = vpop.f32.mrb[0].mxu0
        %v2821 = vadd.f32 %v2637, %v2820
        %v2822 = vpop.f32.mrb[0].mxu0
        %2823 = vmatprep.mubr.bf16.mxu0 0
        %2824 = vmatmul.mubr.bf16.gmra.mrb[0].mxu0 %v2663
        %v2825 = vpop.f32.mrb[0].mxu0
        %v2826 = vadd.f32 %v2637, %v2825
        %v2827 = vpop.f32.mrb[0].mxu0
        %v2828 = vpop.f32.mrb[0].mxu0
        %v2829 = vadd.f32 %v2637, %v2828
        %v2830 = vpop.f32.mrb[0].mxu0
        %2831 = vmatprep.mubr.bf16.mxu0 0
        %2832 = vmatmul.mubr.bf16.gmra.mrb[0].mxu0 %v2666
        %v2833 = vpop.f32.mrb[0].mxu0
        %v2834 = vadd.f32 %v2637, %v2833
        %v2835 = vpop.f32.mrb[0].mxu0
        %v2836 = vpop.f32.mrb[0].mxu0
        %v2837 = vadd.f32 %v2637, %v2836
        %v2838 = vpop.f32.mrb[0].mxu0
        %2839 = vmatprep.mubr.bf16.mxu0 0
        %2840 = vmatmul.mubr.bf16.gmra.mrb[0].mxu0 %v2669
        %v2841 = vpop.f32.mrb[0].mxu0
        %v2842 = vadd.f32 %v2637, %v2841
        %v2843 = vpop.f32.mrb[0].mxu0
        %v2844 = vpop.f32.mrb[0].mxu0
        %v2845 = vadd.f32 %v2637, %v2844
        %v2846 = vpop.f32.mrb[0].mxu0
        %2847 = vmatprep.mubr.bf16.mxu0 0
        %2848 = vmatmul.mubr.bf16.gmra.mrb[0].mxu0 %v2672
        %v2849 = vpop.f32.mrb[0].mxu0
        %v2850 = vadd.f32 %v2637, %v2849
        %v2851 = vpop.f32.mrb[0].mxu0
        %v2852 = vpop.f32.mrb[0].mxu0
        %v2853 = vadd.f32 %v2637, %v2852
        %v2854 = vpop.f32.mrb[0].mxu0
        %2855 = vmatprep.mubr.bf16.mxu0 0
        %2856 = vmatmul.mubr.bf16.gmra.mrb[0].mxu0 %v2675
        %v2857 = vpop.f32.mrb[0].mxu0
        %v2858 = vadd.f32 %v2637, %v2857
        %v2859 = vpop.f32.mrb[0].mxu0
        %v2860 = vpop.f32.mrb[0].mxu0
        %v2861 = vadd.f32 %v2637, %v2860
        %v2862 = vpop.f32.mrb[0].mxu0
        %2863 = vmatprep.mubr.bf16.mxu0 0
        %2864 = vmatmul.mubr.bf16.gmra.mrb[0].mxu0 %v2678
        %v2865 = vpop.f32.mrb[0].mxu0
        %v2866 = vadd.f32 %v2637, %v2865
        %v2867 = vpop.f32.mrb[0].mxu0
        %v2868 = vpop.f32.mrb[0].mxu0
        %v2869 = vadd.f32 %v2637, %v2868
        %v2870 = vpop.f32.mrb[0].mxu0
        %2871 = vmatprep.mubr.bf16.mxu0 0
        %2872 = vmatmul.mubr.bf16.gmra.mrb[0].mxu0 %v2681
        %v2873 = vpop.f32.mrb[0].mxu0
        %v2874 = vadd.f32 %v2637, %v2873
        %v2875 = vpop.f32.mrb[0].mxu0
        %v2876 = vpop.f32.mrb[0].mxu0
        %v2877 = vadd.f32 %v2637, %v2876
        %v2878 = vpop.f32.mrb[0].mxu0
        %2879 = vmatprep.mubr.bf16.mxu0 0
        %2880 = vmatmul.mubr.bf16.gmra.mrb[0].mxu0 %v2684
        %v2881 = vpop.f32.mrb[0].mxu0
        %v2882 = vadd.f32 %v2637, %v2881
        %v2883 = vpop.f32.mrb[0].mxu0
        %v2884 = vpop.f32.mrb[0].mxu0
        %v2885 = vadd.f32 %v2637, %v2884
        %v2886 = vpop.f32.mrb[0].mxu0
        %2887 = vmatprep.mubr.bf16.mxu0 0
        %2888 = vmatmul.mubr.bf16.gmra.mrb[0].mxu0 %v2687
        %v2889 = vpop.f32.mrb[0].mxu0
        %v2890 = vadd.f32 %v2637, %v2889
        %v2891 = vpop.f32.mrb[0].mxu0
        %v2892 = vpop.f32.mrb[0].mxu0
        %v2893 = vadd.f32 %v2637, %v2892
        %v2894 = vpop.f32.mrb[0].mxu0
        %2895 = vmatprep.mubr.bf16.mxu0 0
        %2896 = vmatmul.mubr.bf16.gmra.mrb[0].mxu0 %v2690
        %v2897 = vpop.f32.mrb[0].mxu0
        %v2898 = vadd.f32 %v2637, %v2897
        %v2899 = vpop.f32.mrb[0].mxu0
        %v2900 = vpop.f32.mrb[0].mxu0
        %v2901 = vadd.f32 %v2637, %v2900
        %v2902 = vpop.f32.mrb[0].mxu0
        %2903 = vmatprep.mubr.bf16.mxu0 0
        %2904 = vmatmul.mubr.bf16.gmra.mrb[0].mxu0 %v2693
        %v2905 = vpop.f32.mrb[0].mxu0
        %v2906 = vadd.f32 %v2637, %v2905
        %v2907 = vpop.f32.mrb[0].mxu0
        %v2908 = vpop.f32.mrb[0].mxu0
        %v2909 = vadd.f32 %v2637, %v2908
        %v2910 = vpop.f32.mrb[0].mxu0
        %2911 = vmatprep.mubr.bf16.mxu0 0
        %2912 = vmatmul.mubr.bf16.gmra.mrb[0].mxu0 %v2696
        %v2913 = vpop.f32.mrb[0].mxu0
        %v2914 = vadd.f32 %v2637, %v2913
        %v2915 = vpop.f32.mrb[0].mxu0
        %v2916 = vpop.f32.mrb[0].mxu0
        %v2917 = vadd.f32 %v2637, %v2916
        %v2918 = vpop.f32.mrb[0].mxu0
        %2919 = vmatprep.mubr.bf16.mxu0 0
        %2920 = vmatmul.mubr.bf16.gmra.mrb[0].mxu0 %v2699
        %v2921 = vpop.f32.mrb[0].mxu0
        %v2922 = vadd.f32 %v2637, %v2921
        %v2923 = vpop.f32.mrb[0].mxu0
        %v2924 = vpop.f32.mrb[0].mxu0
        %v2925 = vadd.f32 %v2637, %v2924
        %v2926 = vpop.f32.mrb[0].mxu0
        %2927 = vmatprep.mubr.bf16.mxu0 0
        %2928 = vmatmul.mubr.bf16.gmra.mrb[0].mxu0 %v2702
        %v2929 = vpop.f32.mrb[0].mxu0
        %v2930 = vadd.f32 %v2637, %v2929
        %v2931 = vpop.f32.mrb[0].mxu0
        %v2932 = vpop.f32.mrb[0].mxu0
        %v2933 = vadd.f32 %v2637, %v2932
        %v2934 = vpop.f32.mrb[0].mxu0
        %2935 = vmatprep.mubr.bf16.mxu0 0
        %2936 = vmatmul.mubr.bf16.gmra.mrb[0].mxu0 %v2705
        %v2937 = vpop.f32.mrb[0].mxu0
        %v2938 = vadd.f32 %v2637, %v2937
        %v2939 = vpop.f32.mrb[0].mxu0
        %v2940 = vpop.f32.mrb[0].mxu0
        %v2941 = vadd.f32 %v2637, %v2940
        %v2942 = vpop.f32.mrb[0].mxu0
        %2943 = vmatprep.mubr.bf16.mxu0 0
        %2944 = vmatmul.mubr.bf16.gmra.mrb[0].mxu0 %v2708
        %v2945 = vpop.f32.mrb[0].mxu0
        %v2946 = vadd.f32 %v2637, %v2945
        %v2947 = vpop.f32.mrb[0].mxu0
        %v2948 = vpop.f32.mrb[0].mxu0
        %v2949 = vadd.f32 %v2637, %v2948
        %v2950 = vpop.f32.mrb[0].mxu0
        %2951 = vmatprep.mubr.bf16.mxu0 0
        %2952 = vmatmul.mubr.bf16.gmra.mrb[0].mxu0 %v2711
        %v2953 = vpop.f32.mrb[0].mxu0
        %v2954 = vadd.f32 %v2637, %v2953
        %v2955 = vpop.f32.mrb[0].mxu0
        %v2956 = vpop.f32.mrb[0].mxu0
        %v2957 = vadd.f32 %v2637, %v2956
        %v2958 = vpop.f32.mrb[0].mxu0
        %2959 = vmatprep.mubr.bf16.mxu0 0
        %2960 = vmatmul.mubr.bf16.gmra.mrb[0].mxu0 %v2714
        %v2961 = vpop.f32.mrb[0].mxu0
        %v2962 = vadd.f32 %v2637, %v2961
        %v2963 = vpop.f32.mrb[0].mxu0
        %v2964 = vpop.f32.mrb[0].mxu0
        %v2965 = vadd.f32 %v2637, %v2964
        %v2966 = vpop.f32.mrb[0].mxu0
        %2967 = vmatprep.mubr.bf16.mxu0 0
        %2968 = vmatmul.mubr.bf16.gmra.mrb[0].mxu0 %v2717
        %v2969 = vpop.f32.mrb[0].mxu0
        %v2970 = vadd.f32 %v2637, %v2969
        %v2971 = vpop.f32.mrb[0].mxu0
        %v2972 = vpop.f32.mrb[0].mxu0
        %v2973 = vadd.f32 %v2637, %v2972
        %v2974 = vpop.f32.mrb[0].mxu0
        %2975 = vmatprep.mubr.bf16.mxu0 0
        %2976 = vmatmul.mubr.bf16.gmra.mrb[0].mxu0 %v2720
        %v2977 = vpop.f32.mrb[0].mxu0
        %v2978 = vadd.f32 %v2637, %v2977
        %v2979 = vpop.f32.mrb[0].mxu0
        %v2980 = vpop.f32.mrb[0].mxu0
        %v2981 = vadd.f32 %v2637, %v2980
        %v2982 = vpop.f32.mrb[0].mxu0
        %2983 = vmatprep.mubr.bf16.mxu0 0
        %2984 = vmatmul.mubr.bf16.gmra.mrb[0].mxu0 %v2723
        %v2985 = vpop.f32.mrb[0].mxu0
        %v2986 = vadd.f32 %v2637, %v2985
        %v2987 = vpop.f32.mrb[0].mxu0
        %v2988 = vpop.f32.mrb[0].mxu0
        %v2989 = vadd.f32 %v2637, %v2988
        %v2990 = vpop.f32.mrb[0].mxu0
        %2991 = vmatprep.mubr.bf16.mxu0 0
        %2992 = vmatmul.mubr.bf16.gmra.mrb[0].mxu0 %v2726
        %v2993 = vpop.f32.mrb[0].mxu0
        %v2994 = vadd.f32 %v2637, %v2993
        %v2995 = vpop.f32.mrb[0].mxu0
        %v2996 = vpop.f32.mrb[0].mxu0
        %v2997 = vadd.f32 %v2637, %v2996
        %v2998 = vpop.f32.mrb[0].mxu0
        %2999 = vmatprep.mubr.bf16.mxu0 0
        %3000 = vmatmul.mubr.bf16.gmra.mrb[0].mxu0 %v2729
        %v3001 = vpop.f32.mrb[0].mxu0
        %v3002 = vadd.f32 %v2637, %v3001
        %v3003 = vpop.f32.mrb[0].mxu0
        %v3004 = vpop.f32.mrb[0].mxu0
        %v3005 = vadd.f32 %v2637, %v3004
        %v3006 = vpop.f32.mrb[0].mxu0
        %3007 = vmatprep.mubr.bf16.mxu0 0
        %3008 = vmatmul.mubr.bf16.gmra.mrb[0].mxu0 %v2732
        %v3009 = vpop.f32.mrb[0].mxu0
        %v3010 = vadd.f32 %v2637, %v3009
        %v3011 = vpop.f32.mrb[0].mxu0
        %v3012 = vpop.f32.mrb[0].mxu0
        %v3013 = vadd.f32 %v2637, %v3012
        %v3014 = vpop.f32.mrb[0].mxu0
        %3015 = vmatprep.mubr.bf16.mxu0 0
        %3016 = vmatmul.mubr.bf16.gmra.mrb[0].mxu0 %v2735
        %v3017 = vpop.f32.mrb[0].mxu0
        %v3018 = vadd.f32 %v2637, %v3017
        %v3019 = vpop.f32.mrb[0].mxu0
        %v3020 = vpop.f32.mrb[0].mxu0
        %v3021 = vadd.f32 %v2637, %v3020
        %v3022 = vpop.f32.mrb[0].mxu0
        %3023 = vmatprep.mubr.bf16.mxu0 0
        %3024 = vmatmul.mubr.bf16.gmra.mrb[0].mxu0 %v2738
        %v3025 = vpop.f32.mrb[0].mxu0
        %v3026 = vadd.f32 %v2637, %v3025
        %v3027 = vpop.f32.mrb[0].mxu0
        %v3028 = vpop.f32.mrb[0].mxu0
        %v3029 = vadd.f32 %v2637, %v3028
        %v3030 = vpop.f32.mrb[0].mxu0
        %3031 = vdwg.mxu0
        %v3032 = vmax.f32 %v2778, 0.0
        %v3033 = vmax.f32 %v2781, 0.0
        %v3034 = vmax.f32 %v2786, 0.0
        %v3035 = vmax.f32 %v2789, 0.0
        %v3036 = vmax.f32 %v2794, 0.0
        %v3037 = vmax.f32 %v2797, 0.0
        %v3038 = vmax.f32 %v2802, 0.0
        %v3039 = vmax.f32 %v2805, 0.0
        %v3040 = vmax.f32 %v2810, 0.0
        %v3041 = vmax.f32 %v2813, 0.0
        %v3042 = vmax.f32 %v2818, 0.0
        %v3043 = vmax.f32 %v2821, 0.0
        %v3044 = vmax.f32 %v2826, 0.0
        %v3045 = vmax.f32 %v2829, 0.0
        %v3046 = vmax.f32 %v2834, 0.0
        %v3047 = vmax.f32 %v2837, 0.0
        %v3048 = vmax.f32 %v2842, 0.0
        %v3049 = vmax.f32 %v2845, 0.0
        %v3050 = vmax.f32 %v2850, 0.0
        %v3051 = vmax.f32 %v2853, 0.0
        %v3052 = vmax.f32 %v2858, 0.0
        %v3053 = vmax.f32 %v2861, 0.0
        %v3054 = vmax.f32 %v2866, 0.0
        %v3055 = vmax.f32 %v2869, 0.0
        %v3056 = vmax.f32 %v2874, 0.0
        %v3057 = vmax.f32 %v2877, 0.0
        %v3058 = vmax.f32 %v2882, 0.0
        %v3059 = vmax.f32 %v2885, 0.0
        %v3060 = vmax.f32 %v2890, 0.0
        %v3061 = vmax.f32 %v2893, 0.0
        %v3062 = vmax.f32 %v2898, 0.0
        %v3063 = vmax.f32 %v2901, 0.0
        %v3064 = vmax.f32 %v2906, 0.0
        %v3065 = vmax.f32 %v2909, 0.0
        %v3066 = vmax.f32 %v2914, 0.0
        %v3067 = vmax.f32 %v2917, 0.0
        %v3068 = vmax.f32 %v2922, 0.0
        %v3069 = vmax.f32 %v2925, 0.0
        %v3070 = vmax.f32 %v2930, 0.0
        %v3071 = vmax.f32 %v2933, 0.0
        %v3072 = vmax.f32 %v2938, 0.0
        %v3073 = vmax.f32 %v2941, 0.0
        %v3074 = vmax.f32 %v2946, 0.0
        %v3075 = vmax.f32 %v2949, 0.0
        %v3076 = vmax.f32 %v2954, 0.0
        %v3077 = vmax.f32 %v2957, 0.0
        %v3078 = vmax.f32 %v2962, 0.0
        %v3079 = vmax.f32 %v2965, 0.0
        %v3080 = vmax.f32 %v2970, 0.0
        %v3081 = vmax.f32 %v2973, 0.0
        %v3082 = vmax.f32 %v2978, 0.0
        %v3083 = vmax.f32 %v2981, 0.0
        %v3084 = vmax.f32 %v2986, 0.0
        %v3085 = vmax.f32 %v2989, 0.0
        %v3086 = vmax.f32 %v2994, 0.0
        %v3087 = vmax.f32 %v2997, 0.0
        %v3088 = vmax.f32 %v3002, 0.0
        %v3089 = vmax.f32 %v3005, 0.0
        %v3090 = vmax.f32 %v3010, 0.0
        %v3091 = vmax.f32 %v3013, 0.0
        %v3092 = vmax.f32 %v3018, 0.0
        %v3093 = vmax.f32 %v3021, 0.0
        %v3094 = vmax.f32 %v3026, 0.0
        %v3095 = vmax.f32 %v3029, 0.0
        %v3096 = vpack.c.bf16 %v3033, %v3032
        %v3097 = vpack.c.bf16 %v3035, %v3034
        %v3098 = vpack.c.bf16 %v3037, %v3036
        %v3099 = vpack.c.bf16 %v3039, %v3038
        %v3100 = vpack.c.bf16 %v3041, %v3040
        %v3101 = vpack.c.bf16 %v3043, %v3042
        %v3102 = vpack.c.bf16 %v3045, %v3044
        %v3103 = vpack.c.bf16 %v3047, %v3046
        %v3104 = vpack.c.bf16 %v3049, %v3048
        %v3105 = vpack.c.bf16 %v3051, %v3050
        %v3106 = vpack.c.bf16 %v3053, %v3052
        %v3107 = vpack.c.bf16 %v3055, %v3054
        %v3108 = vpack.c.bf16 %v3057, %v3056
        %v3109 = vpack.c.bf16 %v3059, %v3058
        %v3110 = vpack.c.bf16 %v3061, %v3060
        %v3111 = vpack.c.bf16 %v3063, %v3062
        %v3112 = vpack.c.bf16 %v3065, %v3064
        %v3113 = vpack.c.bf16 %v3067, %v3066
        %v3114 = vpack.c.bf16 %v3069, %v3068
        %v3115 = vpack.c.bf16 %v3071, %v3070
        %v3116 = vpack.c.bf16 %v3073, %v3072
        %v3117 = vpack.c.bf16 %v3075, %v3074
        %v3118 = vpack.c.bf16 %v3077, %v3076
        %v3119 = vpack.c.bf16 %v3079, %v3078
        %v3120 = vpack.c.bf16 %v3081, %v3080
        %v3121 = vpack.c.bf16 %v3083, %v3082
        %v3122 = vpack.c.bf16 %v3085, %v3084
        %v3123 = vpack.c.bf16 %v3087, %v3086
        %v3124 = vpack.c.bf16 %v3089, %v3088
        %v3125 = vpack.c.bf16 %v3091, %v3090
        %v3126 = vpack.c.bf16 %v3093, %v3092
        %v3127 = vpack.c.bf16 %v3095, %v3094
        %v3128 = vld [vmem:[%s11] sm:$0xf]
        %v3129 = vld [vmem:[%s11 + $0x4] sm:$0xf]
        %v3130 = vld [vmem:[%s11 + $0x8] sm:$0xf]
        %v3131 = vld [vmem:[%s11 + $0xc] sm:$0xf]
        %v3132 = vld [vmem:[%s11 + $0x10] sm:$0xf]
        %v3133 = vld [vmem:[%s11 + $0x14] sm:$0xf]
        %v3134 = vld [vmem:[%s11 + $0x18] sm:$0xf]
        %v3135 = vld [vmem:[%s11 + $0x1c] sm:$0xf]
        %v3136 = vld [vmem:[%s12] sm:$0x1]
        %v3138 = vlaneseq
        %v3139 = vshrl.u32 %v3138, 7
        %v3140 = vsub.s32 0, %v3139
        %v3141 = vrot.slane %v3136, %v3140
        %v3151 = vunpack.c.l.b16 %v3128
        %v3152 = vunpack.c.l.b16 %v3129
        %v3153 = vunpack.c.l.b16 %v3130
        %v3154 = vunpack.c.l.b16 %v3131
        %v3155 = vunpack.c.l.b16 %v3132
        %v3156 = vunpack.c.l.b16 %v3133
        %v3157 = vunpack.c.l.b16 %v3134
        %v3158 = vunpack.c.l.b16 %v3135
        %v3159 = vpack.c.b16 %v3152, %v3151
        %v3160 = vpack.c.b16 %v3154, %v3153
        %v3161 = vpack.c.b16 %v3156, %v3155
        %v3162 = vpack.c.b16 %v3158, %v3157
        %v3168 = vsel %vm1648, %v3096, 0
        %v3171 = vsel %vm1648, %v3097, 0
        %v3174 = vsel %vm1648, %v3098, 0
        %v3177 = vsel %vm1648, %v3099, 0
        %v3180 = vsel %vm1648, %v3100, 0
        %v3183 = vsel %vm1648, %v3101, 0
        %v3186 = vsel %vm1648, %v3102, 0
        %v3189 = vsel %vm1648, %v3103, 0
        %v3192 = vsel %vm1648, %v3104, 0
        %v3195 = vsel %vm1648, %v3105, 0
        %v3198 = vsel %vm1648, %v3106, 0
        %v3201 = vsel %vm1648, %v3107, 0
        %v3204 = vsel %vm1648, %v3108, 0
        %v3207 = vsel %vm1648, %v3109, 0
        %v3210 = vsel %vm1648, %v3110, 0
        %v3213 = vsel %vm1648, %v3111, 0
        %v3216 = vsel %vm1648, %v3112, 0
        %v3219 = vsel %vm1648, %v3113, 0
        %v3222 = vsel %vm1648, %v3114, 0
        %v3225 = vsel %vm1648, %v3115, 0
        %v3228 = vsel %vm1648, %v3116, 0
        %v3231 = vsel %vm1648, %v3117, 0
        %v3234 = vsel %vm1648, %v3118, 0
        %v3237 = vsel %vm1648, %v3119, 0
        %v3240 = vsel %vm1648, %v3120, 0
        %v3243 = vsel %vm1648, %v3121, 0
        %v3246 = vsel %vm1648, %v3122, 0
        %v3249 = vsel %vm1648, %v3123, 0
        %v3252 = vsel %vm1648, %v3124, 0
        %v3255 = vsel %vm1648, %v3125, 0
        %v3258 = vsel %vm1648, %v3126, 0
        %v3261 = vsel %vm1648, %v3127, 0
        %3263 = vmatprep.subr.bf16.mxu0 0
        %3264 = vmatpush1.bf16.msra.mxu0 %v3159
        %3265 = vmatprep.subr.bf16.mxu0 0
        %3266 = vmatpush1.bf16.msra.mxu0 %v3160
        %3267 = vmatprep.subr.bf16.mxu0 0
        %3268 = vmatpush1.bf16.msra.mxu0 %v3161
        %3269 = vmatprep.subr.bf16.mxu0 0
        %3270 = vmatpush1.bf16.msra.mxu0 %v3162
        %3271 = vmatprep.subr.bf16.mxu0 0
        %3272 = vmatpush1.bf16.msra.mxu0 0
        %3273 = vmatprep.subr.bf16.mxu0 0
        %3274 = vmatpush1.bf16.msra.mxu0 0
        %3275 = vmatprep.subr.bf16.mxu0 0
        %3276 = vmatpush1.bf16.msra.mxu0 0
        %3277 = vmatprep.subr.bf16.mxu0 0
        %3278 = vmatpush1.bf16.msra.mxu0 0
        %3279 = vmatprep.subr.bf16.mxu0 0
        %3280 = vmatpush1.bf16.msra.mxu0 0
        %3281 = vmatprep.subr.bf16.mxu0 0
        %3282 = vmatpush1.bf16.msra.mxu0 0
        %3283 = vmatprep.subr.bf16.mxu0 0
        %3284 = vmatpush1.bf16.msra.mxu0 0
        %3285 = vmatprep.subr.bf16.mxu0 0
        %3286 = vmatpush1.bf16.msra.mxu0 0
        %3287 = vmatprep.subr.bf16.mxu0 0
        %3288 = vmatpush1.bf16.msra.mxu0 0
        %3289 = vmatprep.subr.bf16.mxu0 0
        %3290 = vmatpush1.bf16.msra.mxu0 0
        %3291 = vmatprep.subr.bf16.mxu0 0
        %3292 = vmatpush1.bf16.msra.mxu0 0
        %3293 = vmatprep.subr.bf16.mxu0 0
        %3294 = vmatpush1.bf16.msra.mxu0 0
        %3295 = vmatprep.mubr.bf16.mxu0 0
        %3296 = vmatmul.mubr.bf16.gmra.mrb[0].mxu0 %v3168
        %v3297 = vpop.f32.mrb[0].mxu0
        %v3298 = vadd.f32 %v3141, %v3297
        %v3299 = vpop.f32.mrb[0].mxu0
        %v3300 = vpop.f32.mrb[0].mxu0
        %v3301 = vadd.f32 %v3141, %v3300
        %v3302 = vpop.f32.mrb[0].mxu0
        %3303 = vmatprep.mubr.bf16.mxu0 0
        %3304 = vmatmul.mubr.bf16.gmra.mrb[0].mxu0 %v3171
        %v3305 = vpop.f32.mrb[0].mxu0
        %v3306 = vadd.f32 %v3141, %v3305
        %v3307 = vpop.f32.mrb[0].mxu0
        %v3308 = vpop.f32.mrb[0].mxu0
        %v3309 = vadd.f32 %v3141, %v3308
        %v3310 = vpop.f32.mrb[0].mxu0
        %3311 = vmatprep.mubr.bf16.mxu0 0
        %3312 = vmatmul.mubr.bf16.gmra.mrb[0].mxu0 %v3174
        %v3313 = vpop.f32.mrb[0].mxu0
        %v3314 = vadd.f32 %v3141, %v3313
        %v3315 = vpop.f32.mrb[0].mxu0
        %v3316 = vpop.f32.mrb[0].mxu0
        %v3317 = vadd.f32 %v3141, %v3316
        %v3318 = vpop.f32.mrb[0].mxu0
        %3319 = vmatprep.mubr.bf16.mxu0 0
        %3320 = vmatmul.mubr.bf16.gmra.mrb[0].mxu0 %v3177
        %v3321 = vpop.f32.mrb[0].mxu0
        %v3322 = vadd.f32 %v3141, %v3321
        %v3323 = vpop.f32.mrb[0].mxu0
        %v3324 = vpop.f32.mrb[0].mxu0
        %v3325 = vadd.f32 %v3141, %v3324
        %v3326 = vpop.f32.mrb[0].mxu0
        %3327 = vmatprep.mubr.bf16.mxu0 0
        %3328 = vmatmul.mubr.bf16.gmra.mrb[0].mxu0 %v3180
        %v3329 = vpop.f32.mrb[0].mxu0
        %v3330 = vadd.f32 %v3141, %v3329
        %v3331 = vpop.f32.mrb[0].mxu0
        %v3332 = vpop.f32.mrb[0].mxu0
        %v3333 = vadd.f32 %v3141, %v3332
        %v3334 = vpop.f32.mrb[0].mxu0
        %3335 = vmatprep.mubr.bf16.mxu0 0
        %3336 = vmatmul.mubr.bf16.gmra.mrb[0].mxu0 %v3183
        %v3337 = vpop.f32.mrb[0].mxu0
        %v3338 = vadd.f32 %v3141, %v3337
        %v3339 = vpop.f32.mrb[0].mxu0
        %v3340 = vpop.f32.mrb[0].mxu0
        %v3341 = vadd.f32 %v3141, %v3340
        %v3342 = vpop.f32.mrb[0].mxu0
        %3343 = vmatprep.mubr.bf16.mxu0 0
        %3344 = vmatmul.mubr.bf16.gmra.mrb[0].mxu0 %v3186
        %v3345 = vpop.f32.mrb[0].mxu0
        %v3346 = vadd.f32 %v3141, %v3345
        %v3347 = vpop.f32.mrb[0].mxu0
        %v3348 = vpop.f32.mrb[0].mxu0
        %v3349 = vadd.f32 %v3141, %v3348
        %v3350 = vpop.f32.mrb[0].mxu0
        %3351 = vmatprep.mubr.bf16.mxu0 0
        %3352 = vmatmul.mubr.bf16.gmra.mrb[0].mxu0 %v3189
        %v3353 = vpop.f32.mrb[0].mxu0
        %v3354 = vadd.f32 %v3141, %v3353
        %v3355 = vpop.f32.mrb[0].mxu0
        %v3356 = vpop.f32.mrb[0].mxu0
        %v3357 = vadd.f32 %v3141, %v3356
        %v3358 = vpop.f32.mrb[0].mxu0
        %3359 = vmatprep.mubr.bf16.mxu0 0
        %3360 = vmatmul.mubr.bf16.gmra.mrb[0].mxu0 %v3192
        %v3361 = vpop.f32.mrb[0].mxu0
        %v3362 = vadd.f32 %v3141, %v3361
        %v3363 = vpop.f32.mrb[0].mxu0
        %v3364 = vpop.f32.mrb[0].mxu0
        %v3365 = vadd.f32 %v3141, %v3364
        %v3366 = vpop.f32.mrb[0].mxu0
        %3367 = vmatprep.mubr.bf16.mxu0 0
        %3368 = vmatmul.mubr.bf16.gmra.mrb[0].mxu0 %v3195
        %v3369 = vpop.f32.mrb[0].mxu0
        %v3370 = vadd.f32 %v3141, %v3369
        %v3371 = vpop.f32.mrb[0].mxu0
        %v3372 = vpop.f32.mrb[0].mxu0
        %v3373 = vadd.f32 %v3141, %v3372
        %v3374 = vpop.f32.mrb[0].mxu0
        %3375 = vmatprep.mubr.bf16.mxu0 0
        %3376 = vmatmul.mubr.bf16.gmra.mrb[0].mxu0 %v3198
        %v3377 = vpop.f32.mrb[0].mxu0
        %v3378 = vadd.f32 %v3141, %v3377
        %v3379 = vpop.f32.mrb[0].mxu0
        %v3380 = vpop.f32.mrb[0].mxu0
        %v3381 = vadd.f32 %v3141, %v3380
        %v3382 = vpop.f32.mrb[0].mxu0
        %3383 = vmatprep.mubr.bf16.mxu0 0
        %3384 = vmatmul.mubr.bf16.gmra.mrb[0].mxu0 %v3201
        %v3385 = vpop.f32.mrb[0].mxu0
        %v3386 = vadd.f32 %v3141, %v3385
        %v3387 = vpop.f32.mrb[0].mxu0
        %v3388 = vpop.f32.mrb[0].mxu0
        %v3389 = vadd.f32 %v3141, %v3388
        %v3390 = vpop.f32.mrb[0].mxu0
        %3391 = vmatprep.mubr.bf16.mxu0 0
        %3392 = vmatmul.mubr.bf16.gmra.mrb[0].mxu0 %v3204
        %v3393 = vpop.f32.mrb[0].mxu0
        %v3394 = vadd.f32 %v3141, %v3393
        %v3395 = vpop.f32.mrb[0].mxu0
        %v3396 = vpop.f32.mrb[0].mxu0
        %v3397 = vadd.f32 %v3141, %v3396
        %v3398 = vpop.f32.mrb[0].mxu0
        %3399 = vmatprep.mubr.bf16.mxu0 0
        %3400 = vmatmul.mubr.bf16.gmra.mrb[0].mxu0 %v3207
        %v3401 = vpop.f32.mrb[0].mxu0
        %v3402 = vadd.f32 %v3141, %v3401
        %v3403 = vpop.f32.mrb[0].mxu0
        %v3404 = vpop.f32.mrb[0].mxu0
        %v3405 = vadd.f32 %v3141, %v3404
        %v3406 = vpop.f32.mrb[0].mxu0
        %3407 = vmatprep.mubr.bf16.mxu0 0
        %3408 = vmatmul.mubr.bf16.gmra.mrb[0].mxu0 %v3210
        %v3409 = vpop.f32.mrb[0].mxu0
        %v3410 = vadd.f32 %v3141, %v3409
        %v3411 = vpop.f32.mrb[0].mxu0
        %v3412 = vpop.f32.mrb[0].mxu0
        %v3413 = vadd.f32 %v3141, %v3412
        %v3414 = vpop.f32.mrb[0].mxu0
        %3415 = vmatprep.mubr.bf16.mxu0 0
        %3416 = vmatmul.mubr.bf16.gmra.mrb[0].mxu0 %v3213
        %v3417 = vpop.f32.mrb[0].mxu0
        %v3418 = vadd.f32 %v3141, %v3417
        %v3419 = vpop.f32.mrb[0].mxu0
        %v3420 = vpop.f32.mrb[0].mxu0
        %v3421 = vadd.f32 %v3141, %v3420
        %v3422 = vpop.f32.mrb[0].mxu0
        %3423 = vmatprep.mubr.bf16.mxu0 0
        %3424 = vmatmul.mubr.bf16.gmra.mrb[0].mxu0 %v3216
        %v3425 = vpop.f32.mrb[0].mxu0
        %v3426 = vadd.f32 %v3141, %v3425
        %v3427 = vpop.f32.mrb[0].mxu0
        %v3428 = vpop.f32.mrb[0].mxu0
        %v3429 = vadd.f32 %v3141, %v3428
        %v3430 = vpop.f32.mrb[0].mxu0
        %3431 = vmatprep.mubr.bf16.mxu0 0
        %3432 = vmatmul.mubr.bf16.gmra.mrb[0].mxu0 %v3219
        %v3433 = vpop.f32.mrb[0].mxu0
        %v3434 = vadd.f32 %v3141, %v3433
        %v3435 = vpop.f32.mrb[0].mxu0
        %v3436 = vpop.f32.mrb[0].mxu0
        %v3437 = vadd.f32 %v3141, %v3436
        %v3438 = vpop.f32.mrb[0].mxu0
        %3439 = vmatprep.mubr.bf16.mxu0 0
        %3440 = vmatmul.mubr.bf16.gmra.mrb[0].mxu0 %v3222
        %v3441 = vpop.f32.mrb[0].mxu0
        %v3442 = vadd.f32 %v3141, %v3441
        %v3443 = vpop.f32.mrb[0].mxu0
        %v3444 = vpop.f32.mrb[0].mxu0
        %v3445 = vadd.f32 %v3141, %v3444
        %v3446 = vpop.f32.mrb[0].mxu0
        %3447 = vmatprep.mubr.bf16.mxu0 0
        %3448 = vmatmul.mubr.bf16.gmra.mrb[0].mxu0 %v3225
        %v3449 = vpop.f32.mrb[0].mxu0
        %v3450 = vadd.f32 %v3141, %v3449
        %v3451 = vpop.f32.mrb[0].mxu0
        %v3452 = vpop.f32.mrb[0].mxu0
        %v3453 = vadd.f32 %v3141, %v3452
        %v3454 = vpop.f32.mrb[0].mxu0
        %3455 = vmatprep.mubr.bf16.mxu0 0
        %3456 = vmatmul.mubr.bf16.gmra.mrb[0].mxu0 %v3228
        %v3457 = vpop.f32.mrb[0].mxu0
        %v3458 = vadd.f32 %v3141, %v3457
        %v3459 = vpop.f32.mrb[0].mxu0
        %v3460 = vpop.f32.mrb[0].mxu0
        %v3461 = vadd.f32 %v3141, %v3460
        %v3462 = vpop.f32.mrb[0].mxu0
        %3463 = vmatprep.mubr.bf16.mxu0 0
        %3464 = vmatmul.mubr.bf16.gmra.mrb[0].mxu0 %v3231
        %v3465 = vpop.f32.mrb[0].mxu0
        %v3466 = vadd.f32 %v3141, %v3465
        %v3467 = vpop.f32.mrb[0].mxu0
        %v3468 = vpop.f32.mrb[0].mxu0
        %v3469 = vadd.f32 %v3141, %v3468
        %v3470 = vpop.f32.mrb[0].mxu0
        %3471 = vmatprep.mubr.bf16.mxu0 0
        %3472 = vmatmul.mubr.bf16.gmra.mrb[0].mxu0 %v3234
        %v3473 = vpop.f32.mrb[0].mxu0
        %v3474 = vadd.f32 %v3141, %v3473
        %v3475 = vpop.f32.mrb[0].mxu0
        %v3476 = vpop.f32.mrb[0].mxu0
        %v3477 = vadd.f32 %v3141, %v3476
        %v3478 = vpop.f32.mrb[0].mxu0
        %3479 = vmatprep.mubr.bf16.mxu0 0
        %3480 = vmatmul.mubr.bf16.gmra.mrb[0].mxu0 %v3237
        %v3481 = vpop.f32.mrb[0].mxu0
        %v3482 = vadd.f32 %v3141, %v3481
        %v3483 = vpop.f32.mrb[0].mxu0
        %v3484 = vpop.f32.mrb[0].mxu0
        %v3485 = vadd.f32 %v3141, %v3484
        %v3486 = vpop.f32.mrb[0].mxu0
        %3487 = vmatprep.mubr.bf16.mxu0 0
        %3488 = vmatmul.mubr.bf16.gmra.mrb[0].mxu0 %v3240
        %v3489 = vpop.f32.mrb[0].mxu0
        %v3490 = vadd.f32 %v3141, %v3489
        %v3491 = vpop.f32.mrb[0].mxu0
        %v3492 = vpop.f32.mrb[0].mxu0
        %v3493 = vadd.f32 %v3141, %v3492
        %v3494 = vpop.f32.mrb[0].mxu0
        %3495 = vmatprep.mubr.bf16.mxu0 0
        %3496 = vmatmul.mubr.bf16.gmra.mrb[0].mxu0 %v3243
        %v3497 = vpop.f32.mrb[0].mxu0
        %v3498 = vadd.f32 %v3141, %v3497
        %v3499 = vpop.f32.mrb[0].mxu0
        %v3500 = vpop.f32.mrb[0].mxu0
        %v3501 = vadd.f32 %v3141, %v3500
        %v3502 = vpop.f32.mrb[0].mxu0
        %3503 = vmatprep.mubr.bf16.mxu0 0
        %3504 = vmatmul.mubr.bf16.gmra.mrb[0].mxu0 %v3246
        %v3505 = vpop.f32.mrb[0].mxu0
        %v3506 = vadd.f32 %v3141, %v3505
        %v3507 = vpop.f32.mrb[0].mxu0
        %v3508 = vpop.f32.mrb[0].mxu0
        %v3509 = vadd.f32 %v3141, %v3508
        %v3510 = vpop.f32.mrb[0].mxu0
        %3511 = vmatprep.mubr.bf16.mxu0 0
        %3512 = vmatmul.mubr.bf16.gmra.mrb[0].mxu0 %v3249
        %v3513 = vpop.f32.mrb[0].mxu0
        %v3514 = vadd.f32 %v3141, %v3513
        %v3515 = vpop.f32.mrb[0].mxu0
        %v3516 = vpop.f32.mrb[0].mxu0
        %v3517 = vadd.f32 %v3141, %v3516
        %v3518 = vpop.f32.mrb[0].mxu0
        %3519 = vmatprep.mubr.bf16.mxu0 0
        %3520 = vmatmul.mubr.bf16.gmra.mrb[0].mxu0 %v3252
        %v3521 = vpop.f32.mrb[0].mxu0
        %v3522 = vadd.f32 %v3141, %v3521
        %v3523 = vpop.f32.mrb[0].mxu0
        %v3524 = vpop.f32.mrb[0].mxu0
        %v3525 = vadd.f32 %v3141, %v3524
        %v3526 = vpop.f32.mrb[0].mxu0
        %3527 = vmatprep.mubr.bf16.mxu0 0
        %3528 = vmatmul.mubr.bf16.gmra.mrb[0].mxu0 %v3255
        %v3529 = vpop.f32.mrb[0].mxu0
        %v3530 = vadd.f32 %v3141, %v3529
        %v3531 = vpop.f32.mrb[0].mxu0
        %v3532 = vpop.f32.mrb[0].mxu0
        %v3533 = vadd.f32 %v3141, %v3532
        %v3534 = vpop.f32.mrb[0].mxu0
        %3535 = vmatprep.mubr.bf16.mxu0 0
        %3536 = vmatmul.mubr.bf16.gmra.mrb[0].mxu0 %v3258
        %v3537 = vpop.f32.mrb[0].mxu0
        %v3538 = vadd.f32 %v3141, %v3537
        %v3539 = vpop.f32.mrb[0].mxu0
        %v3540 = vpop.f32.mrb[0].mxu0
        %v3541 = vadd.f32 %v3141, %v3540
        %v3542 = vpop.f32.mrb[0].mxu0
        %3543 = vmatprep.mubr.bf16.mxu0 0
        %3544 = vmatmul.mubr.bf16.gmra.mrb[0].mxu0 %v3261
        %v3545 = vpop.f32.mrb[0].mxu0
        %v3546 = vadd.f32 %v3141, %v3545
        %v3547 = vpop.f32.mrb[0].mxu0
        %v3548 = vpop.f32.mrb[0].mxu0
        %v3549 = vadd.f32 %v3141, %v3548
        %v3550 = vpop.f32.mrb[0].mxu0
        %3551 = vdwg.mxu0
        %v3552 = vmax.f32 %v3298, 0.0
        %v3553 = vmax.f32 %v3301, 0.0
        %v3554 = vmax.f32 %v3306, 0.0
        %v3555 = vmax.f32 %v3309, 0.0
        %v3556 = vmax.f32 %v3314, 0.0
        %v3557 = vmax.f32 %v3317, 0.0
        %v3558 = vmax.f32 %v3322, 0.0
        %v3559 = vmax.f32 %v3325, 0.0
        %v3560 = vmax.f32 %v3330, 0.0
        %v3561 = vmax.f32 %v3333, 0.0
        %v3562 = vmax.f32 %v3338, 0.0
        %v3563 = vmax.f32 %v3341, 0.0
        %v3564 = vmax.f32 %v3346, 0.0
        %v3565 = vmax.f32 %v3349, 0.0
        %v3566 = vmax.f32 %v3354, 0.0
        %v3567 = vmax.f32 %v3357, 0.0
        %v3568 = vmax.f32 %v3362, 0.0
        %v3569 = vmax.f32 %v3365, 0.0
        %v3570 = vmax.f32 %v3370, 0.0
        %v3571 = vmax.f32 %v3373, 0.0
        %v3572 = vmax.f32 %v3378, 0.0
        %v3573 = vmax.f32 %v3381, 0.0
        %v3574 = vmax.f32 %v3386, 0.0
        %v3575 = vmax.f32 %v3389, 0.0
        %v3576 = vmax.f32 %v3394, 0.0
        %v3577 = vmax.f32 %v3397, 0.0
        %v3578 = vmax.f32 %v3402, 0.0
        %v3579 = vmax.f32 %v3405, 0.0
        %v3580 = vmax.f32 %v3410, 0.0
        %v3581 = vmax.f32 %v3413, 0.0
        %v3582 = vmax.f32 %v3418, 0.0
        %v3583 = vmax.f32 %v3421, 0.0
        %v3584 = vmax.f32 %v3426, 0.0
        %v3585 = vmax.f32 %v3429, 0.0
        %v3586 = vmax.f32 %v3434, 0.0
        %v3587 = vmax.f32 %v3437, 0.0
        %v3588 = vmax.f32 %v3442, 0.0
        %v3589 = vmax.f32 %v3445, 0.0
        %v3590 = vmax.f32 %v3450, 0.0
        %v3591 = vmax.f32 %v3453, 0.0
        %v3592 = vmax.f32 %v3458, 0.0
        %v3593 = vmax.f32 %v3461, 0.0
        %v3594 = vmax.f32 %v3466, 0.0
        %v3595 = vmax.f32 %v3469, 0.0
        %v3596 = vmax.f32 %v3474, 0.0
        %v3597 = vmax.f32 %v3477, 0.0
        %v3598 = vmax.f32 %v3482, 0.0
        %v3599 = vmax.f32 %v3485, 0.0
        %v3600 = vmax.f32 %v3490, 0.0
        %v3601 = vmax.f32 %v3493, 0.0
        %v3602 = vmax.f32 %v3498, 0.0
        %v3603 = vmax.f32 %v3501, 0.0
        %v3604 = vmax.f32 %v3506, 0.0
        %v3605 = vmax.f32 %v3509, 0.0
        %v3606 = vmax.f32 %v3514, 0.0
        %v3607 = vmax.f32 %v3517, 0.0
        %v3608 = vmax.f32 %v3522, 0.0
        %v3609 = vmax.f32 %v3525, 0.0
        %v3610 = vmax.f32 %v3530, 0.0
        %v3611 = vmax.f32 %v3533, 0.0
        %v3612 = vmax.f32 %v3538, 0.0
        %v3613 = vmax.f32 %v3541, 0.0
        %v3614 = vmax.f32 %v3546, 0.0
        %v3615 = vmax.f32 %v3549, 0.0
        %v3616 = vpack.c.bf16 %v3553, %v3552
        %v3617 = vpack.c.bf16 %v3555, %v3554
        %v3618 = vpack.c.bf16 %v3557, %v3556
        %v3619 = vpack.c.bf16 %v3559, %v3558
        %v3620 = vpack.c.bf16 %v3561, %v3560
        %v3621 = vpack.c.bf16 %v3563, %v3562
        %v3622 = vpack.c.bf16 %v3565, %v3564
        %v3623 = vpack.c.bf16 %v3567, %v3566
        %v3624 = vpack.c.bf16 %v3569, %v3568
        %v3625 = vpack.c.bf16 %v3571, %v3570
        %v3626 = vpack.c.bf16 %v3573, %v3572
        %v3627 = vpack.c.bf16 %v3575, %v3574
        %v3628 = vpack.c.bf16 %v3577, %v3576
        %v3629 = vpack.c.bf16 %v3579, %v3578
        %v3630 = vpack.c.bf16 %v3581, %v3580
        %v3631 = vpack.c.bf16 %v3583, %v3582
        %v3632 = vpack.c.bf16 %v3585, %v3584
        %v3633 = vpack.c.bf16 %v3587, %v3586
        %v3634 = vpack.c.bf16 %v3589, %v3588
        %v3635 = vpack.c.bf16 %v3591, %v3590
        %v3636 = vpack.c.bf16 %v3593, %v3592
        %v3637 = vpack.c.bf16 %v3595, %v3594
        %v3638 = vpack.c.bf16 %v3597, %v3596
        %v3639 = vpack.c.bf16 %v3599, %v3598
        %v3640 = vpack.c.bf16 %v3601, %v3600
        %v3641 = vpack.c.bf16 %v3603, %v3602
        %v3642 = vpack.c.bf16 %v3605, %v3604
        %v3643 = vpack.c.bf16 %v3607, %v3606
        %v3644 = vpack.c.bf16 %v3609, %v3608
        %v3645 = vpack.c.bf16 %v3611, %v3610
        %v3646 = vpack.c.bf16 %v3613, %v3612
        %v3647 = vpack.c.bf16 %v3615, %v3614
        %v3648 = vld [vmem:[%s13] sm:$0xf]
        %v3649 = vld [vmem:[%s13 + $0x4] sm:$0xf]
        %v3650 = vld [vmem:[%s13 + $0x8] sm:$0xf]
        %v3651 = vld [vmem:[%s13 + $0xc] sm:$0xf]
        %v3652 = vld [vmem:[%s13 + $0x10] sm:$0xf]
        %v3653 = vld [vmem:[%s13 + $0x14] sm:$0xf]
        %v3654 = vld [vmem:[%s13 + $0x18] sm:$0xf]
        %v3655 = vld [vmem:[%s13 + $0x1c] sm:$0xf]
        %v3656 = vld [vmem:[%s13 + $0x20] sm:$0xf]
        %v3657 = vld [vmem:[%s13 + $0x24] sm:$0xf]
        %v3658 = vld [vmem:[%s13 + $0x28] sm:$0xf]
        %v3659 = vld [vmem:[%s13 + $0x2c] sm:$0xf]
        %v3660 = vld [vmem:[%s13 + $0x30] sm:$0xf]
        %v3661 = vld [vmem:[%s13 + $0x34] sm:$0xf]
        %v3662 = vld [vmem:[%s13 + $0x38] sm:$0xf]
        %v3663 = vld [vmem:[%s13 + $0x3c] sm:$0xf]
        %v3664 = vld [vmem:[%s14] sm:$0x1]
        %v3666 = vlaneseq
        %v3667 = vshrl.u32 %v3666, 7
        %v3668 = vsub.s32 0, %v3667
        %v3669 = vrot.slane %v3664, %v3668
        %v3687 = vunpack.c.l.b16 %v3648
        %v3688 = vunpack.c.l.b16 %v3649
        %v3689 = vunpack.c.l.b16 %v3650
        %v3690 = vunpack.c.l.b16 %v3651
        %v3691 = vunpack.c.l.b16 %v3652
        %v3692 = vunpack.c.l.b16 %v3653
        %v3693 = vunpack.c.l.b16 %v3654
        %v3694 = vunpack.c.l.b16 %v3655
        %v3695 = vunpack.c.l.b16 %v3656
        %v3696 = vunpack.c.l.b16 %v3657
        %v3697 = vunpack.c.l.b16 %v3658
        %v3698 = vunpack.c.l.b16 %v3659
        %v3699 = vunpack.c.l.b16 %v3660
        %v3700 = vunpack.c.l.b16 %v3661
        %v3701 = vunpack.c.l.b16 %v3662
        %v3702 = vunpack.c.l.b16 %v3663
        %v3703 = vpack.c.b16 %v3688, %v3687
        %v3704 = vpack.c.b16 %v3690, %v3689
        %v3705 = vpack.c.b16 %v3692, %v3691
        %v3706 = vpack.c.b16 %v3694, %v3693
        %v3707 = vpack.c.b16 %v3696, %v3695
        %v3708 = vpack.c.b16 %v3698, %v3697
        %v3709 = vpack.c.b16 %v3700, %v3699
        %v3710 = vpack.c.b16 %v3702, %v3701
        %3719 = vmatprep.subr.bf16.mxu0 0
        %3720 = vmatpush1.bf16.msra.mxu0 %v3703
        %3721 = vmatprep.subr.bf16.mxu0 0
        %3722 = vmatpush1.bf16.msra.mxu0 %v3704
        %3723 = vmatprep.subr.bf16.mxu0 0
        %3724 = vmatpush1.bf16.msra.mxu0 %v3705
        %3725 = vmatprep.subr.bf16.mxu0 0
        %3726 = vmatpush1.bf16.msra.mxu0 %v3706
        %3727 = vmatprep.subr.bf16.mxu0 0
        %3728 = vmatpush1.bf16.msra.mxu0 %v3707
        %3729 = vmatprep.subr.bf16.mxu0 0
        %3730 = vmatpush1.bf16.msra.mxu0 %v3708
        %3731 = vmatprep.subr.bf16.mxu0 0
        %3732 = vmatpush1.bf16.msra.mxu0 %v3709
        %3733 = vmatprep.subr.bf16.mxu0 0
        %3734 = vmatpush1.bf16.msra.mxu0 %v3710
        %3735 = vmatprep.subr.bf16.mxu0 0
        %3736 = vmatpush1.bf16.msra.mxu0 0
        %3737 = vmatprep.subr.bf16.mxu0 0
        %3738 = vmatpush1.bf16.msra.mxu0 0
        %3739 = vmatprep.subr.bf16.mxu0 0
        %3740 = vmatpush1.bf16.msra.mxu0 0
        %3741 = vmatprep.subr.bf16.mxu0 0
        %3742 = vmatpush1.bf16.msra.mxu0 0
        %3743 = vmatprep.subr.bf16.mxu0 0
        %3744 = vmatpush1.bf16.msra.mxu0 0
        %3745 = vmatprep.subr.bf16.mxu0 0
        %3746 = vmatpush1.bf16.msra.mxu0 0
        %3747 = vmatprep.subr.bf16.mxu0 0
        %3748 = vmatpush1.bf16.msra.mxu0 0
        %3749 = vmatprep.subr.bf16.mxu0 0
        %3750 = vmatpush1.bf16.msra.mxu0 0
        %3751 = vmatprep.mubr.bf16.mxu0 0
        %3752 = vmatmul.mubr.bf16.gmra.mrb[0].mxu0 %v3616
        %v3753 = vpop.f32.mrb[0].mxu0
        %v3754 = vadd.f32 %v3669, %v3753
        %v3755 = vpop.f32.mrb[0].mxu0
        %v3756 = vpop.f32.mrb[0].mxu0
        %v3757 = vadd.f32 %v3669, %v3756
        %v3758 = vpop.f32.mrb[0].mxu0
        %3759 = vmatprep.mubr.bf16.mxu0 0
        %3760 = vmatmul.mubr.bf16.gmra.mrb[0].mxu0 %v3617
        %v3761 = vpop.f32.mrb[0].mxu0
        %v3762 = vadd.f32 %v3669, %v3761
        %v3763 = vpop.f32.mrb[0].mxu0
        %v3764 = vpop.f32.mrb[0].mxu0
        %v3765 = vadd.f32 %v3669, %v3764
        %v3766 = vpop.f32.mrb[0].mxu0
        %3767 = vmatprep.mubr.bf16.mxu0 0
        %3768 = vmatmul.mubr.bf16.gmra.mrb[0].mxu0 %v3618
        %v3769 = vpop.f32.mrb[0].mxu0
        %v3770 = vadd.f32 %v3669, %v3769
        %v3771 = vpop.f32.mrb[0].mxu0
        %v3772 = vpop.f32.mrb[0].mxu0
        %v3773 = vadd.f32 %v3669, %v3772
        %v3774 = vpop.f32.mrb[0].mxu0
        %3775 = vmatprep.mubr.bf16.mxu0 0
        %3776 = vmatmul.mubr.bf16.gmra.mrb[0].mxu0 %v3619
        %v3777 = vpop.f32.mrb[0].mxu0
        %v3778 = vadd.f32 %v3669, %v3777
        %v3779 = vpop.f32.mrb[0].mxu0
        %v3780 = vpop.f32.mrb[0].mxu0
        %v3781 = vadd.f32 %v3669, %v3780
        %v3782 = vpop.f32.mrb[0].mxu0
        %3783 = vmatprep.mubr.bf16.mxu0 0
        %3784 = vmatmul.mubr.bf16.gmra.mrb[0].mxu0 %v3620
        %v3785 = vpop.f32.mrb[0].mxu0
        %v3786 = vadd.f32 %v3669, %v3785
        %v3787 = vpop.f32.mrb[0].mxu0
        %v3788 = vpop.f32.mrb[0].mxu0
        %v3789 = vadd.f32 %v3669, %v3788
        %v3790 = vpop.f32.mrb[0].mxu0
        %3791 = vmatprep.mubr.bf16.mxu0 0
        %3792 = vmatmul.mubr.bf16.gmra.mrb[0].mxu0 %v3621
        %v3793 = vpop.f32.mrb[0].mxu0
        %v3794 = vadd.f32 %v3669, %v3793
        %v3795 = vpop.f32.mrb[0].mxu0
        %v3796 = vpop.f32.mrb[0].mxu0
        %v3797 = vadd.f32 %v3669, %v3796
        %v3798 = vpop.f32.mrb[0].mxu0
        %3799 = vmatprep.mubr.bf16.mxu0 0
        %3800 = vmatmul.mubr.bf16.gmra.mrb[0].mxu0 %v3622
        %v3801 = vpop.f32.mrb[0].mxu0
        %v3802 = vadd.f32 %v3669, %v3801
        %v3803 = vpop.f32.mrb[0].mxu0
        %v3804 = vpop.f32.mrb[0].mxu0
        %v3805 = vadd.f32 %v3669, %v3804
        %v3806 = vpop.f32.mrb[0].mxu0
        %3807 = vmatprep.mubr.bf16.mxu0 0
        %3808 = vmatmul.mubr.bf16.gmra.mrb[0].mxu0 %v3623
        %v3809 = vpop.f32.mrb[0].mxu0
        %v3810 = vadd.f32 %v3669, %v3809
        %v3811 = vpop.f32.mrb[0].mxu0
        %v3812 = vpop.f32.mrb[0].mxu0
        %v3813 = vadd.f32 %v3669, %v3812
        %v3814 = vpop.f32.mrb[0].mxu0
        %3815 = vmatprep.mubr.bf16.mxu0 0
        %3816 = vmatmul.mubr.bf16.gmra.mrb[0].mxu0 %v3624
        %v3817 = vpop.f32.mrb[0].mxu0
        %v3818 = vadd.f32 %v3669, %v3817
        %v3819 = vpop.f32.mrb[0].mxu0
        %v3820 = vpop.f32.mrb[0].mxu0
        %v3821 = vadd.f32 %v3669, %v3820
        %v3822 = vpop.f32.mrb[0].mxu0
        %3823 = vmatprep.mubr.bf16.mxu0 0
        %3824 = vmatmul.mubr.bf16.gmra.mrb[0].mxu0 %v3625
        %v3825 = vpop.f32.mrb[0].mxu0
        %v3826 = vadd.f32 %v3669, %v3825
        %v3827 = vpop.f32.mrb[0].mxu0
        %v3828 = vpop.f32.mrb[0].mxu0
        %v3829 = vadd.f32 %v3669, %v3828
        %v3830 = vpop.f32.mrb[0].mxu0
        %3831 = vmatprep.mubr.bf16.mxu0 0
        %3832 = vmatmul.mubr.bf16.gmra.mrb[0].mxu0 %v3626
        %v3833 = vpop.f32.mrb[0].mxu0
        %v3834 = vadd.f32 %v3669, %v3833
        %v3835 = vpop.f32.mrb[0].mxu0
        %v3836 = vpop.f32.mrb[0].mxu0
        %v3837 = vadd.f32 %v3669, %v3836
        %v3838 = vpop.f32.mrb[0].mxu0
        %3839 = vmatprep.mubr.bf16.mxu0 0
        %3840 = vmatmul.mubr.bf16.gmra.mrb[0].mxu0 %v3627
        %v3841 = vpop.f32.mrb[0].mxu0
        %v3842 = vadd.f32 %v3669, %v3841
        %v3843 = vpop.f32.mrb[0].mxu0
        %v3844 = vpop.f32.mrb[0].mxu0
        %v3845 = vadd.f32 %v3669, %v3844
        %v3846 = vpop.f32.mrb[0].mxu0
        %3847 = vmatprep.mubr.bf16.mxu0 0
        %3848 = vmatmul.mubr.bf16.gmra.mrb[0].mxu0 %v3628
        %v3849 = vpop.f32.mrb[0].mxu0
        %v3850 = vadd.f32 %v3669, %v3849
        %v3851 = vpop.f32.mrb[0].mxu0
        %v3852 = vpop.f32.mrb[0].mxu0
        %v3853 = vadd.f32 %v3669, %v3852
        %v3854 = vpop.f32.mrb[0].mxu0
        %3855 = vmatprep.mubr.bf16.mxu0 0
        %3856 = vmatmul.mubr.bf16.gmra.mrb[0].mxu0 %v3629
        %v3857 = vpop.f32.mrb[0].mxu0
        %v3858 = vadd.f32 %v3669, %v3857
        %v3859 = vpop.f32.mrb[0].mxu0
        %v3860 = vpop.f32.mrb[0].mxu0
        %v3861 = vadd.f32 %v3669, %v3860
        %v3862 = vpop.f32.mrb[0].mxu0
        %3863 = vmatprep.mubr.bf16.mxu0 0
        %3864 = vmatmul.mubr.bf16.gmra.mrb[0].mxu0 %v3630
        %v3865 = vpop.f32.mrb[0].mxu0
        %v3866 = vadd.f32 %v3669, %v3865
        %v3867 = vpop.f32.mrb[0].mxu0
        %v3868 = vpop.f32.mrb[0].mxu0
        %v3869 = vadd.f32 %v3669, %v3868
        %v3870 = vpop.f32.mrb[0].mxu0
        %3871 = vmatprep.mubr.bf16.mxu0 0
        %3872 = vmatmul.mubr.bf16.gmra.mrb[0].mxu0 %v3631
        %v3873 = vpop.f32.mrb[0].mxu0
        %v3874 = vadd.f32 %v3669, %v3873
        %v3875 = vpop.f32.mrb[0].mxu0
        %v3876 = vpop.f32.mrb[0].mxu0
        %v3877 = vadd.f32 %v3669, %v3876
        %v3878 = vpop.f32.mrb[0].mxu0
        %3879 = vmatprep.mubr.bf16.mxu0 0
        %3880 = vmatmul.mubr.bf16.gmra.mrb[0].mxu0 %v3632
        %v3881 = vpop.f32.mrb[0].mxu0
        %v3882 = vadd.f32 %v3669, %v3881
        %v3883 = vpop.f32.mrb[0].mxu0
        %v3884 = vpop.f32.mrb[0].mxu0
        %v3885 = vadd.f32 %v3669, %v3884
        %v3886 = vpop.f32.mrb[0].mxu0
        %3887 = vmatprep.mubr.bf16.mxu0 0
        %3888 = vmatmul.mubr.bf16.gmra.mrb[0].mxu0 %v3633
        %v3889 = vpop.f32.mrb[0].mxu0
        %v3890 = vadd.f32 %v3669, %v3889
        %v3891 = vpop.f32.mrb[0].mxu0
        %v3892 = vpop.f32.mrb[0].mxu0
        %v3893 = vadd.f32 %v3669, %v3892
        %v3894 = vpop.f32.mrb[0].mxu0
        %3895 = vmatprep.mubr.bf16.mxu0 0
        %3896 = vmatmul.mubr.bf16.gmra.mrb[0].mxu0 %v3634
        %v3897 = vpop.f32.mrb[0].mxu0
        %v3898 = vadd.f32 %v3669, %v3897
        %v3899 = vpop.f32.mrb[0].mxu0
        %v3900 = vpop.f32.mrb[0].mxu0
        %v3901 = vadd.f32 %v3669, %v3900
        %v3902 = vpop.f32.mrb[0].mxu0
        %3903 = vmatprep.mubr.bf16.mxu0 0
        %3904 = vmatmul.mubr.bf16.gmra.mrb[0].mxu0 %v3635
        %v3905 = vpop.f32.mrb[0].mxu0
        %v3906 = vadd.f32 %v3669, %v3905
        %v3907 = vpop.f32.mrb[0].mxu0
        %v3908 = vpop.f32.mrb[0].mxu0
        %v3909 = vadd.f32 %v3669, %v3908
        %v3910 = vpop.f32.mrb[0].mxu0
        %3911 = vmatprep.mubr.bf16.mxu0 0
        %3912 = vmatmul.mubr.bf16.gmra.mrb[0].mxu0 %v3636
        %v3913 = vpop.f32.mrb[0].mxu0
        %v3914 = vadd.f32 %v3669, %v3913
        %v3915 = vpop.f32.mrb[0].mxu0
        %v3916 = vpop.f32.mrb[0].mxu0
        %v3917 = vadd.f32 %v3669, %v3916
        %v3918 = vpop.f32.mrb[0].mxu0
        %3919 = vmatprep.mubr.bf16.mxu0 0
        %3920 = vmatmul.mubr.bf16.gmra.mrb[0].mxu0 %v3637
        %v3921 = vpop.f32.mrb[0].mxu0
        %v3922 = vadd.f32 %v3669, %v3921
        %v3923 = vpop.f32.mrb[0].mxu0
        %v3924 = vpop.f32.mrb[0].mxu0
        %v3925 = vadd.f32 %v3669, %v3924
        %v3926 = vpop.f32.mrb[0].mxu0
        %3927 = vmatprep.mubr.bf16.mxu0 0
        %3928 = vmatmul.mubr.bf16.gmra.mrb[0].mxu0 %v3638
        %v3929 = vpop.f32.mrb[0].mxu0
        %v3930 = vadd.f32 %v3669, %v3929
        %v3931 = vpop.f32.mrb[0].mxu0
        %v3932 = vpop.f32.mrb[0].mxu0
        %v3933 = vadd.f32 %v3669, %v3932
        %v3934 = vpop.f32.mrb[0].mxu0
        %3935 = vmatprep.mubr.bf16.mxu0 0
        %3936 = vmatmul.mubr.bf16.gmra.mrb[0].mxu0 %v3639
        %v3937 = vpop.f32.mrb[0].mxu0
        %v3938 = vadd.f32 %v3669, %v3937
        %v3939 = vpop.f32.mrb[0].mxu0
        %v3940 = vpop.f32.mrb[0].mxu0
        %v3941 = vadd.f32 %v3669, %v3940
        %v3942 = vpop.f32.mrb[0].mxu0
        %3943 = vmatprep.mubr.bf16.mxu0 0
        %3944 = vmatmul.mubr.bf16.gmra.mrb[0].mxu0 %v3640
        %v3945 = vpop.f32.mrb[0].mxu0
        %v3946 = vadd.f32 %v3669, %v3945
        %v3947 = vpop.f32.mrb[0].mxu0
        %v3948 = vpop.f32.mrb[0].mxu0
        %v3949 = vadd.f32 %v3669, %v3948
        %v3950 = vpop.f32.mrb[0].mxu0
        %3951 = vmatprep.mubr.bf16.mxu0 0
        %3952 = vmatmul.mubr.bf16.gmra.mrb[0].mxu0 %v3641
        %v3953 = vpop.f32.mrb[0].mxu0
        %v3954 = vadd.f32 %v3669, %v3953
        %v3955 = vpop.f32.mrb[0].mxu0
        %v3956 = vpop.f32.mrb[0].mxu0
        %v3957 = vadd.f32 %v3669, %v3956
        %v3958 = vpop.f32.mrb[0].mxu0
        %3959 = vmatprep.mubr.bf16.mxu0 0
        %3960 = vmatmul.mubr.bf16.gmra.mrb[0].mxu0 %v3642
        %v3961 = vpop.f32.mrb[0].mxu0
        %v3962 = vadd.f32 %v3669, %v3961
        %v3963 = vpop.f32.mrb[0].mxu0
        %v3964 = vpop.f32.mrb[0].mxu0
        %v3965 = vadd.f32 %v3669, %v3964
        %v3966 = vpop.f32.mrb[0].mxu0
        %3967 = vmatprep.mubr.bf16.mxu0 0
        %3968 = vmatmul.mubr.bf16.gmra.mrb[0].mxu0 %v3643
        %v3969 = vpop.f32.mrb[0].mxu0
        %v3970 = vadd.f32 %v3669, %v3969
        %v3971 = vpop.f32.mrb[0].mxu0
        %v3972 = vpop.f32.mrb[0].mxu0
        %v3973 = vadd.f32 %v3669, %v3972
        %v3974 = vpop.f32.mrb[0].mxu0
        %3975 = vmatprep.mubr.bf16.mxu0 0
        %3976 = vmatmul.mubr.bf16.gmra.mrb[0].mxu0 %v3644
        %v3977 = vpop.f32.mrb[0].mxu0
        %v3978 = vadd.f32 %v3669, %v3977
        %v3979 = vpop.f32.mrb[0].mxu0
        %v3980 = vpop.f32.mrb[0].mxu0
        %v3981 = vadd.f32 %v3669, %v3980
        %v3982 = vpop.f32.mrb[0].mxu0
        %3983 = vmatprep.mubr.bf16.mxu0 0
        %3984 = vmatmul.mubr.bf16.gmra.mrb[0].mxu0 %v3645
        %v3985 = vpop.f32.mrb[0].mxu0
        %v3986 = vadd.f32 %v3669, %v3985
        %v3987 = vpop.f32.mrb[0].mxu0
        %v3988 = vpop.f32.mrb[0].mxu0
        %v3989 = vadd.f32 %v3669, %v3988
        %v3990 = vpop.f32.mrb[0].mxu0
        %3991 = vmatprep.mubr.bf16.mxu0 0
        %3992 = vmatmul.mubr.bf16.gmra.mrb[0].mxu0 %v3646
        %v3993 = vpop.f32.mrb[0].mxu0
        %v3994 = vadd.f32 %v3669, %v3993
        %v3995 = vpop.f32.mrb[0].mxu0
        %v3996 = vpop.f32.mrb[0].mxu0
        %v3997 = vadd.f32 %v3669, %v3996
        %v3998 = vpop.f32.mrb[0].mxu0
        %3999 = vmatprep.mubr.bf16.mxu0 0
        %4000 = vmatmul.mubr.bf16.gmra.mrb[0].mxu0 %v3647
        %v4001 = vpop.f32.mrb[0].mxu0
        %v4002 = vadd.f32 %v3669, %v4001
        %v4003 = vpop.f32.mrb[0].mxu0
        %v4004 = vpop.f32.mrb[0].mxu0
        %v4005 = vadd.f32 %v3669, %v4004
        %v4006 = vpop.f32.mrb[0].mxu0
        %4007 = vdwg.mxu0
        %v4008 = vsub.f32 0.0, %v3754
        %v4009 = vsub.f32 0.0, %v3757
        %v4010 = vsub.f32 0.0, %v3762
        %v4011 = vsub.f32 0.0, %v3765
        %v4012 = vsub.f32 0.0, %v3770
        %v4013 = vsub.f32 0.0, %v3773
        %v4014 = vsub.f32 0.0, %v3778
        %v4015 = vsub.f32 0.0, %v3781
        %v4016 = vsub.f32 0.0, %v3786
        %v4017 = vsub.f32 0.0, %v3789
        %v4018 = vsub.f32 0.0, %v3794
        %v4019 = vsub.f32 0.0, %v3797
        %v4020 = vsub.f32 0.0, %v3802
        %v4021 = vsub.f32 0.0, %v3805
        %v4022 = vsub.f32 0.0, %v3810
        %v4023 = vsub.f32 0.0, %v3813
        %v4024 = vsub.f32 0.0, %v3818
        %v4025 = vsub.f32 0.0, %v3821
        %v4026 = vsub.f32 0.0, %v3826
        %v4027 = vsub.f32 0.0, %v3829
        %v4028 = vsub.f32 0.0, %v3834
        %v4029 = vsub.f32 0.0, %v3837
        %v4030 = vsub.f32 0.0, %v3842
        %v4031 = vsub.f32 0.0, %v3845
        %v4032 = vsub.f32 0.0, %v3850
        %v4033 = vsub.f32 0.0, %v3853
        %v4034 = vsub.f32 0.0, %v3858
        %v4035 = vsub.f32 0.0, %v3861
        %v4036 = vsub.f32 0.0, %v3866
        %v4037 = vsub.f32 0.0, %v3869
        %v4038 = vsub.f32 0.0, %v3874
        %v4039 = vsub.f32 0.0, %v3877
        %v4040 = vsub.f32 0.0, %v3882
        %v4041 = vsub.f32 0.0, %v3885
        %v4042 = vsub.f32 0.0, %v3890
        %v4043 = vsub.f32 0.0, %v3893
        %v4044 = vsub.f32 0.0, %v3898
        %v4045 = vsub.f32 0.0, %v3901
        %v4046 = vsub.f32 0.0, %v3906
        %v4047 = vsub.f32 0.0, %v3909
        %v4048 = vsub.f32 0.0, %v3914
        %v4049 = vsub.f32 0.0, %v3917
        %v4050 = vsub.f32 0.0, %v3922
        %v4051 = vsub.f32 0.0, %v3925
        %v4052 = vsub.f32 0.0, %v3930
        %v4053 = vsub.f32 0.0, %v3933
        %v4054 = vsub.f32 0.0, %v3938
        %v4055 = vsub.f32 0.0, %v3941
        %v4056 = vsub.f32 0.0, %v3946
        %v4057 = vsub.f32 0.0, %v3949
        %v4058 = vsub.f32 0.0, %v3954
        %v4059 = vsub.f32 0.0, %v3957
        %v4060 = vsub.f32 0.0, %v3962
        %v4061 = vsub.f32 0.0, %v3965
        %v4062 = vsub.f32 0.0, %v3970
        %v4063 = vsub.f32 0.0, %v3973
        %v4064 = vsub.f32 0.0, %v3978
        %v4065 = vsub.f32 0.0, %v3981
        %v4066 = vsub.f32 0.0, %v3986
        %v4067 = vsub.f32 0.0, %v3989
        %v4068 = vsub.f32 0.0, %v3994
        %v4069 = vsub.f32 0.0, %v3997
        %v4070 = vsub.f32 0.0, %v4002
        %v4071 = vsub.f32 0.0, %v4005
        %v4072 = vmul.f32 %v4008, 1.442695
        %v4073 = vpow.pop %v4072
        %v4074 = vmul.f32 %v4009, 1.442695
        %v4075 = vpow.pop %v4074
        %v4076 = vmul.f32 %v4010, 1.442695
        %v4077 = vpow.pop %v4076
        %v4078 = vmul.f32 %v4011, 1.442695
        %v4079 = vpow.pop %v4078
        %v4080 = vmul.f32 %v4012, 1.442695
        %v4081 = vpow.pop %v4080
        %v4082 = vmul.f32 %v4013, 1.442695
        %v4083 = vpow.pop %v4082
        %v4084 = vmul.f32 %v4014, 1.442695
        %v4085 = vpow.pop %v4084
        %v4086 = vmul.f32 %v4015, 1.442695
        %v4087 = vpow.pop %v4086
        %v4088 = vmul.f32 %v4016, 1.442695
        %v4089 = vpow.pop %v4088
        %v4090 = vmul.f32 %v4017, 1.442695
        %v4091 = vpow.pop %v4090
        %v4092 = vmul.f32 %v4018, 1.442695
        %v4093 = vpow.pop %v4092
        %v4094 = vmul.f32 %v4019, 1.442695
        %v4095 = vpow.pop %v4094
        %v4096 = vmul.f32 %v4020, 1.442695
        %v4097 = vpow.pop %v4096
        %v4098 = vmul.f32 %v4021, 1.442695
        %v4099 = vpow.pop %v4098
        %v4100 = vmul.f32 %v4022, 1.442695
        %v4101 = vpow.pop %v4100
        %v4102 = vmul.f32 %v4023, 1.442695
        %v4103 = vpow.pop %v4102
        %v4104 = vmul.f32 %v4024, 1.442695
        %v4105 = vpow.pop %v4104
        %v4106 = vmul.f32 %v4025, 1.442695
        %v4107 = vpow.pop %v4106
        %v4108 = vmul.f32 %v4026, 1.442695
        %v4109 = vpow.pop %v4108
        %v4110 = vmul.f32 %v4027, 1.442695
        %v4111 = vpow.pop %v4110
        %v4112 = vmul.f32 %v4028, 1.442695
        %v4113 = vpow.pop %v4112
        %v4114 = vmul.f32 %v4029, 1.442695
        %v4115 = vpow.pop %v4114
        %v4116 = vmul.f32 %v4030, 1.442695
        %v4117 = vpow.pop %v4116
        %v4118 = vmul.f32 %v4031, 1.442695
        %v4119 = vpow.pop %v4118
        %v4120 = vmul.f32 %v4032, 1.442695
        %v4121 = vpow.pop %v4120
        %v4122 = vmul.f32 %v4033, 1.442695
        %v4123 = vpow.pop %v4122
        %v4124 = vmul.f32 %v4034, 1.442695
        %v4125 = vpow.pop %v4124
        %v4126 = vmul.f32 %v4035, 1.442695
        %v4127 = vpow.pop %v4126
        %v4128 = vmul.f32 %v4036, 1.442695
        %v4129 = vpow.pop %v4128
        %v4130 = vmul.f32 %v4037, 1.442695
        %v4131 = vpow.pop %v4130
        %v4132 = vmul.f32 %v4038, 1.442695
        %v4133 = vpow.pop %v4132
        %v4134 = vmul.f32 %v4039, 1.442695
        %v4135 = vpow.pop %v4134
        %v4136 = vmul.f32 %v4040, 1.442695
        %v4137 = vpow.pop %v4136
        %v4138 = vmul.f32 %v4041, 1.442695
        %v4139 = vpow.pop %v4138
        %v4140 = vmul.f32 %v4042, 1.442695
        %v4141 = vpow.pop %v4140
        %v4142 = vmul.f32 %v4043, 1.442695
        %v4143 = vpow.pop %v4142
        %v4144 = vmul.f32 %v4044, 1.442695
        %v4145 = vpow.pop %v4144
        %v4146 = vmul.f32 %v4045, 1.442695
        %v4147 = vpow.pop %v4146
        %v4148 = vmul.f32 %v4046, 1.442695
        %v4149 = vpow.pop %v4148
        %v4150 = vmul.f32 %v4047, 1.442695
        %v4151 = vpow.pop %v4150
        %v4152 = vmul.f32 %v4048, 1.442695
        %v4153 = vpow.pop %v4152
        %v4154 = vmul.f32 %v4049, 1.442695
        %v4155 = vpow.pop %v4154
        %v4156 = vmul.f32 %v4050, 1.442695
        %v4157 = vpow.pop %v4156
        %v4158 = vmul.f32 %v4051, 1.442695
        %v4159 = vpow.pop %v4158
        %v4160 = vmul.f32 %v4052, 1.442695
        %v4161 = vpow.pop %v4160
        %v4162 = vmul.f32 %v4053, 1.442695
        %v4163 = vpow.pop %v4162
        %v4164 = vmul.f32 %v4054, 1.442695
        %v4165 = vpow.pop %v4164
        %v4166 = vmul.f32 %v4055, 1.442695
        %v4167 = vpow.pop %v4166
        %v4168 = vmul.f32 %v4056, 1.442695
        %v4169 = vpow.pop %v4168
        %v4170 = vmul.f32 %v4057, 1.442695
        %v4171 = vpow.pop %v4170
        %v4172 = vmul.f32 %v4058, 1.442695
        %v4173 = vpow.pop %v4172
        %v4174 = vmul.f32 %v4059, 1.442695
        %v4175 = vpow.pop %v4174
        %v4176 = vmul.f32 %v4060, 1.442695
        %v4177 = vpow.pop %v4176
        %v4178 = vmul.f32 %v4061, 1.442695
        %v4179 = vpow.pop %v4178
        %v4180 = vmul.f32 %v4062, 1.442695
        %v4181 = vpow.pop %v4180
        %v4182 = vmul.f32 %v4063, 1.442695
        %v4183 = vpow.pop %v4182
        %v4184 = vmul.f32 %v4064, 1.442695
        %v4185 = vpow.pop %v4184
        %v4186 = vmul.f32 %v4065, 1.442695
        %v4187 = vpow.pop %v4186
        %v4188 = vmul.f32 %v4066, 1.442695
        %v4189 = vpow.pop %v4188
        %v4190 = vmul.f32 %v4067, 1.442695
        %v4191 = vpow.pop %v4190
        %v4192 = vmul.f32 %v4068, 1.442695
        %v4193 = vpow.pop %v4192
        %v4194 = vmul.f32 %v4069, 1.442695
        %v4195 = vpow.pop %v4194
        %v4196 = vmul.f32 %v4070, 1.442695
        %v4197 = vpow.pop %v4196
        %v4198 = vmul.f32 %v4071, 1.442695
        %v4199 = vpow.pop %v4198
        %v4200 = vadd.f32 %v4073, 1.0
        %v4201 = vadd.f32 %v4075, 1.0
        %v4202 = vadd.f32 %v4077, 1.0
        %v4203 = vadd.f32 %v4079, 1.0
        %v4204 = vadd.f32 %v4081, 1.0
        %v4205 = vadd.f32 %v4083, 1.0
        %v4206 = vadd.f32 %v4085, 1.0
        %v4207 = vadd.f32 %v4087, 1.0
        %v4208 = vadd.f32 %v4089, 1.0
        %v4209 = vadd.f32 %v4091, 1.0
        %v4210 = vadd.f32 %v4093, 1.0
        %v4211 = vadd.f32 %v4095, 1.0
        %v4212 = vadd.f32 %v4097, 1.0
        %v4213 = vadd.f32 %v4099, 1.0
        %v4214 = vadd.f32 %v4101, 1.0
        %v4215 = vadd.f32 %v4103, 1.0
        %v4216 = vadd.f32 %v4105, 1.0
        %v4217 = vadd.f32 %v4107, 1.0
        %v4218 = vadd.f32 %v4109, 1.0
        %v4219 = vadd.f32 %v4111, 1.0
        %v4220 = vadd.f32 %v4113, 1.0
        %v4221 = vadd.f32 %v4115, 1.0
        %v4222 = vadd.f32 %v4117, 1.0
        %v4223 = vadd.f32 %v4119, 1.0
        %v4224 = vadd.f32 %v4121, 1.0
        %v4225 = vadd.f32 %v4123, 1.0
        %v4226 = vadd.f32 %v4125, 1.0
        %v4227 = vadd.f32 %v4127, 1.0
        %v4228 = vadd.f32 %v4129, 1.0
        %v4229 = vadd.f32 %v4131, 1.0
        %v4230 = vadd.f32 %v4133, 1.0
        %v4231 = vadd.f32 %v4135, 1.0
        %v4232 = vadd.f32 %v4137, 1.0
        %v4233 = vadd.f32 %v4139, 1.0
        %v4234 = vadd.f32 %v4141, 1.0
        %v4235 = vadd.f32 %v4143, 1.0
        %v4236 = vadd.f32 %v4145, 1.0
        %v4237 = vadd.f32 %v4147, 1.0
        %v4238 = vadd.f32 %v4149, 1.0
        %v4239 = vadd.f32 %v4151, 1.0
        %v4240 = vadd.f32 %v4153, 1.0
        %v4241 = vadd.f32 %v4155, 1.0
        %v4242 = vadd.f32 %v4157, 1.0
        %v4243 = vadd.f32 %v4159, 1.0
        %v4244 = vadd.f32 %v4161, 1.0
        %v4245 = vadd.f32 %v4163, 1.0
        %v4246 = vadd.f32 %v4165, 1.0
        %v4247 = vadd.f32 %v4167, 1.0
        %v4248 = vadd.f32 %v4169, 1.0
        %v4249 = vadd.f32 %v4171, 1.0
        %v4250 = vadd.f32 %v4173, 1.0
        %v4251 = vadd.f32 %v4175, 1.0
        %v4252 = vadd.f32 %v4177, 1.0
        %v4253 = vadd.f32 %v4179, 1.0
        %v4254 = vadd.f32 %v4181, 1.0
        %v4255 = vadd.f32 %v4183, 1.0
        %v4256 = vadd.f32 %v4185, 1.0
        %v4257 = vadd.f32 %v4187, 1.0
        %v4258 = vadd.f32 %v4189, 1.0
        %v4259 = vadd.f32 %v4191, 1.0
        %v4260 = vadd.f32 %v4193, 1.0
        %v4261 = vadd.f32 %v4195, 1.0
        %v4262 = vadd.f32 %v4197, 1.0
        %v4263 = vadd.f32 %v4199, 1.0
        %v4264 = vrcp.pop %v4200
        %v4265 = vrcp.pop %v4201
        %v4266 = vrcp.pop %v4202
        %v4267 = vrcp.pop %v4203
        %v4268 = vrcp.pop %v4204
        %v4269 = vrcp.pop %v4205
        %v4270 = vrcp.pop %v4206
        %v4271 = vrcp.pop %v4207
        %v4272 = vrcp.pop %v4208
        %v4273 = vrcp.pop %v4209
        %v4274 = vrcp.pop %v4210
        %v4275 = vrcp.pop %v4211
        %v4276 = vrcp.pop %v4212
        %v4277 = vrcp.pop %v4213
        %v4278 = vrcp.pop %v4214
        %v4279 = vrcp.pop %v4215
        %v4280 = vrcp.pop %v4216
        %v4281 = vrcp.pop %v4217
        %v4282 = vrcp.pop %v4218
        %v4283 = vrcp.pop %v4219
        %v4284 = vrcp.pop %v4220
        %v4285 = vrcp.pop %v4221
        %v4286 = vrcp.pop %v4222
        %v4287 = vrcp.pop %v4223
        %v4288 = vrcp.pop %v4224
        %v4289 = vrcp.pop %v4225
        %v4290 = vrcp.pop %v4226
        %v4291 = vrcp.pop %v4227
        %v4292 = vrcp.pop %v4228
        %v4293 = vrcp.pop %v4229
        %v4294 = vrcp.pop %v4230
        %v4295 = vrcp.pop %v4231
        %v4296 = vrcp.pop %v4232
        %v4297 = vrcp.pop %v4233
        %v4298 = vrcp.pop %v4234
        %v4299 = vrcp.pop %v4235
        %v4300 = vrcp.pop %v4236
        %v4301 = vrcp.pop %v4237
        %v4302 = vrcp.pop %v4238
        %v4303 = vrcp.pop %v4239
        %v4304 = vrcp.pop %v4240
        %v4305 = vrcp.pop %v4241
        %v4306 = vrcp.pop %v4242
        %v4307 = vrcp.pop %v4243
        %v4308 = vrcp.pop %v4244
        %v4309 = vrcp.pop %v4245
        %v4310 = vrcp.pop %v4246
        %v4311 = vrcp.pop %v4247
        %v4312 = vrcp.pop %v4248
        %v4313 = vrcp.pop %v4249
        %v4314 = vrcp.pop %v4250
        %v4315 = vrcp.pop %v4251
        %v4316 = vrcp.pop %v4252
        %v4317 = vrcp.pop %v4253
        %v4318 = vrcp.pop %v4254
        %v4319 = vrcp.pop %v4255
        %v4320 = vrcp.pop %v4256
        %v4321 = vrcp.pop %v4257
        %v4322 = vrcp.pop %v4258
        %v4323 = vrcp.pop %v4259
        %v4324 = vrcp.pop %v4260
        %v4325 = vrcp.pop %v4261
        %v4326 = vrcp.pop %v4262
        %v4327 = vrcp.pop %v4263
        %v4328 = vld [vmem:[%s15] sm:$0x1]
        %vm4329 = vcmp.gt.f32.partialorder %v4328, 0.5
        %v4330 = vsel %vm4329, 1, 0
        %v4331 = vlaneseq
        %v4332 = vshrl.u32 %v4331, 7
        %v4333 = vsub.s32 0, %v4332
        %v4334 = vrot.slane %v4330, %v4333
        %vm4335 = vcmp.eq.s32.totalorder %v4334, 1
        %v4336 = vsel %vm4335, %v4264, %v3754
        %v4337 = vsel %vm4335, %v4265, %v3757
        %v4338 = vsel %vm4335, %v4266, %v3762
        %v4339 = vsel %vm4335, %v4267, %v3765
        %v4340 = vsel %vm4335, %v4268, %v3770
        %v4341 = vsel %vm4335, %v4269, %v3773
        %v4342 = vsel %vm4335, %v4270, %v3778
        %v4343 = vsel %vm4335, %v4271, %v3781
        %v4344 = vsel %vm4335, %v4272, %v3786
        %v4345 = vsel %vm4335, %v4273, %v3789
        %v4346 = vsel %vm4335, %v4274, %v3794
        %v4347 = vsel %vm4335, %v4275, %v3797
        %v4348 = vsel %vm4335, %v4276, %v3802
        %v4349 = vsel %vm4335, %v4277, %v3805
        %v4350 = vsel %vm4335, %v4278, %v3810
        %v4351 = vsel %vm4335, %v4279, %v3813
        %v4352 = vsel %vm4335, %v4280, %v3818
        %v4353 = vsel %vm4335, %v4281, %v3821
        %v4354 = vsel %vm4335, %v4282, %v3826
        %v4355 = vsel %vm4335, %v4283, %v3829
        %v4356 = vsel %vm4335, %v4284, %v3834
        %v4357 = vsel %vm4335, %v4285, %v3837
        %v4358 = vsel %vm4335, %v4286, %v3842
        %v4359 = vsel %vm4335, %v4287, %v3845
        %v4360 = vsel %vm4335, %v4288, %v3850
        %v4361 = vsel %vm4335, %v4289, %v3853
        %v4362 = vsel %vm4335, %v4290, %v3858
        %v4363 = vsel %vm4335, %v4291, %v3861
        %v4364 = vsel %vm4335, %v4292, %v3866
        %v4365 = vsel %vm4335, %v4293, %v3869
        %v4366 = vsel %vm4335, %v4294, %v3874
        %v4367 = vsel %vm4335, %v4295, %v3877
        %v4368 = vsel %vm4335, %v4296, %v3882
        %v4369 = vsel %vm4335, %v4297, %v3885
        %v4370 = vsel %vm4335, %v4298, %v3890
        %v4371 = vsel %vm4335, %v4299, %v3893
        %v4372 = vsel %vm4335, %v4300, %v3898
        %v4373 = vsel %vm4335, %v4301, %v3901
        %v4374 = vsel %vm4335, %v4302, %v3906
        %v4375 = vsel %vm4335, %v4303, %v3909
        %v4376 = vsel %vm4335, %v4304, %v3914
        %v4377 = vsel %vm4335, %v4305, %v3917
        %v4378 = vsel %vm4335, %v4306, %v3922
        %v4379 = vsel %vm4335, %v4307, %v3925
        %v4380 = vsel %vm4335, %v4308, %v3930
        %v4381 = vsel %vm4335, %v4309, %v3933
        %v4382 = vsel %vm4335, %v4310, %v3938
        %v4383 = vsel %vm4335, %v4311, %v3941
        %v4384 = vsel %vm4335, %v4312, %v3946
        %v4385 = vsel %vm4335, %v4313, %v3949
        %v4386 = vsel %vm4335, %v4314, %v3954
        %v4387 = vsel %vm4335, %v4315, %v3957
        %v4388 = vsel %vm4335, %v4316, %v3962
        %v4389 = vsel %vm4335, %v4317, %v3965
        %v4390 = vsel %vm4335, %v4318, %v3970
        %v4391 = vsel %vm4335, %v4319, %v3973
        %v4392 = vsel %vm4335, %v4320, %v3978
        %v4393 = vsel %vm4335, %v4321, %v3981
        %v4394 = vsel %vm4335, %v4322, %v3986
        %v4395 = vsel %vm4335, %v4323, %v3989
        %v4396 = vsel %vm4335, %v4324, %v3994
        %v4397 = vsel %vm4335, %v4325, %v3997
        %v4398 = vsel %vm4335, %v4326, %v4002
        %v4399 = vsel %vm4335, %v4327, %v4005
        %4400 = vst.msk [vmem:[%s523] sm:$0xff] %vm667, %v4336
        %4401 = vst.msk [vmem:[%s523 + $0x8] sm:$0xff] %vm667, %v4337
        %4402 = vst.msk [vmem:[%s523 + $0x10] sm:$0xff] %vm667, %v4338
        %4403 = vst.msk [vmem:[%s523 + $0x18] sm:$0xff] %vm667, %v4339
        %4404 = vst.msk [vmem:[%s523 + $0x20] sm:$0xff] %vm667, %v4340
        %4405 = vst.msk [vmem:[%s523 + $0x28] sm:$0xff] %vm667, %v4341
        %4406 = vst.msk [vmem:[%s523 + $0x30] sm:$0xff] %vm667, %v4342
        %4407 = vst.msk [vmem:[%s523 + $0x38] sm:$0xff] %vm667, %v4343
        %4408 = vst.msk [vmem:[%s523 + $0x40] sm:$0xff] %vm667, %v4344
        %4409 = vst.msk [vmem:[%s523 + $0x48] sm:$0xff] %vm667, %v4345
        %4410 = vst.msk [vmem:[%s523 + $0x50] sm:$0xff] %vm667, %v4346
        %4411 = vst.msk [vmem:[%s523 + $0x58] sm:$0xff] %vm667, %v4347
        %4412 = vst.msk [vmem:[%s523 + $0x60] sm:$0xff] %vm667, %v4348
        %4413 = vst.msk [vmem:[%s523 + $0x68] sm:$0xff] %vm667, %v4349
        %4414 = vst.msk [vmem:[%s523 + $0x70] sm:$0xff] %vm667, %v4350
        %4415 = vst.msk [vmem:[%s523 + $0x78] sm:$0xff] %vm667, %v4351
        %4416 = vst.msk [vmem:[%s523 + $0x80] sm:$0xff] %vm667, %v4352
        %4417 = vst.msk [vmem:[%s523 + $0x88] sm:$0xff] %vm667, %v4353
        %4418 = vst.msk [vmem:[%s523 + $0x90] sm:$0xff] %vm667, %v4354
        %4419 = vst.msk [vmem:[%s523 + $0x98] sm:$0xff] %vm667, %v4355
        %4420 = vst.msk [vmem:[%s523 + $0xa0] sm:$0xff] %vm667, %v4356
        %4421 = vst.msk [vmem:[%s523 + $0xa8] sm:$0xff] %vm667, %v4357
        %4422 = vst.msk [vmem:[%s523 + $0xb0] sm:$0xff] %vm667, %v4358
        %4423 = vst.msk [vmem:[%s523 + $0xb8] sm:$0xff] %vm667, %v4359
        %4424 = vst.msk [vmem:[%s523 + $0xc0] sm:$0xff] %vm667, %v4360
        %4425 = vst.msk [vmem:[%s523 + $0xc8] sm:$0xff] %vm667, %v4361
        %4426 = vst.msk [vmem:[%s523 + $0xd0] sm:$0xff] %vm667, %v4362
        %4427 = vst.msk [vmem:[%s523 + $0xd8] sm:$0xff] %vm667, %v4363
        %4428 = vst.msk [vmem:[%s523 + $0xe0] sm:$0xff] %vm667, %v4364
        %4429 = vst.msk [vmem:[%s523 + $0xe8] sm:$0xff] %vm667, %v4365
        %4430 = vst.msk [vmem:[%s523 + $0xf0] sm:$0xff] %vm667, %v4366
        %4431 = vst.msk [vmem:[%s523 + $0xf8] sm:$0xff] %vm667, %v4367
        %4432 = vst.msk [vmem:[%s523 + $0x100] sm:$0xff] %vm667, %v4368
        %4433 = vst.msk [vmem:[%s523 + $0x108] sm:$0xff] %vm667, %v4369
        %4434 = vst.msk [vmem:[%s523 + $0x110] sm:$0xff] %vm667, %v4370
        %4435 = vst.msk [vmem:[%s523 + $0x118] sm:$0xff] %vm667, %v4371
        %4436 = vst.msk [vmem:[%s523 + $0x120] sm:$0xff] %vm667, %v4372
        %4437 = vst.msk [vmem:[%s523 + $0x128] sm:$0xff] %vm667, %v4373
        %4438 = vst.msk [vmem:[%s523 + $0x130] sm:$0xff] %vm667, %v4374
        %4439 = vst.msk [vmem:[%s523 + $0x138] sm:$0xff] %vm667, %v4375
        %4440 = vst.msk [vmem:[%s523 + $0x140] sm:$0xff] %vm667, %v4376
        %4441 = vst.msk [vmem:[%s523 + $0x148] sm:$0xff] %vm667, %v4377
        %4442 = vst.msk [vmem:[%s523 + $0x150] sm:$0xff] %vm667, %v4378
        %4443 = vst.msk [vmem:[%s523 + $0x158] sm:$0xff] %vm667, %v4379
        %4444 = vst.msk [vmem:[%s523 + $0x160] sm:$0xff] %vm667, %v4380
        %4445 = vst.msk [vmem:[%s523 + $0x168] sm:$0xff] %vm667, %v4381
        %4446 = vst.msk [vmem:[%s523 + $0x170] sm:$0xff] %vm667, %v4382
        %4447 = vst.msk [vmem:[%s523 + $0x178] sm:$0xff] %vm667, %v4383
        %4448 = vst.msk [vmem:[%s523 + $0x180] sm:$0xff] %vm667, %v4384
        %4449 = vst.msk [vmem:[%s523 + $0x188] sm:$0xff] %vm667, %v4385
        %4450 = vst.msk [vmem:[%s523 + $0x190] sm:$0xff] %vm667, %v4386
        %4451 = vst.msk [vmem:[%s523 + $0x198] sm:$0xff] %vm667, %v4387
        %4452 = vst.msk [vmem:[%s523 + $0x1a0] sm:$0xff] %vm667, %v4388
        %4453 = vst.msk [vmem:[%s523 + $0x1a8] sm:$0xff] %vm667, %v4389
        %4454 = vst.msk [vmem:[%s523 + $0x1b0] sm:$0xff] %vm667, %v4390
        %4455 = vst.msk [vmem:[%s523 + $0x1b8] sm:$0xff] %vm667, %v4391
        %4456 = vst.msk [vmem:[%s523 + $0x1c0] sm:$0xff] %vm667, %v4392
        %4457 = vst.msk [vmem:[%s523 + $0x1c8] sm:$0xff] %vm667, %v4393
        %4458 = vst.msk [vmem:[%s523 + $0x1d0] sm:$0xff] %vm667, %v4394
        %4459 = vst.msk [vmem:[%s523 + $0x1d8] sm:$0xff] %vm667, %v4395
        %4460 = vst.msk [vmem:[%s523 + $0x1e0] sm:$0xff] %vm667, %v4396
        %4461 = vst.msk [vmem:[%s523 + $0x1e8] sm:$0xff] %vm667, %v4397
        %4462 = vst.msk [vmem:[%s523 + $0x1f0] sm:$0xff] %vm667, %v4398
        %4463 = vst.msk [vmem:[%s523 + $0x1f8] sm:$0xff] %vm667, %v4399
        %s4464 = sand.u32 %s376, 1
        %s4465 = sand.u32 %s376, 1
        %s4466 = smul.addr %s4465, 512
        %s4467 = scalar_lea.vmem [#allocation2], %s4466
        // Predicated region
        $region85: #{tpu_custom_call.1} parent=83 // pred_check
          %p4468 = pneg %p386
        $region86: #{tpu_custom_call.1} parent=83 // pred_check_branch
          %4470 = sbr.rel (%p4468) target = $region88
        $region87: #{tpu_custom_call.1} parent=83 // pred_region
          %s4471 = smul.u32 64, %s27
          %s4472 = ssub.s32 125, %s4471
          %p4473 = scmp.lt.s32.totalorder %s4472, 64
          %s4474 = scalar_select %p4473, %s4472, 64
          %s4475 = smul.u32 128, %s4474
          %p4476 = scmp.ne.s32.totalorder 0, %s4475
          %s4477 = smul.addr %s4471, 8
          %s4478 = scalar_lea.vmem %s16, %s4477
          // Predicated region
          $region89: #{tpu_custom_call.1} parent=87 // pred_check
            %p4479 = pneg %p4476
          $region90: #{tpu_custom_call.1} parent=87 // pred_check_branch
            %4481 = sbr.rel (%p4479) target = $region92
          $region91: #{tpu_custom_call.1} parent=87 // pred_region
            // Predicated region
            $region93: #{tpu_custom_call.1} parent=91 // pred_check
              _
            $region94: #{tpu_custom_call.1} parent=91 // pred_check_branch
              %4483 = sbr.rel (0) target = $region96
            $region95: #{tpu_custom_call.1} parent=91 // pred_region
              // Predicated region
              $region115: #{tpu_custom_call.1} parent=95 // pred_check
                _
              $region116: #{tpu_custom_call.1} parent=95 // pred_check_branch
                %4658 = sbr.rel (0) target = $region118
              $region117: #{tpu_custom_call.1} parent=95 // pred_region
                %s4659 = sshrl.u32 %s4474, 6
                // While loop
                $region119: #{tpu_custom_call.1} parent=117 // loop_pre_header
                  _
                $region120: #{tpu_custom_call.1} parent=117 // loop_header
                  %s4661 = sphi 0, %s4663
                  %p4662 = scmp.ge.s32.totalorder %s4661, %s4659
                  %s4666 = sphi 0, %s4799
                  %s4667 = sphi %s4467, %s4802
                  %s4668 = sphi %s4478, %s4803
                $region121: #{tpu_custom_call.1} parent=117 // loop_header_branch
                  %4665 = sbr.rel (%p4662) target = $region125
                $region122: #{tpu_custom_call.1} parent=117 // loop_body
                  %v4669 = vld [vmem:[%s4667] sm:$0xff]
                  %4670 = vst [vmem:[%s4668] sm:$0xff] %v4669
                  %v4671 = vld [vmem:[%s4667 + $0x8] sm:$0xff]
                  %4672 = vst [vmem:[%s4668 + $0x8] sm:$0xff] %v4671
                  %v4673 = vld [vmem:[%s4667 + $0x10] sm:$0xff]
                  %4674 = vst [vmem:[%s4668 + $0x10] sm:$0xff] %v4673
                  %v4675 = vld [vmem:[%s4667 + $0x18] sm:$0xff]
                  %4676 = vst [vmem:[%s4668 + $0x18] sm:$0xff] %v4675
                  %v4677 = vld [vmem:[%s4667 + $0x20] sm:$0xff]
                  %4678 = vst [vmem:[%s4668 + $0x20] sm:$0xff] %v4677
                  %v4679 = vld [vmem:[%s4667 + $0x28] sm:$0xff]
                  %4680 = vst [vmem:[%s4668 + $0x28] sm:$0xff] %v4679
                  %v4681 = vld [vmem:[%s4667 + $0x30] sm:$0xff]
                  %4682 = vst [vmem:[%s4668 + $0x30] sm:$0xff] %v4681
                  %v4683 = vld [vmem:[%s4667 + $0x38] sm:$0xff]
                  %4684 = vst [vmem:[%s4668 + $0x38] sm:$0xff] %v4683
                  %v4685 = vld [vmem:[%s4667 + $0x40] sm:$0xff]
                  %4686 = vst [vmem:[%s4668 + $0x40] sm:$0xff] %v4685
                  %v4687 = vld [vmem:[%s4667 + $0x48] sm:$0xff]
                  %4688 = vst [vmem:[%s4668 + $0x48] sm:$0xff] %v4687
                  %v4689 = vld [vmem:[%s4667 + $0x50] sm:$0xff]
                  %4690 = vst [vmem:[%s4668 + $0x50] sm:$0xff] %v4689
                  %v4691 = vld [vmem:[%s4667 + $0x58] sm:$0xff]
                  %4692 = vst [vmem:[%s4668 + $0x58] sm:$0xff] %v4691
                  %v4693 = vld [vmem:[%s4667 + $0x60] sm:$0xff]
                  %4694 = vst [vmem:[%s4668 + $0x60] sm:$0xff] %v4693
                  %v4695 = vld [vmem:[%s4667 + $0x68] sm:$0xff]
                  %4696 = vst [vmem:[%s4668 + $0x68] sm:$0xff] %v4695
                  %v4697 = vld [vmem:[%s4667 + $0x70] sm:$0xff]
                  %4698 = vst [vmem:[%s4668 + $0x70] sm:$0xff] %v4697
                  %v4699 = vld [vmem:[%s4667 + $0x78] sm:$0xff]
                  %4700 = vst [vmem:[%s4668 + $0x78] sm:$0xff] %v4699
                  %v4701 = vld [vmem:[%s4667 + $0x80] sm:$0xff]
                  %4702 = vst [vmem:[%s4668 + $0x80] sm:$0xff] %v4701
                  %v4703 = vld [vmem:[%s4667 + $0x88] sm:$0xff]
                  %4704 = vst [vmem:[%s4668 + $0x88] sm:$0xff] %v4703
                  %v4705 = vld [vmem:[%s4667 + $0x90] sm:$0xff]
                  %4706 = vst [vmem:[%s4668 + $0x90] sm:$0xff] %v4705
                  %v4707 = vld [vmem:[%s4667 + $0x98] sm:$0xff]
                  %4708 = vst [vmem:[%s4668 + $0x98] sm:$0xff] %v4707
                  %v4709 = vld [vmem:[%s4667 + $0xa0] sm:$0xff]
                  %4710 = vst [vmem:[%s4668 + $0xa0] sm:$0xff] %v4709
                  %v4711 = vld [vmem:[%s4667 + $0xa8] sm:$0xff]
                  %4712 = vst [vmem:[%s4668 + $0xa8] sm:$0xff] %v4711
                  %v4713 = vld [vmem:[%s4667 + $0xb0] sm:$0xff]
                  %4714 = vst [vmem:[%s4668 + $0xb0] sm:$0xff] %v4713
                  %v4715 = vld [vmem:[%s4667 + $0xb8] sm:$0xff]
                  %4716 = vst [vmem:[%s4668 + $0xb8] sm:$0xff] %v4715
                  %v4717 = vld [vmem:[%s4667 + $0xc0] sm:$0xff]
                  %4718 = vst [vmem:[%s4668 + $0xc0] sm:$0xff] %v4717
                  %v4719 = vld [vmem:[%s4667 + $0xc8] sm:$0xff]
                  %4720 = vst [vmem:[%s4668 + $0xc8] sm:$0xff] %v4719
                  %v4721 = vld [vmem:[%s4667 + $0xd0] sm:$0xff]
                  %4722 = vst [vmem:[%s4668 + $0xd0] sm:$0xff] %v4721
                  %v4723 = vld [vmem:[%s4667 + $0xd8] sm:$0xff]
                  %4724 = vst [vmem:[%s4668 + $0xd8] sm:$0xff] %v4723
                  %v4725 = vld [vmem:[%s4667 + $0xe0] sm:$0xff]
                  %4726 = vst [vmem:[%s4668 + $0xe0] sm:$0xff] %v4725
                  %v4727 = vld [vmem:[%s4667 + $0xe8] sm:$0xff]
                  %4728 = vst [vmem:[%s4668 + $0xe8] sm:$0xff] %v4727
                  %v4729 = vld [vmem:[%s4667 + $0xf0] sm:$0xff]
                  %4730 = vst [vmem:[%s4668 + $0xf0] sm:$0xff] %v4729
                  %v4731 = vld [vmem:[%s4667 + $0xf8] sm:$0xff]
                  %4732 = vst [vmem:[%s4668 + $0xf8] sm:$0xff] %v4731
                  %v4733 = vld [vmem:[%s4667 + $0x100] sm:$0xff]
                  %4734 = vst [vmem:[%s4668 + $0x100] sm:$0xff] %v4733
                  %v4735 = vld [vmem:[%s4667 + $0x108] sm:$0xff]
                  %4736 = vst [vmem:[%s4668 + $0x108] sm:$0xff] %v4735
                  %v4737 = vld [vmem:[%s4667 + $0x110] sm:$0xff]
                  %4738 = vst [vmem:[%s4668 + $0x110] sm:$0xff] %v4737
                  %v4739 = vld [vmem:[%s4667 + $0x118] sm:$0xff]
                  %4740 = vst [vmem:[%s4668 + $0x118] sm:$0xff] %v4739
                  %v4741 = vld [vmem:[%s4667 + $0x120] sm:$0xff]
                  %4742 = vst [vmem:[%s4668 + $0x120] sm:$0xff] %v4741
                  %v4743 = vld [vmem:[%s4667 + $0x128] sm:$0xff]
                  %4744 = vst [vmem:[%s4668 + $0x128] sm:$0xff] %v4743
                  %v4745 = vld [vmem:[%s4667 + $0x130] sm:$0xff]
                  %4746 = vst [vmem:[%s4668 + $0x130] sm:$0xff] %v4745
                  %v4747 = vld [vmem:[%s4667 + $0x138] sm:$0xff]
                  %4748 = vst [vmem:[%s4668 + $0x138] sm:$0xff] %v4747
                  %v4749 = vld [vmem:[%s4667 + $0x140] sm:$0xff]
                  %4750 = vst [vmem:[%s4668 + $0x140] sm:$0xff] %v4749
                  %v4751 = vld [vmem:[%s4667 + $0x148] sm:$0xff]
                  %4752 = vst [vmem:[%s4668 + $0x148] sm:$0xff] %v4751
                  %v4753 = vld [vmem:[%s4667 + $0x150] sm:$0xff]
                  %4754 = vst [vmem:[%s4668 + $0x150] sm:$0xff] %v4753
                  %v4755 = vld [vmem:[%s4667 + $0x158] sm:$0xff]
                  %4756 = vst [vmem:[%s4668 + $0x158] sm:$0xff] %v4755
                  %v4757 = vld [vmem:[%s4667 + $0x160] sm:$0xff]
                  %4758 = vst [vmem:[%s4668 + $0x160] sm:$0xff] %v4757
                  %v4759 = vld [vmem:[%s4667 + $0x168] sm:$0xff]
                  %4760 = vst [vmem:[%s4668 + $0x168] sm:$0xff] %v4759
                  %v4761 = vld [vmem:[%s4667 + $0x170] sm:$0xff]
                  %4762 = vst [vmem:[%s4668 + $0x170] sm:$0xff] %v4761
                  %v4763 = vld [vmem:[%s4667 + $0x178] sm:$0xff]
                  %4764 = vst [vmem:[%s4668 + $0x178] sm:$0xff] %v4763
                  %v4765 = vld [vmem:[%s4667 + $0x180] sm:$0xff]
                  %4766 = vst [vmem:[%s4668 + $0x180] sm:$0xff] %v4765
                  %v4767 = vld [vmem:[%s4667 + $0x188] sm:$0xff]
                  %4768 = vst [vmem:[%s4668 + $0x188] sm:$0xff] %v4767
                  %v4769 = vld [vmem:[%s4667 + $0x190] sm:$0xff]
                  %4770 = vst [vmem:[%s4668 + $0x190] sm:$0xff] %v4769
                  %v4771 = vld [vmem:[%s4667 + $0x198] sm:$0xff]
                  %4772 = vst [vmem:[%s4668 + $0x198] sm:$0xff] %v4771
                  %v4773 = vld [vmem:[%s4667 + $0x1a0] sm:$0xff]
                  %4774 = vst [vmem:[%s4668 + $0x1a0] sm:$0xff] %v4773
                  %v4775 = vld [vmem:[%s4667 + $0x1a8] sm:$0xff]
                  %4776 = vst [vmem:[%s4668 + $0x1a8] sm:$0xff] %v4775
                  %v4777 = vld [vmem:[%s4667 + $0x1b0] sm:$0xff]
                  %4778 = vst [vmem:[%s4668 + $0x1b0] sm:$0xff] %v4777
                  %v4779 = vld [vmem:[%s4667 + $0x1b8] sm:$0xff]
                  %4780 = vst [vmem:[%s4668 + $0x1b8] sm:$0xff] %v4779
                  %v4781 = vld [vmem:[%s4667 + $0x1c0] sm:$0xff]
                  %4782 = vst [vmem:[%s4668 + $0x1c0] sm:$0xff] %v4781
                  %v4783 = vld [vmem:[%s4667 + $0x1c8] sm:$0xff]
                  %4784 = vst [vmem:[%s4668 + $0x1c8] sm:$0xff] %v4783
                  %v4785 = vld [vmem:[%s4667 + $0x1d0] sm:$0xff]
                  %4786 = vst [vmem:[%s4668 + $0x1d0] sm:$0xff] %v4785
                  %v4787 = vld [vmem:[%s4667 + $0x1d8] sm:$0xff]
                  %4788 = vst [vmem:[%s4668 + $0x1d8] sm:$0xff] %v4787
                  %v4789 = vld [vmem:[%s4667 + $0x1e0] sm:$0xff]
                  %4790 = vst [vmem:[%s4668 + $0x1e0] sm:$0xff] %v4789
                  %v4791 = vld [vmem:[%s4667 + $0x1e8] sm:$0xff]
                  %4792 = vst [vmem:[%s4668 + $0x1e8] sm:$0xff] %v4791
                  %v4793 = vld [vmem:[%s4667 + $0x1f0] sm:$0xff]
                  %4794 = vst [vmem:[%s4668 + $0x1f0] sm:$0xff] %v4793
                  %v4795 = vld [vmem:[%s4667 + $0x1f8] sm:$0xff]
                  %4796 = vst [vmem:[%s4668 + $0x1f8] sm:$0xff] %v4795
                  %s4797 = sadd.s32 1, %s4666
                  %p4798 = scmp.ge.s32.totalorder %s4797, %s4659
                  %s4799 = scalar_select %p4798, 0, %s4797
                  %s4800 = smul.u32 %s4799, 512
                  %s4801 = smul.u32 %s4799, 512
                  %s4802 = scalar_lea.vmem %s4467, %s4800 [#allocation2]
                  %s4803 = scalar_lea.vmem %s4478, %s4801
                $region123: #{tpu_custom_call.1} parent=117 // loop_footer
                  %s4663 = sadd.s32 %s4661, 1
                $region124: #{tpu_custom_call.1} parent=117 // loop_footer_branch
                  %4660 = sbr.rel target = $region120
                $region125: #{tpu_custom_call.1} parent=117 // loop_exit
                  _
                %s4804 = sshrl.u32 %s4474, 6
                %s4805 = sand.u32 %s4474, 63
                %s4806 = smul.u32 %s4804, 64
                %s4807 = smul.u32 8, %s4806
                %s4808 = scalar_lea.vmem %s4467, %s4807 [#allocation2]
                %s4809 = smul.u32 8, %s4806
                %s4810 = scalar_lea.vmem %s4478, %s4809
                // While loop
                $region126: #{tpu_custom_call.1} parent=117 // loop_pre_header
                  _
                $region127: #{tpu_custom_call.1} parent=117 // loop_header
                  %s4812 = sphi 0, %s4814
                  %p4813 = scmp.ge.s32.totalorder %s4812, %s4805
                  %s4817 = sphi 0, %s4824
                  %s4818 = sphi %s4808, %s4827
                  %s4819 = sphi %s4810, %s4828
                $region128: #{tpu_custom_call.1} parent=117 // loop_header_branch
                  %4816 = sbr.rel (%p4813) target = $region132
                $region129: #{tpu_custom_call.1} parent=117 // loop_body
                  %v4820 = vld [vmem:[%s4818] sm:$0xff]
                  %4821 = vst [vmem:[%s4819] sm:$0xff] %v4820
                  %s4822 = sadd.s32 1, %s4817
                  %p4823 = scmp.ge.s32.totalorder %s4822, %s4805
                  %s4824 = scalar_select %p4823, 0, %s4822
                  %s4825 = smul.u32 %s4824, 8
                  %s4826 = smul.u32 %s4824, 8
                  %s4827 = scalar_lea.vmem %s4808, %s4825 [#allocation2]
                  %s4828 = scalar_lea.vmem %s4810, %s4826
                $region130: #{tpu_custom_call.1} parent=117 // loop_footer
                  %s4814 = sadd.s32 %s4812, 1
                $region131: #{tpu_custom_call.1} parent=117 // loop_footer_branch
                  %4811 = sbr.rel target = $region127
                $region132: #{tpu_custom_call.1} parent=117 // loop_exit
                  _
              $region118: #{tpu_custom_call.1} parent=95 // pred_fallthru
                _
              // Predicated region
              $region133: #{tpu_custom_call.1} parent=95 // pred_check
                _
              $region134: #{tpu_custom_call.1} parent=95 // pred_check_branch
                %4830 = sbr.rel target = $region136
              $region135: #{tpu_custom_call.1} parent=95 // pred_region
                _
              $region136: #{tpu_custom_call.1} parent=95 // pred_fallthru
                _
            $region96: #{tpu_custom_call.1} parent=91 // pred_fallthru
              _
            // Predicated region
            $region97: #{tpu_custom_call.1} parent=91 // pred_check
              _
            $region98: #{tpu_custom_call.1} parent=91 // pred_check_branch
              %4485 = sbr.rel target = $region100
            $region99: #{tpu_custom_call.1} parent=91 // pred_region
              %s4487 = sshrl.u32 %s4474, 6
              // While loop
              $region101: #{tpu_custom_call.1} parent=99 // loop_pre_header
                _
              $region102: #{tpu_custom_call.1} parent=99 // loop_header
                %s4489 = sphi 0, %s4491
                %p4490 = scmp.ge.s32.totalorder %s4489, %s4487
                %s4494 = sphi 0, %s4627
                %s4495 = sphi %s4467, %s4630
                %s4496 = sphi %s4478, %s4631
              $region103: #{tpu_custom_call.1} parent=99 // loop_header_branch
                %4493 = sbr.rel (%p4490) target = $region107
              $region104: #{tpu_custom_call.1} parent=99 // loop_body
                %v4497 = vld [vmem:[%s4495] sm:$0xff]
                %4498 = vst [vmem:[%s4496] sm:$0xff] %v4497
                %v4499 = vld [vmem:[%s4495 + $0x8] sm:$0xff]
                %4500 = vst [vmem:[%s4496 + $0x8] sm:$0xff] %v4499
                %v4501 = vld [vmem:[%s4495 + $0x10] sm:$0xff]
                %4502 = vst [vmem:[%s4496 + $0x10] sm:$0xff] %v4501
                %v4503 = vld [vmem:[%s4495 + $0x18] sm:$0xff]
                %4504 = vst [vmem:[%s4496 + $0x18] sm:$0xff] %v4503
                %v4505 = vld [vmem:[%s4495 + $0x20] sm:$0xff]
                %4506 = vst [vmem:[%s4496 + $0x20] sm:$0xff] %v4505
                %v4507 = vld [vmem:[%s4495 + $0x28] sm:$0xff]
                %4508 = vst [vmem:[%s4496 + $0x28] sm:$0xff] %v4507
                %v4509 = vld [vmem:[%s4495 + $0x30] sm:$0xff]
                %4510 = vst [vmem:[%s4496 + $0x30] sm:$0xff] %v4509
                %v4511 = vld [vmem:[%s4495 + $0x38] sm:$0xff]
                %4512 = vst [vmem:[%s4496 + $0x38] sm:$0xff] %v4511
                %v4513 = vld [vmem:[%s4495 + $0x40] sm:$0xff]
                %4514 = vst [vmem:[%s4496 + $0x40] sm:$0xff] %v4513
                %v4515 = vld [vmem:[%s4495 + $0x48] sm:$0xff]
                %4516 = vst [vmem:[%s4496 + $0x48] sm:$0xff] %v4515
                %v4517 = vld [vmem:[%s4495 + $0x50] sm:$0xff]
                %4518 = vst [vmem:[%s4496 + $0x50] sm:$0xff] %v4517
                %v4519 = vld [vmem:[%s4495 + $0x58] sm:$0xff]
                %4520 = vst [vmem:[%s4496 + $0x58] sm:$0xff] %v4519
                %v4521 = vld [vmem:[%s4495 + $0x60] sm:$0xff]
                %4522 = vst [vmem:[%s4496 + $0x60] sm:$0xff] %v4521
                %v4523 = vld [vmem:[%s4495 + $0x68] sm:$0xff]
                %4524 = vst [vmem:[%s4496 + $0x68] sm:$0xff] %v4523
                %v4525 = vld [vmem:[%s4495 + $0x70] sm:$0xff]
                %4526 = vst [vmem:[%s4496 + $0x70] sm:$0xff] %v4525
                %v4527 = vld [vmem:[%s4495 + $0x78] sm:$0xff]
                %4528 = vst [vmem:[%s4496 + $0x78] sm:$0xff] %v4527
                %v4529 = vld [vmem:[%s4495 + $0x80] sm:$0xff]
                %4530 = vst [vmem:[%s4496 + $0x80] sm:$0xff] %v4529
                %v4531 = vld [vmem:[%s4495 + $0x88] sm:$0xff]
                %4532 = vst [vmem:[%s4496 + $0x88] sm:$0xff] %v4531
                %v4533 = vld [vmem:[%s4495 + $0x90] sm:$0xff]
                %4534 = vst [vmem:[%s4496 + $0x90] sm:$0xff] %v4533
                %v4535 = vld [vmem:[%s4495 + $0x98] sm:$0xff]
                %4536 = vst [vmem:[%s4496 + $0x98] sm:$0xff] %v4535
                %v4537 = vld [vmem:[%s4495 + $0xa0] sm:$0xff]
                %4538 = vst [vmem:[%s4496 + $0xa0] sm:$0xff] %v4537
                %v4539 = vld [vmem:[%s4495 + $0xa8] sm:$0xff]
                %4540 = vst [vmem:[%s4496 + $0xa8] sm:$0xff] %v4539
                %v4541 = vld [vmem:[%s4495 + $0xb0] sm:$0xff]
                %4542 = vst [vmem:[%s4496 + $0xb0] sm:$0xff] %v4541
                %v4543 = vld [vmem:[%s4495 + $0xb8] sm:$0xff]
                %4544 = vst [vmem:[%s4496 + $0xb8] sm:$0xff] %v4543
                %v4545 = vld [vmem:[%s4495 + $0xc0] sm:$0xff]
                %4546 = vst [vmem:[%s4496 + $0xc0] sm:$0xff] %v4545
                %v4547 = vld [vmem:[%s4495 + $0xc8] sm:$0xff]
                %4548 = vst [vmem:[%s4496 + $0xc8] sm:$0xff] %v4547
                %v4549 = vld [vmem:[%s4495 + $0xd0] sm:$0xff]
                %4550 = vst [vmem:[%s4496 + $0xd0] sm:$0xff] %v4549
                %v4551 = vld [vmem:[%s4495 + $0xd8] sm:$0xff]
                %4552 = vst [vmem:[%s4496 + $0xd8] sm:$0xff] %v4551
                %v4553 = vld [vmem:[%s4495 + $0xe0] sm:$0xff]
                %4554 = vst [vmem:[%s4496 + $0xe0] sm:$0xff] %v4553
                %v4555 = vld [vmem:[%s4495 + $0xe8] sm:$0xff]
                %4556 = vst [vmem:[%s4496 + $0xe8] sm:$0xff] %v4555
                %v4557 = vld [vmem:[%s4495 + $0xf0] sm:$0xff]
                %4558 = vst [vmem:[%s4496 + $0xf0] sm:$0xff] %v4557
                %v4559 = vld [vmem:[%s4495 + $0xf8] sm:$0xff]
                %4560 = vst [vmem:[%s4496 + $0xf8] sm:$0xff] %v4559
                %v4561 = vld [vmem:[%s4495 + $0x100] sm:$0xff]
                %4562 = vst [vmem:[%s4496 + $0x100] sm:$0xff] %v4561
                %v4563 = vld [vmem:[%s4495 + $0x108] sm:$0xff]
                %4564 = vst [vmem:[%s4496 + $0x108] sm:$0xff] %v4563
                %v4565 = vld [vmem:[%s4495 + $0x110] sm:$0xff]
                %4566 = vst [vmem:[%s4496 + $0x110] sm:$0xff] %v4565
                %v4567 = vld [vmem:[%s4495 + $0x118] sm:$0xff]
                %4568 = vst [vmem:[%s4496 + $0x118] sm:$0xff] %v4567
                %v4569 = vld [vmem:[%s4495 + $0x120] sm:$0xff]
                %4570 = vst [vmem:[%s4496 + $0x120] sm:$0xff] %v4569
                %v4571 = vld [vmem:[%s4495 + $0x128] sm:$0xff]
                %4572 = vst [vmem:[%s4496 + $0x128] sm:$0xff] %v4571
                %v4573 = vld [vmem:[%s4495 + $0x130] sm:$0xff]
                %4574 = vst [vmem:[%s4496 + $0x130] sm:$0xff] %v4573
                %v4575 = vld [vmem:[%s4495 + $0x138] sm:$0xff]
                %4576 = vst [vmem:[%s4496 + $0x138] sm:$0xff] %v4575
                %v4577 = vld [vmem:[%s4495 + $0x140] sm:$0xff]
                %4578 = vst [vmem:[%s4496 + $0x140] sm:$0xff] %v4577
                %v4579 = vld [vmem:[%s4495 + $0x148] sm:$0xff]
                %4580 = vst [vmem:[%s4496 + $0x148] sm:$0xff] %v4579
                %v4581 = vld [vmem:[%s4495 + $0x150] sm:$0xff]
                %4582 = vst [vmem:[%s4496 + $0x150] sm:$0xff] %v4581
                %v4583 = vld [vmem:[%s4495 + $0x158] sm:$0xff]
                %4584 = vst [vmem:[%s4496 + $0x158] sm:$0xff] %v4583
                %v4585 = vld [vmem:[%s4495 + $0x160] sm:$0xff]
                %4586 = vst [vmem:[%s4496 + $0x160] sm:$0xff] %v4585
                %v4587 = vld [vmem:[%s4495 + $0x168] sm:$0xff]
                %4588 = vst [vmem:[%s4496 + $0x168] sm:$0xff] %v4587
                %v4589 = vld [vmem:[%s4495 + $0x170] sm:$0xff]
                %4590 = vst [vmem:[%s4496 + $0x170] sm:$0xff] %v4589
                %v4591 = vld [vmem:[%s4495 + $0x178] sm:$0xff]
                %4592 = vst [vmem:[%s4496 + $0x178] sm:$0xff] %v4591
                %v4593 = vld [vmem:[%s4495 + $0x180] sm:$0xff]
                %4594 = vst [vmem:[%s4496 + $0x180] sm:$0xff] %v4593
                %v4595 = vld [vmem:[%s4495 + $0x188] sm:$0xff]
                %4596 = vst [vmem:[%s4496 + $0x188] sm:$0xff] %v4595
                %v4597 = vld [vmem:[%s4495 + $0x190] sm:$0xff]
                %4598 = vst [vmem:[%s4496 + $0x190] sm:$0xff] %v4597
                %v4599 = vld [vmem:[%s4495 + $0x198] sm:$0xff]
                %4600 = vst [vmem:[%s4496 + $0x198] sm:$0xff] %v4599
                %v4601 = vld [vmem:[%s4495 + $0x1a0] sm:$0xff]
                %4602 = vst [vmem:[%s4496 + $0x1a0] sm:$0xff] %v4601
                %v4603 = vld [vmem:[%s4495 + $0x1a8] sm:$0xff]
                %4604 = vst [vmem:[%s4496 + $0x1a8] sm:$0xff] %v4603
                %v4605 = vld [vmem:[%s4495 + $0x1b0] sm:$0xff]
                %4606 = vst [vmem:[%s4496 + $0x1b0] sm:$0xff] %v4605
                %v4607 = vld [vmem:[%s4495 + $0x1b8] sm:$0xff]
                %4608 = vst [vmem:[%s4496 + $0x1b8] sm:$0xff] %v4607
                %v4609 = vld [vmem:[%s4495 + $0x1c0] sm:$0xff]
                %4610 = vst [vmem:[%s4496 + $0x1c0] sm:$0xff] %v4609
                %v4611 = vld [vmem:[%s4495 + $0x1c8] sm:$0xff]
                %4612 = vst [vmem:[%s4496 + $0x1c8] sm:$0xff] %v4611
                %v4613 = vld [vmem:[%s4495 + $0x1d0] sm:$0xff]
                %4614 = vst [vmem:[%s4496 + $0x1d0] sm:$0xff] %v4613
                %v4615 = vld [vmem:[%s4495 + $0x1d8] sm:$0xff]
                %4616 = vst [vmem:[%s4496 + $0x1d8] sm:$0xff] %v4615
                %v4617 = vld [vmem:[%s4495 + $0x1e0] sm:$0xff]
                %4618 = vst [vmem:[%s4496 + $0x1e0] sm:$0xff] %v4617
                %v4619 = vld [vmem:[%s4495 + $0x1e8] sm:$0xff]
                %4620 = vst [vmem:[%s4496 + $0x1e8] sm:$0xff] %v4619
                %v4621 = vld [vmem:[%s4495 + $0x1f0] sm:$0xff]
                %4622 = vst [vmem:[%s4496 + $0x1f0] sm:$0xff] %v4621
                %v4623 = vld [vmem:[%s4495 + $0x1f8] sm:$0xff]
                %4624 = vst [vmem:[%s4496 + $0x1f8] sm:$0xff] %v4623
                %s4625 = sadd.s32 1, %s4494
                %p4626 = scmp.ge.s32.totalorder %s4625, %s4487
                %s4627 = scalar_select %p4626, 0, %s4625
                %s4628 = smul.u32 %s4627, 512
                %s4629 = smul.u32 %s4627, 512
                %s4630 = scalar_lea.vmem %s4467, %s4628 [#allocation2]
                %s4631 = scalar_lea.vmem %s4478, %s4629
              $region105: #{tpu_custom_call.1} parent=99 // loop_footer
                %s4491 = sadd.s32 %s4489, 1
              $region106: #{tpu_custom_call.1} parent=99 // loop_footer_branch
                %4488 = sbr.rel target = $region102
              $region107: #{tpu_custom_call.1} parent=99 // loop_exit
                _
              %s4632 = sshrl.u32 %s4474, 6
              %s4633 = sand.u32 %s4474, 63
              %s4634 = smul.u32 %s4632, 64
              %s4635 = smul.u32 8, %s4634
              %s4636 = scalar_lea.vmem %s4467, %s4635 [#allocation2]
              %s4637 = smul.u32 8, %s4634
              %s4638 = scalar_lea.vmem %s4478, %s4637
              // While loop
              $region108: #{tpu_custom_call.1} parent=99 // loop_pre_header
                _
              $region109: #{tpu_custom_call.1} parent=99 // loop_header
                %s4640 = sphi 0, %s4642
                %p4641 = scmp.ge.s32.totalorder %s4640, %s4633
                %s4645 = sphi 0, %s4652
                %s4646 = sphi %s4636, %s4655
                %s4647 = sphi %s4638, %s4656
              $region110: #{tpu_custom_call.1} parent=99 // loop_header_branch
                %4644 = sbr.rel (%p4641) target = $region114
              $region111: #{tpu_custom_call.1} parent=99 // loop_body
                %v4648 = vld [vmem:[%s4646] sm:$0xff]
                %4649 = vst [vmem:[%s4647] sm:$0xff] %v4648
                %s4650 = sadd.s32 1, %s4645
                %p4651 = scmp.ge.s32.totalorder %s4650, %s4633
                %s4652 = scalar_select %p4651, 0, %s4650
                %s4653 = smul.u32 %s4652, 8
                %s4654 = smul.u32 %s4652, 8
                %s4655 = scalar_lea.vmem %s4636, %s4653 [#allocation2]
                %s4656 = scalar_lea.vmem %s4638, %s4654
              $region112: #{tpu_custom_call.1} parent=99 // loop_footer
                %s4642 = sadd.s32 %s4640, 1
              $region113: #{tpu_custom_call.1} parent=99 // loop_footer_branch
                %4639 = sbr.rel target = $region109
              $region114: #{tpu_custom_call.1} parent=99 // loop_exit
                _
            $region100: #{tpu_custom_call.1} parent=91 // pred_fallthru
              _
          $region92: #{tpu_custom_call.1} parent=87 // pred_fallthru
            _
          %4831 = vnop
        $region88: #{tpu_custom_call.1} parent=83 // pred_fallthru
          _
      $region84: #{tpu_custom_call.1} parent=5 // pred_fallthru
        _
      %p4832 = scmp.le.s32.totalorder 2, %s22
      // Predicated region
      $region137: #{tpu_custom_call.1} parent=5 // pred_check
        %p4833 = pneg %p4832
      $region138: #{tpu_custom_call.1} parent=5 // pred_check_branch
        %4835 = sbr.rel (%p4833) target = $region140
      $region139: #{tpu_custom_call.1} parent=5 // pred_region
        %s4836 = ssub.s32 %s22, 2
        // Predicated region
        $region141: #{tpu_custom_call.1} parent=139 // pred_check
          %p4837 = pneg %p392
        $region142: #{tpu_custom_call.1} parent=139 // pred_check_branch
          %4839 = sbr.rel (%p4837) target = $region144
        $region143: #{tpu_custom_call.1} parent=139 // pred_region
          %s4840 = sand.u32 %s377, 1
          %s4841 = sand.u32 %s377, 1
          %s4842 = smul.addr %s4841, 512
          %s4843 = scalar_lea.vmem [#allocation2], %s4842
        $region144: #{tpu_custom_call.1} parent=139 // pred_fallthru
          _
      $region140: #{tpu_custom_call.1} parent=5 // pred_fallthru
        _
    $region6: #{tpu_custom_call.1} parent=1 // loop_footer
      %s26 = sadd.s32 1, %s22
    $region7: #{tpu_custom_call.1} parent=1 // loop_footer_branch
      %21 = sbr.rel target = $region3
    $region8: #{tpu_custom_call.1} parent=1 // loop_exit
      _

</llo_original>
